<compile_context>
chip_gen: v7x
topology: tpu7x:2x2x1
jax: 0.10.0
libtpu: 0.0.40
codegen_flags: <defaults>
</compile_context>

<pallas_src>
import functools
import math

import numpy as np
import jax
import jax.numpy as jnp
from jax import lax
from jax.experimental import pallas as pl
from jax.experimental.pallas import tpu as pltpu

CFG = dict(vocab=64, hidden=64, heads=4, kv_heads=2, head_dim=16,
           intermediate=128, layers=2, num_labels=6, rope_theta=10000.0,
           rms_eps=1e-6)

_LOGITS_PAD = 128   # lane-dense classifier width (real classes sliced outside)
_OUT_ROWS = 8       # sublane-padded per-example output tile (row0=logits, row1=loss)


# ----------------------- host-side constant tables --------------------------

def _rope_tables(S, n_heads, dh, theta):
    """cos/sin tables in the [S, n_heads*dh] head-major lane layout."""
    inv_freq = 1.0 / (theta ** (np.arange(0, dh, 2, dtype=np.float64) / dh))
    pos = np.arange(S, dtype=np.float64)
    freqs = pos[:, None] * inv_freq[None, :]
    emb = np.concatenate([freqs, freqs], axis=-1)            # [S, dh]
    cos = np.tile(np.cos(emb), (1, n_heads))                  # [S, n*dh]
    sin = np.tile(np.sin(emb), (1, n_heads))
    return jnp.asarray(cos, jnp.float32), jnp.asarray(sin, jnp.float32)


def _rot_matrix(n_heads, dh):
    """Block-diagonal P with x @ P == rotate_half(x) applied per head."""
    half = dh // 2
    P = np.zeros((n_heads * dh, n_heads * dh), np.float32)
    for h in range(n_heads):
        o = h * dh
        for j in range(half):
            P[o + j + half, o + j] = -1.0     # out[:, j]      = -x[:, j+half]
            P[o + j, o + j + half] = 1.0      # out[:, j+half] =  x[:, j]
    return jnp.asarray(P)


def _head_avg_matrix(n_heads, dh):
    """Block-diag averaging: (x*x) @ A == per-head mean square (broadcast)."""
    A = np.zeros((n_heads * dh, n_heads * dh), np.float32)
    for h in range(n_heads):
        A[h * dh:(h + 1) * dh, h * dh:(h + 1) * dh] = 1.0 / dh
    return jnp.asarray(A)


def _head_block_mask(n_heads, S, dh):
    """[n_heads*S, n_heads*dh] 0/1 mask: rows of head h keep only head-h lanes."""
    M = np.zeros((n_heads * S, n_heads * dh), np.float32)
    for h in range(n_heads):
        M[h * S:(h + 1) * S, h * dh:(h + 1) * dh] = 1.0
    return jnp.asarray(M)


def _group_sum_matrix(n_heads, S):
    """[n_heads*S, n_heads*S] block-diag ones: per-head row-sum broadcast."""
    G = np.zeros((n_heads * S, n_heads * S), np.float32)
    for h in range(n_heads):
        G[h * S:(h + 1) * S, h * S:(h + 1) * S] = 1.0
    return jnp.asarray(G)


# --------------------------- the fused Pallas kernel -------------------------

def _fused_forward_kernel(
        x0_ref,      # [S, H]            f32  (this example's embedded tokens)
        maskf_ref,   # [1, S]            f32  attention mask
        onehot_ref,  # [1, Cp]           f32  one-hot label (padded)
        cos_ref,     # [S, Hq*Dh]        f32
        sin_ref,     # [S, Hq*Dh]        f32
        rot_ref,     # [Hq*Dh, Hq*Dh]    f32  rotate_half permutation
        avg_ref,     # [Hq*Dh, Hq*Dh]    f32  per-head averaging
        bd_ref,      # [Hq*S, Hq*Dh]     f32  head-block mask for K/V stacks
        gs_ref,      # [Hq*S, Hq*S]      f32  per-head block-ones (softmax sums)
        ln1_ref,     # [L, 1, H]         f32
        wqkv_ref,    # [L, H, 3*Hq*Dh]   bf16 (K/V columns GQA-expanded)
        qn_ref,      # [L, 1, Hq*Dh]     f32  (1/sqrt(Dh) folded in)
        kn_ref,      # [L, 1, Hq*Dh]     f32
        wo_ref,      # [L, Hq*Dh, H]     bf16
        ln2_ref,     # [L, 1, H]         f32
        wgu_ref,     # [L, H, 2I]        bf16
        wd_ref,      # [L, I, H]         bf16
        fnorm_ref,   # [1, H]            f32
        lmw_ref,     # [H, Cp]           f32 (zero-padded)
        lmb_ref,     # [1, Cp]           f32 (-1e30 on padded cols)
        out_ref,     # out [8, Cp]       f32 (row0 = logits, row1 = focal loss)
        *, S, Hq, Dh, I, L, eps):

    f32 = jnp.float32
    bf16 = jnp.bfloat16
    Dq = Hq * Dh
    neg_inf = f32(-1e9)

    def rms(v, gain):
        var = jnp.mean(v * v, axis=-1, keepdims=True)
        return v * lax.rsqrt(var + eps) * gain

    cos = cos_ref[...]
    sin = sin_ref[...]
    rot = rot_ref[...]
    avg = avg_ref[...]
    bd = bd_ref[...]
    gs = gs_ref[...]

    # hoisted causal + key-padding mask, tiled per head along lanes: [S, Hq*S]
    maskr = maskf_ref[...]                                        # [1, S]
    row_i = lax.broadcasted_iota(jnp.int32, (S, S), 0)
    col_j = lax.broadcasted_iota(jnp.int32, (S, S), 1)
    allow = (row_i >= col_j).astype(f32) * maskr                  # [S, S]
    allow_t = jnp.concatenate([allow] * Hq, axis=1)               # [S, Hq*S]

    x = x0_ref[...].astype(f32)                                   # [S, H]

    # TODO(synk): at real Qwen3 sizes, stream per-layer weights via a grid axis
    # (BlockSpec index_map over l) instead of this static unroll.
    for l in range(L):
        # ---------------- attention block ----------------
        res = x
        xn = rms(x, ln1_ref[l])
        qkv = jnp.dot(xn.astype(bf16), wqkv_ref[l],
                      preferred_element_type=f32)                 # [S, 3*Dq]
        q = qkv[:, :Dq]
        k = qkv[:, Dq:2 * Dq]
        v = qkv[:, 2 * Dq:]

        # per-head RMSNorm via block-diag averaging matmul
        # (1/sqrt(Dh) attention scale is pre-folded into qn)
        q = q * lax.rsqrt(
            jnp.dot(q * q, avg, preferred_element_type=f32) + eps) * qn_ref[l]
        k = k * lax.rsqrt(
            jnp.dot(k * k, avg, preferred_element_type=f32) + eps) * kn_ref[l]

        # RoPE: x*cos + rotate_half(x)*sin, rotation as permutation matmul
        q = q * cos + jnp.dot(q, rot, preferred_element_type=f32) * sin
        k = k * cos + jnp.dot(k, rot, preferred_element_type=f32) * sin

        # all-head attention as two 2-D matmuls over block-diag stacked K/V
        kb = jnp.concatenate([k] * Hq, axis=0) * bd               # [Hq*S, Dq]
        vb = jnp.concatenate([v] * Hq, axis=0) * bd               # [Hq*S, Dq]
        s = lax.dot_general(q, kb, (((1,), (1,)), ((), ())),
                            preferred_element_type=f32)           # [S, Hq*S]
        s = jnp.where(allow_t > 0.0, s, neg_inf)
        m = jnp.max(s, axis=-1, keepdims=True)                    # shared row max
        p = jnp.exp(s - m)
        den = jnp.dot(p, gs, preferred_element_type=f32)          # per-head sums
        p = p * pl.reciprocal(den, approx=True)
        ctx = jnp.dot(p, vb, preferred_element_type=f32)          # [S, Dq]

        x = res + jnp.dot(ctx.astype(bf16), wo_ref[l],
                          preferred_element_type=f32)

        # ---------------- MLP block ----------------
        res = x
        xn = rms(x, ln2_ref[l])
        gu = jnp.dot(xn.astype(bf16), wgu_ref[l],
                     preferred_element_type=f32)                  # [S, 2I]
        gate = gu[:, :I]
        up = gu[:, I:]
        act = gate * pl.reciprocal(1.0 + jnp.exp(-gate), approx=True) * up
        x = res + jnp.dot(act.astype(bf16), wd_ref[l],
                          preferred_element_type=f32)

    hn = rms(x, fnorm_ref[...])                                   # [S, H]

    # last-token pooling: sequence_length = sum(mask) - 1 (one-hot row select)
    # TODO(synk): training-mode dropout not implemented (identity / eval mode).
    last = jnp.sum(maskr, axis=-1, keepdims=True) - 1.0           # [1, 1]
    cidx = lax.broadcasted_iota(jnp.int32, (1, S), 1).astype(f32)
    sel = (cidx == last).astype(f32)                              # [1, S]
    pooled = jnp.dot(sel, hn, preferred_element_type=f32)         # [1, H]

    logits = jnp.dot(pooled, lmw_ref[...],
                     preferred_element_type=f32) + lmb_ref[...]   # [1, Cp]

    # FocalLoss (alpha=None, gamma=2.0): (1-pt)^2 * ce; padded classes carry a
    # -1e30 bias so they never contribute to the softmax.
    oh = onehot_ref[...]                                          # [1, Cp]
    mm = jnp.max(logits, axis=-1, keepdims=True)
    lse = jnp.log(jnp.sum(jnp.exp(logits - mm), axis=-1, keepdims=True)) + mm
    ce = lse - jnp.sum(logits * oh, axis=-1, keepdims=True)       # [1, 1]
    pt = jnp.exp(-ce)
    omp = jnp.maximum(1.0 - pt, 0.0)
    focal = omp * omp * ce                                        # gamma=2 -> square

    out_ref[...] = jnp.broadcast_to(focal, out_ref.shape)         # rows 1..7 = loss
    out_ref[0:1, :] = logits                                      # row 0 = logits


# --------------------------- params & forward --------------------------------

def init_params(key, cfg):
    H, Hq, Hkv, Dh = cfg['hidden'], cfg['heads'], cfg['kv_heads'], cfg['head_dim']
    I, V, C, L = cfg['intermediate'], cfg['vocab'], cfg['num_labels'], cfg['layers']
    ks = jax.random.split(key, 8)

    def nrm(k, shape, scale=0.02):
        return jax.random.normal(k, shape, jnp.float32) * scale

    return dict(
        embed=jax.random.normal(ks[0], (V, H), jnp.float32),
        ln1=jnp.ones((L, 1, H), jnp.float32),
        wq=nrm(ks[1], (L, H, Hq * Dh)),
        wk=nrm(ks[2], (L, H, Hkv * Dh)),
        wv=nrm(ks[3], (L, H, Hkv * Dh)),
        q_norm=jnp.ones((L, 1, Dh), jnp.float32),
        k_norm=jnp.ones((L, 1, Dh), jnp.float32),
        wo=nrm(ks[4], (L, Hq * Dh, H)),
        ln2=jnp.ones((L, 1, H), jnp.float32),
        wgu=nrm(ks[5], (L, H, 2 * I)),
        wd=nrm(ks[6], (L, I, H)),
        final_norm=jnp.ones((1, H), jnp.float32),
        lm_head_w=nrm(ks[7], (H, C)),
        lm_head_b=jnp.zeros((C,), jnp.float32),
    )


def forward(params, input_ids, attention_mask, labels, cfg=CFG):
    B, S = input_ids.shape
    H, Hq, Hkv, Dh = cfg['hidden'], cfg['heads'], cfg['kv_heads'], cfg['head_dim']
    I, L, C = cfg['intermediate'], cfg['layers'], cfg['num_labels']
    Cp = _LOGITS_PAD
    Dq = Hq * Dh
    rep = Hq // Hkv

    # token embedding lookup (plain gather); everything after runs in one kernel
    x0 = params['embed'][input_ids].astype(jnp.float32)            # [B, S, H]

    cos, sin = _rope_tables(S, Hq, Dh, cfg['rope_theta'])
    rot = _rot_matrix(Hq, Dh)
    avg = _head_avg_matrix(Hq, Dh)
    bd = _head_block_mask(Hq, S, Dh)
    gs = _group_sum_matrix(Hq, S)

    # GQA: replicate K/V projection columns per query head and fuse into one
    # [H, 3*Dq] QKV weight -> kernel never touches GQA sharing.
    gidx = np.repeat(np.arange(Hkv), rep)
    wk = params['wk'].reshape(L, H, Hkv, Dh)[:, :, gidx, :].reshape(L, H, Dq)
    wv = params['wv'].reshape(L, H, Hkv, Dh)[:, :, gidx, :].reshape(L, H, Dq)
    wqkv = jnp.concatenate([params['wq'], wk, wv], axis=-1).astype(jnp.bfloat16)

    # per-head norm gains tiled to all heads; fold 1/sqrt(Dh) scale into qn
    qn = jnp.tile(params['q_norm'], (1, 1, Hq)) * (Dh ** -0.5)
    kn = jnp.tile(params['k_norm'], (1, 1, Hq))

    # lane-dense (128-wide) classifier weights; padded cols get -1e30 bias
    lmw = jnp.zeros((H, Cp), jnp.float32).at[:, :C].set(params['lm_head_w'])
    lmb = jnp.full((1, Cp), -1e30, jnp.float32).at[0, :C].set(params['lm_head_b'])

    maskf = attention_mask.astype(jnp.float32).reshape(B, 1, S)
    onehot = jax.nn.one_hot(labels, Cp, dtype=jnp.float32).reshape(B, 1, Cp)

    kernel = functools.partial(_fused_forward_kernel,
                               S=S, Hq=Hq, Dh=Dh, I=I, L=L, eps=cfg['rms_eps'])

    def _full(a):
        nd = a.ndim
        return pl.BlockSpec(a.shape, lambda b, nd=nd: (0,) * nd)

    shared = [cos, sin, rot, avg, bd, gs,
              params['ln1'], wqkv, qn, kn,
              params['wo'].astype(jnp.bfloat16), params['ln2'],
              params['wgu'].astype(jnp.bfloat16),
              params['wd'].astype(jnp.bfloat16),
              params['final_norm'], lmw, lmb]

    in_specs = ([pl.BlockSpec((None, S, H), lambda b: (b, 0, 0)),
                 pl.BlockSpec((None, 1, S), lambda b: (b, 0, 0)),
                 pl.BlockSpec((None, 1, Cp), lambda b: (b, 0, 0))]
                + [_full(a) for a in shared])

    out = pl.pallas_call(
        kernel,
        out_shape=jax.ShapeDtypeStruct((B, _OUT_ROWS, Cp), jnp.float32),
        grid=(B,),
        in_specs=in_specs,
        out_specs=pl.BlockSpec((None, _OUT_ROWS, Cp), lambda b: (b, 0, 0)),
        compiler_params=pltpu.CompilerParams(
            dimension_semantics=("parallel",),
            vmem_limit_bytes=32 * 1024 * 1024),
    )(x0, maskf, onehot, *shared)

    logits = out[:, 0, :C]                    # real classes
    loss = jnp.mean(out[:, 1, 0])             # FocalLoss(reduction='mean')
    return loss, logits


# ------------------------------- main ----------------------------------------

if __name__ == "__main__":
    key = jax.random.PRNGKey(0)
    kp, ki = jax.random.split(key)
    params = init_params(kp, CFG)

    B, S = 2, 8
    input_ids = jax.random.randint(ki, (B, S), 0, CFG['vocab'], dtype=jnp.int32)
    attention_mask = jnp.array([[1, 1, 1, 1, 1, 1, 1, 1],
                                [1, 1, 1, 1, 1, 0, 0, 0]], dtype=jnp.int32)
    labels = jnp.array([2, 5], dtype=jnp.int32)

    fwd = jax.jit(forward)
    loss, logits = fwd(params, input_ids, attention_mask, labels)
    jax.block_until_ready((loss, logits))

    assert logits.shape == (B, CFG['num_labels'])
    assert loss.shape == ()
    assert bool(jnp.isfinite(loss))
    print("KERNEL_OK")
</pallas_src>

<mosaic_0001>
module attributes {stable_mosaic.version = 11 : i64} {
  func.func @_fused_forward_kernel(%arg0: i32, %arg1: memref<1x8x64xf32, #tpu.memory_space<vmem>>, %arg2: memref<1x1x8xf32, #tpu.memory_space<vmem>>, %arg3: memref<1x1x128xf32, #tpu.memory_space<vmem>>, %arg4: memref<8x64xf32, #tpu.memory_space<vmem>>, %arg5: memref<8x64xf32, #tpu.memory_space<vmem>>, %arg6: memref<64x64xf32, #tpu.memory_space<vmem>>, %arg7: memref<64x64xf32, #tpu.memory_space<vmem>>, %arg8: memref<32x64xf32, #tpu.memory_space<vmem>>, %arg9: memref<32x32xf32, #tpu.memory_space<vmem>>, %arg10: memref<2x1x64xf32, #tpu.memory_space<vmem>>, %arg11: memref<2x64x192xbf16, #tpu.memory_space<vmem>>, %arg12: memref<2x1x64xf32, #tpu.memory_space<vmem>>, %arg13: memref<2x1x64xf32, #tpu.memory_space<vmem>>, %arg14: memref<2x64x64xbf16, #tpu.memory_space<vmem>>, %arg15: memref<2x1x64xf32, #tpu.memory_space<vmem>>, %arg16: memref<2x64x256xbf16, #tpu.memory_space<vmem>>, %arg17: memref<2x128x64xbf16, #tpu.memory_space<vmem>>, %arg18: memref<1x64xf32, #tpu.memory_space<vmem>>, %arg19: memref<64x128xf32, #tpu.memory_space<vmem>>, %arg20: memref<1x128xf32, #tpu.memory_space<vmem>>, %arg21: memref<1x8x128xf32, #tpu.memory_space<vmem>>) attributes {dimension_semantics = [#tpu.dimension_semantics<parallel>], iteration_bounds = array<i64: 2>, scalar_prefetch = 0 : i64, scratch_operands = 0 : i64, tpu.core_type = #tpu.core_type<tc>, window_params = [{transform_indices = @transform_0, window_bounds = array<i64: 1, 8, 64>}, {transform_indices = @transform_1, window_bounds = array<i64: 1, 1, 8>}, {transform_indices = @transform_2, window_bounds = array<i64: 1, 1, 128>}, {pipeline_mode = #tpu.pipeline_mode<synchronous>, transform_indices = @transform_3, window_bounds = array<i64: 8, 64>}, {pipeline_mode = #tpu.pipeline_mode<synchronous>, transform_indices = @transform_4, window_bounds = array<i64: 8, 64>}, {pipeline_mode = #tpu.pipeline_mode<synchronous>, transform_indices = @transform_5, window_bounds = array<i64: 64, 64>}, {pipeline_mode = #tpu.pipeline_mode<synchronous>, transform_indices = @transform_6, window_bounds = array<i64: 64, 64>}, {pipeline_mode = #tpu.pipeline_mode<synchronous>, transform_indices = @transform_7, window_bounds = array<i64: 32, 64>}, {pipeline_mode = #tpu.pipeline_mode<synchronous>, transform_indices = @transform_8, window_bounds = array<i64: 32, 32>}, {pipeline_mode = #tpu.pipeline_mode<synchronous>, transform_indices = @transform_9, window_bounds = array<i64: 2, 1, 64>}, {pipeline_mode = #tpu.pipeline_mode<synchronous>, transform_indices = @transform_10, window_bounds = array<i64: 2, 64, 192>}, {pipeline_mode = #tpu.pipeline_mode<synchronous>, transform_indices = @transform_11, window_bounds = array<i64: 2, 1, 64>}, {pipeline_mode = #tpu.pipeline_mode<synchronous>, transform_indices = @transform_12, window_bounds = array<i64: 2, 1, 64>}, {pipeline_mode = #tpu.pipeline_mode<synchronous>, transform_indices = @transform_13, window_bounds = array<i64: 2, 64, 64>}, {pipeline_mode = #tpu.pipeline_mode<synchronous>, transform_indices = @transform_14, window_bounds = array<i64: 2, 1, 64>}, {pipeline_mode = #tpu.pipeline_mode<synchronous>, transform_indices = @transform_15, window_bounds = array<i64: 2, 64, 256>}, {pipeline_mode = #tpu.pipeline_mode<synchronous>, transform_indices = @transform_16, window_bounds = array<i64: 2, 128, 64>}, {pipeline_mode = #tpu.pipeline_mode<synchronous>, transform_indices = @transform_17, window_bounds = array<i64: 1, 64>}, {pipeline_mode = #tpu.pipeline_mode<synchronous>, transform_indices = @transform_18, window_bounds = array<i64: 64, 128>}, {pipeline_mode = #tpu.pipeline_mode<synchronous>, transform_indices = @transform_19, window_bounds = array<i64: 1, 128>}, {transform_indices = @transform_20, window_bounds = array<i64: 1, 8, 128>}]} {
    %c0 = arith.constant 0 : index
    %c0_0 = arith.constant 0 : index
    %0 = vector.load %arg4[%c0, %c0_0] : memref<8x64xf32, #tpu.memory_space<vmem>>, vector<8x64xf32>
    %c0_1 = arith.constant 0 : index
    %c0_2 = arith.constant 0 : index
    %1 = vector.load %arg5[%c0_1, %c0_2] : memref<8x64xf32, #tpu.memory_space<vmem>>, vector<8x64xf32>
    %c0_3 = arith.constant 0 : index
    %c0_4 = arith.constant 0 : index
    %2 = vector.load %arg6[%c0_3, %c0_4] : memref<64x64xf32, #tpu.memory_space<vmem>>, vector<64x64xf32>
    %c0_5 = arith.constant 0 : index
    %c0_6 = arith.constant 0 : index
    %3 = vector.load %arg7[%c0_5, %c0_6] : memref<64x64xf32, #tpu.memory_space<vmem>>, vector<64x64xf32>
    %c0_7 = arith.constant 0 : index
    %c0_8 = arith.constant 0 : index
    %4 = vector.load %arg8[%c0_7, %c0_8] : memref<32x64xf32, #tpu.memory_space<vmem>>, vector<32x64xf32>
    %c0_9 = arith.constant 0 : index
    %c0_10 = arith.constant 0 : index
    %5 = vector.load %arg9[%c0_9, %c0_10] : memref<32x32xf32, #tpu.memory_space<vmem>>, vector<32x32xf32>
    %c0_11 = arith.constant 0 : index
    %c0_12 = arith.constant 0 : index
    %c0_13 = arith.constant 0 : index
    %6 = vector.load %arg2[%c0_11, %c0_12, %c0_13] : memref<1x1x8xf32, #tpu.memory_space<vmem>>, vector<1x1x8xf32>
    %7 = vector.shape_cast %6 : vector<1x1x8xf32> to vector<1x8xf32>
    %8 = tpu.iota {dimensions = array<i32: 0>} : vector<8x8xi32>
    %9 = tpu.iota {dimensions = array<i32: 1>} : vector<8x8xi32>
    %10 = arith.cmpi sge, %8, %9 : vector<8x8xi32>
    %11 = arith.extui %10 : vector<8x8xi1> to vector<8x8xi32>
    %12 = arith.sitofp %11 : vector<8x8xi32> to vector<8x8xf32>
    %13 = vector.broadcast %7 : vector<1x8xf32> to vector<8x8xf32>
    %14 = arith.mulf %12, %13 : vector<8x8xf32>
    %15 = tpu.concatenate %14, %14, %14, %14 in 1 : vector<8x8xf32>, vector<8x8xf32>, vector<8x8xf32>, vector<8x8xf32> -> vector<8x32xf32>
    %c0_14 = arith.constant 0 : index
    %c0_15 = arith.constant 0 : index
    %c0_16 = arith.constant 0 : index
    %16 = vector.load %arg1[%c0_14, %c0_15, %c0_16] : memref<1x8x64xf32, #tpu.memory_space<vmem>>, vector<1x8x64xf32>
    %17 = vector.shape_cast %16 : vector<1x8x64xf32> to vector<8x64xf32>
    %c0_17 = arith.constant 0 : index
    %c0_18 = arith.constant 0 : index
    %c0_19 = arith.constant 0 : index
    %18 = vector.load %arg10[%c0_17, %c0_18, %c0_19] : memref<2x1x64xf32, #tpu.memory_space<vmem>>, vector<1x1x64xf32>
    %19 = vector.shape_cast %18 : vector<1x1x64xf32> to vector<1x64xf32>
    %20 = arith.mulf %17, %17 : vector<8x64xf32>
    %cst = arith.constant dense<0.000000e+00> : vector<8xf32>
    %21 = vector.multi_reduction <add>, %20, %cst [1] : vector<8x64xf32> to vector<8xf32>
    %22 = vector.shape_cast %21 : vector<8xf32> to vector<8x1xf32>
    %cst_20 = arith.constant 6.400000e+01 : f32
    %23 = vector.broadcast %cst_20 : f32 to vector<8x1xf32>
    %24 = arith.divf %22, %23 : vector<8x1xf32>
    %cst_21 = arith.constant 9.99999997E-7 : f32
    %25 = vector.broadcast %cst_21 : f32 to vector<8x1xf32>
    %26 = arith.addf %24, %25 : vector<8x1xf32>
    %27 = math.rsqrt %26 : vector<8x1xf32>
    %28 = vector.broadcast %27 : vector<8x1xf32> to vector<8x64xf32>
    %29 = arith.mulf %17, %28 : vector<8x64xf32>
    %30 = vector.broadcast %19 : vector<1x64xf32> to vector<8x64xf32>
    %31 = arith.mulf %29, %30 : vector<8x64xf32>
    %32 = arith.truncf %31 : vector<8x64xf32> to vector<8x64xbf16>
    %c0_22 = arith.constant 0 : index
    %c0_23 = arith.constant 0 : index
    %c0_24 = arith.constant 0 : index
    %33 = vector.load %arg11[%c0_22, %c0_23, %c0_24] : memref<2x64x192xbf16, #tpu.memory_space<vmem>>, vector<1x64x192xbf16>
    %34 = vector.shape_cast %33 : vector<1x64x192xbf16> to vector<64x192xbf16>
    %cst_25 = arith.constant dense<0.000000e+00> : vector<8x192xf32>
    %35 = tpu.matmul %32, %34, %cst_25 {dimension_numbers = #tpu.dot_dimension_numbers<[1], [0], [0], [1], [0, 0, 1, 1], [], []>} : vector<8x64xbf16>, vector<64x192xbf16>, vector<8x192xf32> -> vector<8x192xf32>
    %36 = vector.extract_strided_slice %35 {offsets = [0, 0], sizes = [8, 64], strides = [1, 1]} : vector<8x192xf32> to vector<8x64xf32>
    %37 = vector.extract_strided_slice %35 {offsets = [0, 64], sizes = [8, 64], strides = [1, 1]} : vector<8x192xf32> to vector<8x64xf32>
    %38 = vector.extract_strided_slice %35 {offsets = [0, 128], sizes = [8, 64], strides = [1, 1]} : vector<8x192xf32> to vector<8x64xf32>
    %39 = arith.mulf %36, %36 : vector<8x64xf32>
    %cst_26 = arith.constant dense<0.000000e+00> : vector<8x64xf32>
    %40 = tpu.matmul %39, %3, %cst_26 {dimension_numbers = #tpu.dot_dimension_numbers<[1], [0], [0], [1], [0, 0, 1, 1], [], []>} : vector<8x64xf32>, vector<64x64xf32>, vector<8x64xf32> -> vector<8x64xf32>
    %cst_27 = arith.constant 9.99999997E-7 : f32
    %41 = vector.broadcast %cst_27 : f32 to vector<8x64xf32>
    %42 = arith.addf %40, %41 : vector<8x64xf32>
    %43 = math.rsqrt %42 : vector<8x64xf32>
    %44 = arith.mulf %36, %43 : vector<8x64xf32>
    %c0_28 = arith.constant 0 : index
    %c0_29 = arith.constant 0 : index
    %c0_30 = arith.constant 0 : index
    %45 = vector.load %arg12[%c0_28, %c0_29, %c0_30] : memref<2x1x64xf32, #tpu.memory_space<vmem>>, vector<1x1x64xf32>
    %46 = vector.shape_cast %45 : vector<1x1x64xf32> to vector<1x64xf32>
    %47 = vector.broadcast %46 : vector<1x64xf32> to vector<8x64xf32>
    %48 = arith.mulf %44, %47 : vector<8x64xf32>
    %49 = arith.mulf %37, %37 : vector<8x64xf32>
    %cst_31 = arith.constant dense<0.000000e+00> : vector<8x64xf32>
    %50 = tpu.matmul %49, %3, %cst_31 {dimension_numbers = #tpu.dot_dimension_numbers<[1], [0], [0], [1], [0, 0, 1, 1], [], []>} : vector<8x64xf32>, vector<64x64xf32>, vector<8x64xf32> -> vector<8x64xf32>
    %cst_32 = arith.constant 9.99999997E-7 : f32
    %51 = vector.broadcast %cst_32 : f32 to vector<8x64xf32>
    %52 = arith.addf %50, %51 : vector<8x64xf32>
    %53 = math.rsqrt %52 : vector<8x64xf32>
    %54 = arith.mulf %37, %53 : vector<8x64xf32>
    %c0_33 = arith.constant 0 : index
    %c0_34 = arith.constant 0 : index
    %c0_35 = arith.constant 0 : index
    %55 = vector.load %arg13[%c0_33, %c0_34, %c0_35] : memref<2x1x64xf32, #tpu.memory_space<vmem>>, vector<1x1x64xf32>
    %56 = vector.shape_cast %55 : vector<1x1x64xf32> to vector<1x64xf32>
    %57 = vector.broadcast %56 : vector<1x64xf32> to vector<8x64xf32>
    %58 = arith.mulf %54, %57 : vector<8x64xf32>
    %59 = arith.mulf %48, %0 : vector<8x64xf32>
    %cst_36 = arith.constant dense<0.000000e+00> : vector<8x64xf32>
    %60 = tpu.matmul %48, %2, %cst_36 {dimension_numbers = #tpu.dot_dimension_numbers<[1], [0], [0], [1], [0, 0, 1, 1], [], []>} : vector<8x64xf32>, vector<64x64xf32>, vector<8x64xf32> -> vector<8x64xf32>
    %61 = arith.mulf %60, %1 : vector<8x64xf32>
    %62 = arith.addf %59, %61 : vector<8x64xf32>
    %63 = arith.mulf %58, %0 : vector<8x64xf32>
    %cst_37 = arith.constant dense<0.000000e+00> : vector<8x64xf32>
    %64 = tpu.matmul %58, %2, %cst_37 {dimension_numbers = #tpu.dot_dimension_numbers<[1], [0], [0], [1], [0, 0, 1, 1], [], []>} : vector<8x64xf32>, vector<64x64xf32>, vector<8x64xf32> -> vector<8x64xf32>
    %65 = arith.mulf %64, %1 : vector<8x64xf32>
    %66 = arith.addf %63, %65 : vector<8x64xf32>
    %67 = tpu.concatenate %66, %66, %66, %66 in 0 : vector<8x64xf32>, vector<8x64xf32>, vector<8x64xf32>, vector<8x64xf32> -> vector<32x64xf32>
    %68 = arith.mulf %67, %4 : vector<32x64xf32>
    %69 = tpu.concatenate %38, %38, %38, %38 in 0 : vector<8x64xf32>, vector<8x64xf32>, vector<8x64xf32>, vector<8x64xf32> -> vector<32x64xf32>
    %70 = arith.mulf %69, %4 : vector<32x64xf32>
    %cst_38 = arith.constant dense<0.000000e+00> : vector<8x32xf32>
    %71 = tpu.matmul %62, %68, %cst_38 {dimension_numbers = #tpu.dot_dimension_numbers<[1], [1], [0], [0], [0, 0, 1, 0], [], []>} : vector<8x64xf32>, vector<32x64xf32>, vector<8x32xf32> -> vector<8x32xf32>
    %cst_39 = arith.constant 0.000000e+00 : f32
    %72 = vector.broadcast %cst_39 : f32 to vector<8x32xf32>
    %73 = arith.cmpf ogt, %15, %72 : vector<8x32xf32>
    %cst_40 = arith.constant -1.000000e+09 : f32
    %74 = vector.broadcast %cst_40 : f32 to vector<8x32xf32>
    %75 = arith.select %73, %71, %74 : vector<8x32xi1>, vector<8x32xf32>
    %cst_41 = arith.constant dense<0xFF800000> : vector<8xf32>
    %76 = vector.multi_reduction <maximumf>, %75, %cst_41 [1] : vector<8x32xf32> to vector<8xf32>
    %77 = vector.shape_cast %76 : vector<8xf32> to vector<8x1xf32>
    %78 = vector.broadcast %77 : vector<8x1xf32> to vector<8x32xf32>
    %79 = arith.subf %75, %78 : vector<8x32xf32>
    %80 = math.exp %79 : vector<8x32xf32>
    %cst_42 = arith.constant dense<0.000000e+00> : vector<8x32xf32>
    %81 = tpu.matmul %80, %5, %cst_42 {dimension_numbers = #tpu.dot_dimension_numbers<[1], [0], [0], [1], [0, 0, 1, 1], [], []>} : vector<8x32xf32>, vector<32x32xf32>, vector<8x32xf32> -> vector<8x32xf32>
    %82 = tpu.reciprocal %81 {approx = true} : vector<8x32xf32> -> vector<8x32xf32>
    %83 = arith.mulf %80, %82 : vector<8x32xf32>
    %cst_43 = arith.constant dense<0.000000e+00> : vector<8x64xf32>
    %84 = tpu.matmul %83, %70, %cst_43 {dimension_numbers = #tpu.dot_dimension_numbers<[1], [0], [0], [1], [0, 0, 1, 1], [], []>} : vector<8x32xf32>, vector<32x64xf32>, vector<8x64xf32> -> vector<8x64xf32>
    %85 = arith.truncf %84 : vector<8x64xf32> to vector<8x64xbf16>
    %c0_44 = arith.constant 0 : index
    %c0_45 = arith.constant 0 : index
    %c0_46 = arith.constant 0 : index
    %86 = vector.load %arg14[%c0_44, %c0_45, %c0_46] : memref<2x64x64xbf16, #tpu.memory_space<vmem>>, vector<1x64x64xbf16>
    %87 = vector.shape_cast %86 : vector<1x64x64xbf16> to vector<64x64xbf16>
    %cst_47 = arith.constant dense<0.000000e+00> : vector<8x64xf32>
    %88 = tpu.matmul %85, %87, %cst_47 {dimension_numbers = #tpu.dot_dimension_numbers<[1], [0], [0], [1], [0, 0, 1, 1], [], []>} : vector<8x64xbf16>, vector<64x64xbf16>, vector<8x64xf32> -> vector<8x64xf32>
    %89 = arith.addf %17, %88 : vector<8x64xf32>
    %c0_48 = arith.constant 0 : index
    %c0_49 = arith.constant 0 : index
    %c0_50 = arith.constant 0 : index
    %90 = vector.load %arg15[%c0_48, %c0_49, %c0_50] : memref<2x1x64xf32, #tpu.memory_space<vmem>>, vector<1x1x64xf32>
    %91 = vector.shape_cast %90 : vector<1x1x64xf32> to vector<1x64xf32>
    %92 = arith.mulf %89, %89 : vector<8x64xf32>
    %cst_51 = arith.constant dense<0.000000e+00> : vector<8xf32>
    %93 = vector.multi_reduction <add>, %92, %cst_51 [1] : vector<8x64xf32> to vector<8xf32>
    %94 = vector.shape_cast %93 : vector<8xf32> to vector<8x1xf32>
    %cst_52 = arith.constant 6.400000e+01 : f32
    %95 = vector.broadcast %cst_52 : f32 to vector<8x1xf32>
    %96 = arith.divf %94, %95 : vector<8x1xf32>
    %cst_53 = arith.constant 9.99999997E-7 : f32
    %97 = vector.broadcast %cst_53 : f32 to vector<8x1xf32>
    %98 = arith.addf %96, %97 : vector<8x1xf32>
    %99 = math.rsqrt %98 : vector<8x1xf32>
    %100 = vector.broadcast %99 : vector<8x1xf32> to vector<8x64xf32>
    %101 = arith.mulf %89, %100 : vector<8x64xf32>
    %102 = vector.broadcast %91 : vector<1x64xf32> to vector<8x64xf32>
    %103 = arith.mulf %101, %102 : vector<8x64xf32>
    %104 = arith.truncf %103 : vector<8x64xf32> to vector<8x64xbf16>
    %c0_54 = arith.constant 0 : index
    %c0_55 = arith.constant 0 : index
    %c0_56 = arith.constant 0 : index
    %105 = vector.load %arg16[%c0_54, %c0_55, %c0_56] : memref<2x64x256xbf16, #tpu.memory_space<vmem>>, vector<1x64x256xbf16>
    %106 = vector.shape_cast %105 : vector<1x64x256xbf16> to vector<64x256xbf16>
    %cst_57 = arith.constant dense<0.000000e+00> : vector<8x256xf32>
    %107 = tpu.matmul %104, %106, %cst_57 {dimension_numbers = #tpu.dot_dimension_numbers<[1], [0], [0], [1], [0, 0, 1, 1], [], []>} : vector<8x64xbf16>, vector<64x256xbf16>, vector<8x256xf32> -> vector<8x256xf32>
    %108 = vector.extract_strided_slice %107 {offsets = [0, 0], sizes = [8, 128], strides = [1, 1]} : vector<8x256xf32> to vector<8x128xf32>
    %109 = vector.extract_strided_slice %107 {offsets = [0, 128], sizes = [8, 128], strides = [1, 1]} : vector<8x256xf32> to vector<8x128xf32>
    %cst_58 = arith.constant 0.000000e+00 : f32
    %110 = vector.broadcast %cst_58 : f32 to vector<8x128xf32>
    %111 = arith.subf %110, %108 : vector<8x128xf32>
    %112 = math.exp %111 : vector<8x128xf32>
    %cst_59 = arith.constant 1.000000e+00 : f32
    %113 = vector.broadcast %cst_59 : f32 to vector<8x128xf32>
    %114 = arith.addf %113, %112 : vector<8x128xf32>
    %115 = tpu.reciprocal %114 {approx = true} : vector<8x128xf32> -> vector<8x128xf32>
    %116 = arith.mulf %108, %115 : vector<8x128xf32>
    %117 = arith.mulf %116, %109 : vector<8x128xf32>
    %118 = arith.truncf %117 : vector<8x128xf32> to vector<8x128xbf16>
    %c0_60 = arith.constant 0 : index
    %c0_61 = arith.constant 0 : index
    %c0_62 = arith.constant 0 : index
    %119 = vector.load %arg17[%c0_60, %c0_61, %c0_62] : memref<2x128x64xbf16, #tpu.memory_space<vmem>>, vector<1x128x64xbf16>
    %120 = vector.shape_cast %119 : vector<1x128x64xbf16> to vector<128x64xbf16>
    %cst_63 = arith.constant dense<0.000000e+00> : vector<8x64xf32>
    %121 = tpu.matmul %118, %120, %cst_63 {dimension_numbers = #tpu.dot_dimension_numbers<[1], [0], [0], [1], [0, 0, 1, 1], [], []>} : vector<8x128xbf16>, vector<128x64xbf16>, vector<8x64xf32> -> vector<8x64xf32>
    %122 = arith.addf %89, %121 : vector<8x64xf32>
    %c1 = arith.constant 1 : index
    %c0_64 = arith.constant 0 : index
    %c0_65 = arith.constant 0 : index
    %123 = vector.load %arg10[%c1, %c0_64, %c0_65] : memref<2x1x64xf32, #tpu.memory_space<vmem>>, vector<1x1x64xf32>
    %124 = vector.shape_cast %123 : vector<1x1x64xf32> to vector<1x64xf32>
    %125 = arith.mulf %122, %122 : vector<8x64xf32>
    %cst_66 = arith.constant dense<0.000000e+00> : vector<8xf32>
    %126 = vector.multi_reduction <add>, %125, %cst_66 [1] : vector<8x64xf32> to vector<8xf32>
    %127 = vector.shape_cast %126 : vector<8xf32> to vector<8x1xf32>
    %cst_67 = arith.constant 6.400000e+01 : f32
    %128 = vector.broadcast %cst_67 : f32 to vector<8x1xf32>
    %129 = arith.divf %127, %128 : vector<8x1xf32>
    %cst_68 = arith.constant 9.99999997E-7 : f32
    %130 = vector.broadcast %cst_68 : f32 to vector<8x1xf32>
    %131 = arith.addf %129, %130 : vector<8x1xf32>
    %132 = math.rsqrt %131 : vector<8x1xf32>
    %133 = vector.broadcast %132 : vector<8x1xf32> to vector<8x64xf32>
    %134 = arith.mulf %122, %133 : vector<8x64xf32>
    %135 = vector.broadcast %124 : vector<1x64xf32> to vector<8x64xf32>
    %136 = arith.mulf %134, %135 : vector<8x64xf32>
    %137 = arith.truncf %136 : vector<8x64xf32> to vector<8x64xbf16>
    %c1_69 = arith.constant 1 : index
    %c0_70 = arith.constant 0 : index
    %c0_71 = arith.constant 0 : index
    %138 = vector.load %arg11[%c1_69, %c0_70, %c0_71] : memref<2x64x192xbf16, #tpu.memory_space<vmem>>, vector<1x64x192xbf16>
    %139 = vector.shape_cast %138 : vector<1x64x192xbf16> to vector<64x192xbf16>
    %cst_72 = arith.constant dense<0.000000e+00> : vector<8x192xf32>
    %140 = tpu.matmul %137, %139, %cst_72 {dimension_numbers = #tpu.dot_dimension_numbers<[1], [0], [0], [1], [0, 0, 1, 1], [], []>} : vector<8x64xbf16>, vector<64x192xbf16>, vector<8x192xf32> -> vector<8x192xf32>
    %141 = vector.extract_strided_slice %140 {offsets = [0, 0], sizes = [8, 64], strides = [1, 1]} : vector<8x192xf32> to vector<8x64xf32>
    %142 = vector.extract_strided_slice %140 {offsets = [0, 64], sizes = [8, 64], strides = [1, 1]} : vector<8x192xf32> to vector<8x64xf32>
    %143 = vector.extract_strided_slice %140 {offsets = [0, 128], sizes = [8, 64], strides = [1, 1]} : vector<8x192xf32> to vector<8x64xf32>
    %144 = arith.mulf %141, %141 : vector<8x64xf32>
    %cst_73 = arith.constant dense<0.000000e+00> : vector<8x64xf32>
    %145 = tpu.matmul %144, %3, %cst_73 {dimension_numbers = #tpu.dot_dimension_numbers<[1], [0], [0], [1], [0, 0, 1, 1], [], []>} : vector<8x64xf32>, vector<64x64xf32>, vector<8x64xf32> -> vector<8x64xf32>
    %cst_74 = arith.constant 9.99999997E-7 : f32
    %146 = vector.broadcast %cst_74 : f32 to vector<8x64xf32>
    %147 = arith.addf %145, %146 : vector<8x64xf32>
    %148 = math.rsqrt %147 : vector<8x64xf32>
    %149 = arith.mulf %141, %148 : vector<8x64xf32>
    %c1_75 = arith.constant 1 : index
    %c0_76 = arith.constant 0 : index
    %c0_77 = arith.constant 0 : index
    %150 = vector.load %arg12[%c1_75, %c0_76, %c0_77] : memref<2x1x64xf32, #tpu.memory_space<vmem>>, vector<1x1x64xf32>
    %151 = vector.shape_cast %150 : vector<1x1x64xf32> to vector<1x64xf32>
    %152 = vector.broadcast %151 : vector<1x64xf32> to vector<8x64xf32>
    %153 = arith.mulf %149, %152 : vector<8x64xf32>
    %154 = arith.mulf %142, %142 : vector<8x64xf32>
    %cst_78 = arith.constant dense<0.000000e+00> : vector<8x64xf32>
    %155 = tpu.matmul %154, %3, %cst_78 {dimension_numbers = #tpu.dot_dimension_numbers<[1], [0], [0], [1], [0, 0, 1, 1], [], []>} : vector<8x64xf32>, vector<64x64xf32>, vector<8x64xf32> -> vector<8x64xf32>
    %cst_79 = arith.constant 9.99999997E-7 : f32
    %156 = vector.broadcast %cst_79 : f32 to vector<8x64xf32>
    %157 = arith.addf %155, %156 : vector<8x64xf32>
    %158 = math.rsqrt %157 : vector<8x64xf32>
    %159 = arith.mulf %142, %158 : vector<8x64xf32>
    %c1_80 = arith.constant 1 : index
    %c0_81 = arith.constant 0 : index
    %c0_82 = arith.constant 0 : index
    %160 = vector.load %arg13[%c1_80, %c0_81, %c0_82] : memref<2x1x64xf32, #tpu.memory_space<vmem>>, vector<1x1x64xf32>
    %161 = vector.shape_cast %160 : vector<1x1x64xf32> to vector<1x64xf32>
    %162 = vector.broadcast %161 : vector<1x64xf32> to vector<8x64xf32>
    %163 = arith.mulf %159, %162 : vector<8x64xf32>
    %164 = arith.mulf %153, %0 : vector<8x64xf32>
    %cst_83 = arith.constant dense<0.000000e+00> : vector<8x64xf32>
    %165 = tpu.matmul %153, %2, %cst_83 {dimension_numbers = #tpu.dot_dimension_numbers<[1], [0], [0], [1], [0, 0, 1, 1], [], []>} : vector<8x64xf32>, vector<64x64xf32>, vector<8x64xf32> -> vector<8x64xf32>
    %166 = arith.mulf %165, %1 : vector<8x64xf32>
    %167 = arith.addf %164, %166 : vector<8x64xf32>
    %168 = arith.mulf %163, %0 : vector<8x64xf32>
    %cst_84 = arith.constant dense<0.000000e+00> : vector<8x64xf32>
    %169 = tpu.matmul %163, %2, %cst_84 {dimension_numbers = #tpu.dot_dimension_numbers<[1], [0], [0], [1], [0, 0, 1, 1], [], []>} : vector<8x64xf32>, vector<64x64xf32>, vector<8x64xf32> -> vector<8x64xf32>
    %170 = arith.mulf %169, %1 : vector<8x64xf32>
    %171 = arith.addf %168, %170 : vector<8x64xf32>
    %172 = tpu.concatenate %171, %171, %171, %171 in 0 : vector<8x64xf32>, vector<8x64xf32>, vector<8x64xf32>, vector<8x64xf32> -> vector<32x64xf32>
    %173 = arith.mulf %172, %4 : vector<32x64xf32>
    %174 = tpu.concatenate %143, %143, %143, %143 in 0 : vector<8x64xf32>, vector<8x64xf32>, vector<8x64xf32>, vector<8x64xf32> -> vector<32x64xf32>
    %175 = arith.mulf %174, %4 : vector<32x64xf32>
    %cst_85 = arith.constant dense<0.000000e+00> : vector<8x32xf32>
    %176 = tpu.matmul %167, %173, %cst_85 {dimension_numbers = #tpu.dot_dimension_numbers<[1], [1], [0], [0], [0, 0, 1, 0], [], []>} : vector<8x64xf32>, vector<32x64xf32>, vector<8x32xf32> -> vector<8x32xf32>
    %cst_86 = arith.constant 0.000000e+00 : f32
    %177 = vector.broadcast %cst_86 : f32 to vector<8x32xf32>
    %178 = arith.cmpf ogt, %15, %177 : vector<8x32xf32>
    %cst_87 = arith.constant -1.000000e+09 : f32
    %179 = vector.broadcast %cst_87 : f32 to vector<8x32xf32>
    %180 = arith.select %178, %176, %179 : vector<8x32xi1>, vector<8x32xf32>
    %cst_88 = arith.constant dense<0xFF800000> : vector<8xf32>
    %181 = vector.multi_reduction <maximumf>, %180, %cst_88 [1] : vector<8x32xf32> to vector<8xf32>
    %182 = vector.shape_cast %181 : vector<8xf32> to vector<8x1xf32>
    %183 = vector.broadcast %182 : vector<8x1xf32> to vector<8x32xf32>
    %184 = arith.subf %180, %183 : vector<8x32xf32>
    %185 = math.exp %184 : vector<8x32xf32>
    %cst_89 = arith.constant dense<0.000000e+00> : vector<8x32xf32>
    %186 = tpu.matmul %185, %5, %cst_89 {dimension_numbers = #tpu.dot_dimension_numbers<[1], [0], [0], [1], [0, 0, 1, 1], [], []>} : vector<8x32xf32>, vector<32x32xf32>, vector<8x32xf32> -> vector<8x32xf32>
    %187 = tpu.reciprocal %186 {approx = true} : vector<8x32xf32> -> vector<8x32xf32>
    %188 = arith.mulf %185, %187 : vector<8x32xf32>
    %cst_90 = arith.constant dense<0.000000e+00> : vector<8x64xf32>
    %189 = tpu.matmul %188, %175, %cst_90 {dimension_numbers = #tpu.dot_dimension_numbers<[1], [0], [0], [1], [0, 0, 1, 1], [], []>} : vector<8x32xf32>, vector<32x64xf32>, vector<8x64xf32> -> vector<8x64xf32>
    %190 = arith.truncf %189 : vector<8x64xf32> to vector<8x64xbf16>
    %c1_91 = arith.constant 1 : index
    %c0_92 = arith.constant 0 : index
    %c0_93 = arith.constant 0 : index
    %191 = vector.load %arg14[%c1_91, %c0_92, %c0_93] : memref<2x64x64xbf16, #tpu.memory_space<vmem>>, vector<1x64x64xbf16>
    %192 = vector.shape_cast %191 : vector<1x64x64xbf16> to vector<64x64xbf16>
    %cst_94 = arith.constant dense<0.000000e+00> : vector<8x64xf32>
    %193 = tpu.matmul %190, %192, %cst_94 {dimension_numbers = #tpu.dot_dimension_numbers<[1], [0], [0], [1], [0, 0, 1, 1], [], []>} : vector<8x64xbf16>, vector<64x64xbf16>, vector<8x64xf32> -> vector<8x64xf32>
    %194 = arith.addf %122, %193 : vector<8x64xf32>
    %c1_95 = arith.constant 1 : index
    %c0_96 = arith.constant 0 : index
    %c0_97 = arith.constant 0 : index
    %195 = vector.load %arg15[%c1_95, %c0_96, %c0_97] : memref<2x1x64xf32, #tpu.memory_space<vmem>>, vector<1x1x64xf32>
    %196 = vector.shape_cast %195 : vector<1x1x64xf32> to vector<1x64xf32>
    %197 = arith.mulf %194, %194 : vector<8x64xf32>
    %cst_98 = arith.constant dense<0.000000e+00> : vector<8xf32>
    %198 = vector.multi_reduction <add>, %197, %cst_98 [1] : vector<8x64xf32> to vector<8xf32>
    %199 = vector.shape_cast %198 : vector<8xf32> to vector<8x1xf32>
    %cst_99 = arith.constant 6.400000e+01 : f32
    %200 = vector.broadcast %cst_99 : f32 to vector<8x1xf32>
    %201 = arith.divf %199, %200 : vector<8x1xf32>
    %cst_100 = arith.constant 9.99999997E-7 : f32
    %202 = vector.broadcast %cst_100 : f32 to vector<8x1xf32>
    %203 = arith.addf %201, %202 : vector<8x1xf32>
    %204 = math.rsqrt %203 : vector<8x1xf32>
    %205 = vector.broadcast %204 : vector<8x1xf32> to vector<8x64xf32>
    %206 = arith.mulf %194, %205 : vector<8x64xf32>
    %207 = vector.broadcast %196 : vector<1x64xf32> to vector<8x64xf32>
    %208 = arith.mulf %206, %207 : vector<8x64xf32>
    %209 = arith.truncf %208 : vector<8x64xf32> to vector<8x64xbf16>
    %c1_101 = arith.constant 1 : index
    %c0_102 = arith.constant 0 : index
    %c0_103 = arith.constant 0 : index
    %210 = vector.load %arg16[%c1_101, %c0_102, %c0_103] : memref<2x64x256xbf16, #tpu.memory_space<vmem>>, vector<1x64x256xbf16>
    %211 = vector.shape_cast %210 : vector<1x64x256xbf16> to vector<64x256xbf16>
    %cst_104 = arith.constant dense<0.000000e+00> : vector<8x256xf32>
    %212 = tpu.matmul %209, %211, %cst_104 {dimension_numbers = #tpu.dot_dimension_numbers<[1], [0], [0], [1], [0, 0, 1, 1], [], []>} : vector<8x64xbf16>, vector<64x256xbf16>, vector<8x256xf32> -> vector<8x256xf32>
    %213 = vector.extract_strided_slice %212 {offsets = [0, 0], sizes = [8, 128], strides = [1, 1]} : vector<8x256xf32> to vector<8x128xf32>
    %214 = vector.extract_strided_slice %212 {offsets = [0, 128], sizes = [8, 128], strides = [1, 1]} : vector<8x256xf32> to vector<8x128xf32>
    %cst_105 = arith.constant 0.000000e+00 : f32
    %215 = vector.broadcast %cst_105 : f32 to vector<8x128xf32>
    %216 = arith.subf %215, %213 : vector<8x128xf32>
    %217 = math.exp %216 : vector<8x128xf32>
    %cst_106 = arith.constant 1.000000e+00 : f32
    %218 = vector.broadcast %cst_106 : f32 to vector<8x128xf32>
    %219 = arith.addf %218, %217 : vector<8x128xf32>
    %220 = tpu.reciprocal %219 {approx = true} : vector<8x128xf32> -> vector<8x128xf32>
    %221 = arith.mulf %213, %220 : vector<8x128xf32>
    %222 = arith.mulf %221, %214 : vector<8x128xf32>
    %223 = arith.truncf %222 : vector<8x128xf32> to vector<8x128xbf16>
    %c1_107 = arith.constant 1 : index
    %c0_108 = arith.constant 0 : index
    %c0_109 = arith.constant 0 : index
    %224 = vector.load %arg17[%c1_107, %c0_108, %c0_109] : memref<2x128x64xbf16, #tpu.memory_space<vmem>>, vector<1x128x64xbf16>
    %225 = vector.shape_cast %224 : vector<1x128x64xbf16> to vector<128x64xbf16>
    %cst_110 = arith.constant dense<0.000000e+00> : vector<8x64xf32>
    %226 = tpu.matmul %223, %225, %cst_110 {dimension_numbers = #tpu.dot_dimension_numbers<[1], [0], [0], [1], [0, 0, 1, 1], [], []>} : vector<8x128xbf16>, vector<128x64xbf16>, vector<8x64xf32> -> vector<8x64xf32>
    %227 = arith.addf %194, %226 : vector<8x64xf32>
    %c0_111 = arith.constant 0 : index
    %c0_112 = arith.constant 0 : index
    %228 = vector.load %arg18[%c0_111, %c0_112] : memref<1x64xf32, #tpu.memory_space<vmem>>, vector<1x64xf32>
    %229 = arith.mulf %227, %227 : vector<8x64xf32>
    %cst_113 = arith.constant dense<0.000000e+00> : vector<8xf32>
    %230 = vector.multi_reduction <add>, %229, %cst_113 [1] : vector<8x64xf32> to vector<8xf32>
    %231 = vector.shape_cast %230 : vector<8xf32> to vector<8x1xf32>
    %cst_114 = arith.constant 6.400000e+01 : f32
    %232 = vector.broadcast %cst_114 : f32 to vector<8x1xf32>
    %233 = arith.divf %231, %232 : vector<8x1xf32>
    %cst_115 = arith.constant 9.99999997E-7 : f32
    %234 = vector.broadcast %cst_115 : f32 to vector<8x1xf32>
    %235 = arith.addf %233, %234 : vector<8x1xf32>
    %236 = math.rsqrt %235 : vector<8x1xf32>
    %237 = vector.broadcast %236 : vector<8x1xf32> to vector<8x64xf32>
    %238 = arith.mulf %227, %237 : vector<8x64xf32>
    %239 = vector.broadcast %228 : vector<1x64xf32> to vector<8x64xf32>
    %240 = arith.mulf %238, %239 : vector<8x64xf32>
    %cst_116 = arith.constant dense<0.000000e+00> : vector<1xf32>
    %241 = vector.multi_reduction <add>, %7, %cst_116 [1] : vector<1x8xf32> to vector<1xf32>
    %242 = vector.shape_cast %241 : vector<1xf32> to vector<1x1xf32>
    %cst_117 = arith.constant 1.000000e+00 : f32
    %243 = vector.broadcast %cst_117 : f32 to vector<1x1xf32>
    %244 = arith.subf %242, %243 : vector<1x1xf32>
    %245 = tpu.iota {dimensions = array<i32: 1>} : vector<1x8xi32>
    %246 = arith.sitofp %245 : vector<1x8xi32> to vector<1x8xf32>
    %247 = vector.broadcast %244 : vector<1x1xf32> to vector<1x8xf32>
    %248 = arith.cmpf oeq, %246, %247 : vector<1x8xf32>
    %249 = arith.extui %248 : vector<1x8xi1> to vector<1x8xi32>
    %250 = arith.sitofp %249 : vector<1x8xi32> to vector<1x8xf32>
    %cst_118 = arith.constant dense<0.000000e+00> : vector<1x64xf32>
    %251 = tpu.matmul %250, %240, %cst_118 {dimension_numbers = #tpu.dot_dimension_numbers<[1], [0], [0], [1], [0, 0, 1, 1], [], []>} : vector<1x8xf32>, vector<8x64xf32>, vector<1x64xf32> -> vector<1x64xf32>
    %c0_119 = arith.constant 0 : index
    %c0_120 = arith.constant 0 : index
    %252 = vector.load %arg19[%c0_119, %c0_120] : memref<64x128xf32, #tpu.memory_space<vmem>>, vector<64x128xf32>
    %cst_121 = arith.constant dense<0.000000e+00> : vector<1x128xf32>
    %253 = tpu.matmul %251, %252, %cst_121 {dimension_numbers = #tpu.dot_dimension_numbers<[1], [0], [0], [1], [0, 0, 1, 1], [], []>} : vector<1x64xf32>, vector<64x128xf32>, vector<1x128xf32> -> vector<1x128xf32>
    %c0_122 = arith.constant 0 : index
    %c0_123 = arith.constant 0 : index
    %254 = vector.load %arg20[%c0_122, %c0_123] : memref<1x128xf32, #tpu.memory_space<vmem>>, vector<1x128xf32>
    %255 = arith.addf %253, %254 : vector<1x128xf32>
    %c0_124 = arith.constant 0 : index
    %c0_125 = arith.constant 0 : index
    %c0_126 = arith.constant 0 : index
    %256 = vector.load %arg3[%c0_124, %c0_125, %c0_126] : memref<1x1x128xf32, #tpu.memory_space<vmem>>, vector<1x1x128xf32>
    %257 = vector.shape_cast %256 : vector<1x1x128xf32> to vector<1x128xf32>
    %cst_127 = arith.constant dense<0xFF800000> : vector<1xf32>
    %258 = vector.multi_reduction <maximumf>, %255, %cst_127 [1] : vector<1x128xf32> to vector<1xf32>
    %259 = vector.shape_cast %258 : vector<1xf32> to vector<1x1xf32>
    %260 = vector.broadcast %259 : vector<1x1xf32> to vector<1x128xf32>
    %261 = arith.subf %255, %260 : vector<1x128xf32>
    %262 = math.exp %261 : vector<1x128xf32>
    %cst_128 = arith.constant dense<0.000000e+00> : vector<1xf32>
    %263 = vector.multi_reduction <add>, %262, %cst_128 [1] : vector<1x128xf32> to vector<1xf32>
    %264 = vector.shape_cast %263 : vector<1xf32> to vector<1x1xf32>
    %265 = math.log %264 : vector<1x1xf32>
    %266 = arith.addf %265, %259 : vector<1x1xf32>
    %267 = arith.mulf %255, %257 : vector<1x128xf32>
    %cst_129 = arith.constant dense<0.000000e+00> : vector<1xf32>
    %268 = vector.multi_reduction <add>, %267, %cst_129 [1] : vector<1x128xf32> to vector<1xf32>
    %269 = vector.shape_cast %268 : vector<1xf32> to vector<1x1xf32>
    %270 = arith.subf %266, %269 : vector<1x1xf32>
    %cst_130 = arith.constant 0.000000e+00 : f32
    %271 = vector.broadcast %cst_130 : f32 to vector<1x1xf32>
    %272 = arith.subf %271, %270 : vector<1x1xf32>
    %273 = math.exp %272 : vector<1x1xf32>
    %cst_131 = arith.constant 1.000000e+00 : f32
    %274 = vector.broadcast %cst_131 : f32 to vector<1x1xf32>
    %275 = arith.subf %274, %273 : vector<1x1xf32>
    %cst_132 = arith.constant 0.000000e+00 : f32
    %276 = vector.broadcast %cst_132 : f32 to vector<1x1xf32>
    %277 = arith.maximumf %275, %276 : vector<1x1xf32>
    %278 = arith.mulf %277, %277 : vector<1x1xf32>
    %279 = arith.mulf %278, %270 : vector<1x1xf32>
    %280 = vector.shape_cast %279 : vector<1x1xf32> to vector<1x1xf32>
    %281 = vector.broadcast %280 : vector<1x1xf32> to vector<8x128xf32>
    %c0_133 = arith.constant 0 : index
    %c0_134 = arith.constant 0 : index
    %c0_135 = arith.constant 0 : index
    %282 = vector.load %arg21[%c0_133, %c0_134, %c0_135] : memref<1x8x128xf32, #tpu.memory_space<vmem>>, vector<1x8x128xf32>
    %283 = vector.shape_cast %282 : vector<1x8x128xf32> to vector<8x128xf32>
    %284 = vector.shape_cast %281 : vector<8x128xf32> to vector<1x8x128xf32>
    tpu.vector_store %arg21[%c0_133, %c0_134, %c0_135], %284 {strides = array<i32>} : memref<1x8x128xf32, #tpu.memory_space<vmem>>, vector<1x8x128xf32>,
    %c0_136 = arith.constant 0 : index
    %c0_137 = arith.constant 0 : index
    %c0_138 = arith.constant 0 : index
    %285 = vector.load %arg21[%c0_136, %c0_137, %c0_138] : memref<1x8x128xf32, #tpu.memory_space<vmem>>, vector<1x1x128xf32>
    %286 = vector.shape_cast %285 : vector<1x1x128xf32> to vector<1x128xf32>
    %287 = vector.shape_cast %255 : vector<1x128xf32> to vector<1x1x128xf32>
    tpu.vector_store %arg21[%c0_136, %c0_137, %c0_138], %287 {strides = array<i32>} : memref<1x8x128xf32, #tpu.memory_space<vmem>>, vector<1x1x128xf32>,
    return
  }
  func.func @transform_0(%arg0: i32) -> (i32, i32, i32) {
    %c0_i32 = arith.constant 0 : i32
    %c0_i32_0 = arith.constant 0 : i32
    %c0_i32_1 = arith.constant 0 : i32
    return %arg0, %c0_i32, %c0_i32_0 : i32, i32, i32
  }
  func.func @transform_1(%arg0: i32) -> (i32, i32, i32) {
    %c0_i32 = arith.constant 0 : i32
    %c0_i32_0 = arith.constant 0 : i32
    %c0_i32_1 = arith.constant 0 : i32
    return %arg0, %c0_i32, %c0_i32_0 : i32, i32, i32
  }
  func.func @transform_2(%arg0: i32) -> (i32, i32, i32) {
    %c0_i32 = arith.constant 0 : i32
    %c0_i32_0 = arith.constant 0 : i32
    %c0_i32_1 = arith.constant 0 : i32
    return %arg0, %c0_i32, %c0_i32_0 : i32, i32, i32
  }
  func.func @transform_3(%arg0: i32) -> (i32, i32) {
    %c0_i32 = arith.constant 0 : i32
    %c0_i32_0 = arith.constant 0 : i32
    %c0_i32_1 = arith.constant 0 : i32
    return %c0_i32, %c0_i32_0 : i32, i32
  }
  func.func @transform_4(%arg0: i32) -> (i32, i32) {
    %c0_i32 = arith.constant 0 : i32
    %c0_i32_0 = arith.constant 0 : i32
    %c0_i32_1 = arith.constant 0 : i32
    return %c0_i32, %c0_i32_0 : i32, i32
  }
  func.func @transform_5(%arg0: i32) -> (i32, i32) {
    %c0_i32 = arith.constant 0 : i32
    %c0_i32_0 = arith.constant 0 : i32
    %c0_i32_1 = arith.constant 0 : i32
    return %c0_i32, %c0_i32_0 : i32, i32
  }
  func.func @transform_6(%arg0: i32) -> (i32, i32) {
    %c0_i32 = arith.constant 0 : i32
    %c0_i32_0 = arith.constant 0 : i32
    %c0_i32_1 = arith.constant 0 : i32
    return %c0_i32, %c0_i32_0 : i32, i32
  }
  func.func @transform_7(%arg0: i32) -> (i32, i32) {
    %c0_i32 = arith.constant 0 : i32
    %c0_i32_0 = arith.constant 0 : i32
    %c0_i32_1 = arith.constant 0 : i32
    return %c0_i32, %c0_i32_0 : i32, i32
  }
  func.func @transform_8(%arg0: i32) -> (i32, i32) {
    %c0_i32 = arith.constant 0 : i32
    %c0_i32_0 = arith.constant 0 : i32
    %c0_i32_1 = arith.constant 0 : i32
    return %c0_i32, %c0_i32_0 : i32, i32
  }
  func.func @transform_9(%arg0: i32) -> (i32, i32, i32) {
    %c0_i32 = arith.constant 0 : i32
    %c0_i32_0 = arith.constant 0 : i32
    %c0_i32_1 = arith.constant 0 : i32
    %c0_i32_2 = arith.constant 0 : i32
    return %c0_i32, %c0_i32_0, %c0_i32_1 : i32, i32, i32
  }
  func.func @transform_10(%arg0: i32) -> (i32, i32, i32) {
    %c0_i32 = arith.constant 0 : i32
    %c0_i32_0 = arith.constant 0 : i32
    %c0_i32_1 = arith.constant 0 : i32
    %c0_i32_2 = arith.constant 0 : i32
    return %c0_i32, %c0_i32_0, %c0_i32_1 : i32, i32, i32
  }
  func.func @transform_11(%arg0: i32) -> (i32, i32, i32) {
    %c0_i32 = arith.constant 0 : i32
    %c0_i32_0 = arith.constant 0 : i32
    %c0_i32_1 = arith.constant 0 : i32
    %c0_i32_2 = arith.constant 0 : i32
    return %c0_i32, %c0_i32_0, %c0_i32_1 : i32, i32, i32
  }
  func.func @transform_12(%arg0: i32) -> (i32, i32, i32) {
    %c0_i32 = arith.constant 0 : i32
    %c0_i32_0 = arith.constant 0 : i32
    %c0_i32_1 = arith.constant 0 : i32
    %c0_i32_2 = arith.constant 0 : i32
    return %c0_i32, %c0_i32_0, %c0_i32_1 : i32, i32, i32
  }
  func.func @transform_13(%arg0: i32) -> (i32, i32, i32) {
    %c0_i32 = arith.constant 0 : i32
    %c0_i32_0 = arith.constant 0 : i32
    %c0_i32_1 = arith.constant 0 : i32
    %c0_i32_2 = arith.constant 0 : i32
    return %c0_i32, %c0_i32_0, %c0_i32_1 : i32, i32, i32
  }
  func.func @transform_14(%arg0: i32) -> (i32, i32, i32) {
    %c0_i32 = arith.constant 0 : i32
    %c0_i32_0 = arith.constant 0 : i32
    %c0_i32_1 = arith.constant 0 : i32
    %c0_i32_2 = arith.constant 0 : i32
    return %c0_i32, %c0_i32_0, %c0_i32_1 : i32, i32, i32
  }
  func.func @transform_15(%arg0: i32) -> (i32, i32, i32) {
    %c0_i32 = arith.constant 0 : i32
    %c0_i32_0 = arith.constant 0 : i32
    %c0_i32_1 = arith.constant 0 : i32
    %c0_i32_2 = arith.constant 0 : i32
    return %c0_i32, %c0_i32_0, %c0_i32_1 : i32, i32, i32
  }
  func.func @transform_16(%arg0: i32) -> (i32, i32, i32) {
    %c0_i32 = arith.constant 0 : i32
    %c0_i32_0 = arith.constant 0 : i32
    %c0_i32_1 = arith.constant 0 : i32
    %c0_i32_2 = arith.constant 0 : i32
    return %c0_i32, %c0_i32_0, %c0_i32_1 : i32, i32, i32
  }
  func.func @transform_17(%arg0: i32) -> (i32, i32) {
    %c0_i32 = arith.constant 0 : i32
    %c0_i32_0 = arith.constant 0 : i32
    %c0_i32_1 = arith.constant 0 : i32
    return %c0_i32, %c0_i32_0 : i32, i32
  }
  func.func @transform_18(%arg0: i32) -> (i32, i32) {
    %c0_i32 = arith.constant 0 : i32
    %c0_i32_0 = arith.constant 0 : i32
    %c0_i32_1 = arith.constant 0 : i32
    return %c0_i32, %c0_i32_0 : i32, i32
  }
  func.func @transform_19(%arg0: i32) -> (i32, i32) {
    %c0_i32 = arith.constant 0 : i32
    %c0_i32_0 = arith.constant 0 : i32
    %c0_i32_1 = arith.constant 0 : i32
    return %c0_i32, %c0_i32_0 : i32, i32
  }
  func.func @transform_20(%arg0: i32) -> (i32, i32, i32) {
    %c0_i32 = arith.constant 0 : i32
    %c0_i32_0 = arith.constant 0 : i32
    %c0_i32_1 = arith.constant 0 : i32
    return %arg0, %c0_i32, %c0_i32_0 : i32, i32, i32
  }
}

</mosaic_0001>

<llo_original>
// kernel: forward.1
$region0: #{forward.1}
  #allocation0 [shape = 'u32[]', space=smem, size = 0x4, offset = 0x4, fixed_abs, tag = 'smem constant byte address 0x4 - core index']
  #allocation1 [shape = 'u32[144,128]{1,0:T(1,128)}', space=vmem, size = 0x12000, scoped, tag = 'internal scratch']
  %s0 = inlined_call_operand.vmem [shape: f32[2,8,64], index: 0, kind: input, shape index: {}]
  %s1 = inlined_call_operand.vmem [shape: f32[2,1,8], index: 1, kind: input, shape index: {}]
  %s2 = inlined_call_operand.vmem [shape: f32[2,1,128], index: 2, kind: input, shape index: {}]
  %s3 = inlined_call_operand.vmem [shape: f32[8,64], index: 3, kind: input, shape index: {}]
  %s4 = inlined_call_operand.vmem [shape: f32[8,64], index: 4, kind: input, shape index: {}]
  %s5 = inlined_call_operand.vmem [shape: f32[64,64], index: 5, kind: input, shape index: {}]
  %s6 = inlined_call_operand.vmem [shape: f32[64,64], index: 6, kind: input, shape index: {}]
  %s7 = inlined_call_operand.vmem [shape: f32[32,64], index: 7, kind: input, shape index: {}]
  %s8 = inlined_call_operand.vmem [shape: f32[32,32], index: 8, kind: input, shape index: {}]
  %s9 = inlined_call_operand.vmem [shape: f32[2,1,64], index: 9, kind: input, shape index: {}]
  %s10 = inlined_call_operand.vmem [shape: bf16[2,64,192], index: 10, kind: input, shape index: {}]
  %s11 = inlined_call_operand.vmem [shape: f32[2,1,64], index: 11, kind: input, shape index: {}]
  %s12 = inlined_call_operand.vmem [shape: f32[2,1,64], index: 12, kind: input, shape index: {}]
  %s13 = inlined_call_operand.vmem [shape: bf16[2,64,64], index: 13, kind: input, shape index: {}]
  %s14 = inlined_call_operand.vmem [shape: f32[2,1,64], index: 14, kind: input, shape index: {}]
  %s15 = inlined_call_operand.vmem [shape: bf16[2,64,256], index: 15, kind: input, shape index: {}]
  %s16 = inlined_call_operand.vmem [shape: bf16[2,128,64], index: 16, kind: input, shape index: {}]
  %s17 = inlined_call_operand.vmem [shape: f32[1,64], index: 17, kind: input, shape index: {}]
  %s18 = inlined_call_operand.vmem [shape: f32[64,128], index: 18, kind: input, shape index: {}]
  %s19 = inlined_call_operand.vmem [shape: f32[1,128], index: 19, kind: input, shape index: {}]
  %s20 = inlined_call_operand.vmem [shape: f32[2,8,128], index: 20, kind: output, shape index: {}]
  %s21 = sld [smem:[#allocation0]]
  $region113: #{forward.1} parent=0
    _
  %s23 = ssub.s32 1, %s21
  %s24 = scalar_select 0, %s23, %s21
  loop: start=0, step=1, limit=4
  $region2: #{forward.1} parent=0 // loop_pre_header
    _
  $region3: #{forward.1} parent=0 // loop_header
    %s26 = sphi 0, %s30
    %p27 = scmp.ge.s32.totalorder %s26, 4
    %s36 = sphi 0, %s38
    %s39 = sphi 0, %s36
    %s40 = sphi 0, %s39
    %s56 = sphi 0, %s40
    %s62 = sphi 0, %s64
    %s65 = sphi 0, %s62
    %s66 = sphi 0, %s65
    %s82 = sphi 0, %s66
    %s88 = sphi 0, %s90
    %s91 = sphi 0, %s88
    %s92 = sphi 0, %s91
    %s108 = sphi 0, %s92
    %s112 = sphi 0, %s112
    %s114 = sphi 0, %s112
    %s115 = sphi 0, %s114
    %s129 = sphi 0, %s115
    %s133 = sphi 0, %s133
    %s135 = sphi 0, %s133
    %s136 = sphi 0, %s135
    %s150 = sphi 0, %s136
    %s154 = sphi 0, %s154
    %s156 = sphi 0, %s154
    %s157 = sphi 0, %s156
    %s171 = sphi 0, %s157
    %s175 = sphi 0, %s175
    %s177 = sphi 0, %s175
    %s178 = sphi 0, %s177
    %s192 = sphi 0, %s178
    %s196 = sphi 0, %s196
    %s198 = sphi 0, %s196
    %s199 = sphi 0, %s198
    %s213 = sphi 0, %s199
    %s217 = sphi 0, %s217
    %s219 = sphi 0, %s217
    %s220 = sphi 0, %s219
    %s234 = sphi 0, %s220
    %s238 = sphi 0, %s238
    %s240 = sphi 0, %s238
    %s241 = sphi 0, %s240
    %s255 = sphi 0, %s241
    %s259 = sphi 0, %s259
    %s261 = sphi 0, %s259
    %s262 = sphi 0, %s261
    %s276 = sphi 0, %s262
    %s280 = sphi 0, %s280
    %s282 = sphi 0, %s280
    %s283 = sphi 0, %s282
    %s297 = sphi 0, %s283
    %s301 = sphi 0, %s301
    %s303 = sphi 0, %s301
    %s304 = sphi 0, %s303
    %s318 = sphi 0, %s304
    %s322 = sphi 0, %s322
    %s324 = sphi 0, %s322
    %s325 = sphi 0, %s324
    %s339 = sphi 0, %s325
    %s343 = sphi 0, %s343
    %s345 = sphi 0, %s343
    %s346 = sphi 0, %s345
    %s360 = sphi 0, %s346
    %s364 = sphi 0, %s364
    %s366 = sphi 0, %s364
    %s367 = sphi 0, %s366
    %s381 = sphi 0, %s367
    %s385 = sphi 0, %s385
    %s387 = sphi 0, %s385
    %s388 = sphi 0, %s387
    %s402 = sphi 0, %s388
    %s406 = sphi 0, %s406
    %s408 = sphi 0, %s406
    %s409 = sphi 0, %s408
    %s423 = sphi 0, %s409
    %s427 = sphi 0, %s427
    %s429 = sphi 0, %s427
    %s430 = sphi 0, %s429
    %s444 = sphi 0, %s430
    %s448 = sphi 0, %s448
    %s450 = sphi 0, %s448
    %s451 = sphi 0, %s450
    %s465 = sphi 0, %s451
    %s471 = sphi 0, %s473
    %s474 = sphi 0, %s471
    %s475 = sphi 0, %s474
    %s491 = sphi 0, %s475
  $region4: #{forward.1} parent=0 // loop_header_branch
    %29 = sbr.rel (%p27) target = $region8
  $region5: #{forward.1} parent=0 // loop_body
    %s31 = ssub.s32 %s26, 1
    %s32 = ssub.s32 %s26, 2
    %s33 = sadd.s32 %s26, 1
    %s34 = ssub.s32 %s26, %s33
    %p35 = scmp.eq.s32.totalorder %s34, 0
    %s37 = sadd.s32 %s36, 1
    %s38 = scalar_select %p35, %s36, %s37
    %p41 = pneg %p35
    %p42 = scmp.eq.s32.totalorder %s26, 1
    %p43 = por %p41, %p42
    %p44 = scmp.ne.s32.totalorder %s36, %s39
    %p45 = scmp.eq.s32.totalorder %s26, 0
    %p46 = por %p44, %p45
    %p47 = scmp.ne.s32.totalorder %s36, %s39
    %p48 = scmp.eq.s32.totalorder %s31, 1
    %p49 = por %p47, %p48
    %p50 = scmp.ne.s32.totalorder %s39, %s40
    %p51 = scmp.eq.s32.totalorder %s31, 0
    %p52 = por %p50, %p51
    %p53 = scmp.ne.s32.totalorder %s39, %s40
    %p54 = scmp.eq.s32.totalorder %s32, 1
    %p55 = por %p53, %p54
    %p57 = scmp.ne.s32.totalorder %s40, %s56
    %p58 = scmp.eq.s32.totalorder %s32, 0
    %p59 = por %p57, %p58
    %s60 = ssub.s32 %s26, %s33
    %p61 = scmp.eq.s32.totalorder %s60, 0
    %s63 = sadd.s32 %s62, 1
    %s64 = scalar_select %p61, %s62, %s63
    %p67 = pneg %p61
    %p68 = scmp.eq.s32.totalorder %s26, 1
    %p69 = por %p67, %p68
    %p70 = scmp.ne.s32.totalorder %s62, %s65
    %p71 = scmp.eq.s32.totalorder %s26, 0
    %p72 = por %p70, %p71
    %p73 = scmp.ne.s32.totalorder %s62, %s65
    %p74 = scmp.eq.s32.totalorder %s31, 1
    %p75 = por %p73, %p74
    %p76 = scmp.ne.s32.totalorder %s65, %s66
    %p77 = scmp.eq.s32.totalorder %s31, 0
    %p78 = por %p76, %p77
    %p79 = scmp.ne.s32.totalorder %s65, %s66
    %p80 = scmp.eq.s32.totalorder %s32, 1
    %p81 = por %p79, %p80
    %p83 = scmp.ne.s32.totalorder %s66, %s82
    %p84 = scmp.eq.s32.totalorder %s32, 0
    %p85 = por %p83, %p84
    %s86 = ssub.s32 %s26, %s33
    %p87 = scmp.eq.s32.totalorder %s86, 0
    %s89 = sadd.s32 %s88, 1
    %s90 = scalar_select %p87, %s88, %s89
    %p93 = pneg %p87
    %p94 = scmp.eq.s32.totalorder %s26, 1
    %p95 = por %p93, %p94
    %p96 = scmp.ne.s32.totalorder %s88, %s91
    %p97 = scmp.eq.s32.totalorder %s26, 0
    %p98 = por %p96, %p97
    %p99 = scmp.ne.s32.totalorder %s88, %s91
    %p100 = scmp.eq.s32.totalorder %s31, 1
    %p101 = por %p99, %p100
    %p102 = scmp.ne.s32.totalorder %s91, %s92
    %p103 = scmp.eq.s32.totalorder %s31, 0
    %p104 = por %p102, %p103
    %p105 = scmp.ne.s32.totalorder %s91, %s92
    %p106 = scmp.eq.s32.totalorder %s32, 1
    %p107 = por %p105, %p106
    %p109 = scmp.ne.s32.totalorder %s92, %s108
    %p110 = scmp.eq.s32.totalorder %s32, 0
    %p111 = por %p109, %p110
    %s113 = sadd.s32 %s112, 1
    %p116 = scmp.eq.s32.totalorder %s26, 1
    %p117 = scmp.ne.s32.totalorder %s112, %s114
    %p118 = scmp.eq.s32.totalorder %s26, 0
    %p119 = por %p117, %p118
    %p120 = scmp.ne.s32.totalorder %s112, %s114
    %p121 = scmp.eq.s32.totalorder %s31, 1
    %p122 = por %p120, %p121
    %p123 = scmp.ne.s32.totalorder %s114, %s115
    %p124 = scmp.eq.s32.totalorder %s31, 0
    %p125 = por %p123, %p124
    %p126 = scmp.ne.s32.totalorder %s114, %s115
    %p127 = scmp.eq.s32.totalorder %s32, 1
    %p128 = por %p126, %p127
    %p130 = scmp.ne.s32.totalorder %s115, %s129
    %p131 = scmp.eq.s32.totalorder %s32, 0
    %p132 = por %p130, %p131
    %s134 = sadd.s32 %s133, 1
    %p137 = scmp.eq.s32.totalorder %s26, 1
    %p138 = scmp.ne.s32.totalorder %s133, %s135
    %p139 = scmp.eq.s32.totalorder %s26, 0
    %p140 = por %p138, %p139
    %p141 = scmp.ne.s32.totalorder %s133, %s135
    %p142 = scmp.eq.s32.totalorder %s31, 1
    %p143 = por %p141, %p142
    %p144 = scmp.ne.s32.totalorder %s135, %s136
    %p145 = scmp.eq.s32.totalorder %s31, 0
    %p146 = por %p144, %p145
    %p147 = scmp.ne.s32.totalorder %s135, %s136
    %p148 = scmp.eq.s32.totalorder %s32, 1
    %p149 = por %p147, %p148
    %p151 = scmp.ne.s32.totalorder %s136, %s150
    %p152 = scmp.eq.s32.totalorder %s32, 0
    %p153 = por %p151, %p152
    %s155 = sadd.s32 %s154, 1
    %p158 = scmp.eq.s32.totalorder %s26, 1
    %p159 = scmp.ne.s32.totalorder %s154, %s156
    %p160 = scmp.eq.s32.totalorder %s26, 0
    %p161 = por %p159, %p160
    %p162 = scmp.ne.s32.totalorder %s154, %s156
    %p163 = scmp.eq.s32.totalorder %s31, 1
    %p164 = por %p162, %p163
    %p165 = scmp.ne.s32.totalorder %s156, %s157
    %p166 = scmp.eq.s32.totalorder %s31, 0
    %p167 = por %p165, %p166
    %p168 = scmp.ne.s32.totalorder %s156, %s157
    %p169 = scmp.eq.s32.totalorder %s32, 1
    %p170 = por %p168, %p169
    %p172 = scmp.ne.s32.totalorder %s157, %s171
    %p173 = scmp.eq.s32.totalorder %s32, 0
    %p174 = por %p172, %p173
    %s176 = sadd.s32 %s175, 1
    %p179 = scmp.eq.s32.totalorder %s26, 1
    %p180 = scmp.ne.s32.totalorder %s175, %s177
    %p181 = scmp.eq.s32.totalorder %s26, 0
    %p182 = por %p180, %p181
    %p183 = scmp.ne.s32.totalorder %s175, %s177
    %p184 = scmp.eq.s32.totalorder %s31, 1
    %p185 = por %p183, %p184
    %p186 = scmp.ne.s32.totalorder %s177, %s178
    %p187 = scmp.eq.s32.totalorder %s31, 0
    %p188 = por %p186, %p187
    %p189 = scmp.ne.s32.totalorder %s177, %s178
    %p190 = scmp.eq.s32.totalorder %s32, 1
    %p191 = por %p189, %p190
    %p193 = scmp.ne.s32.totalorder %s178, %s192
    %p194 = scmp.eq.s32.totalorder %s32, 0
    %p195 = por %p193, %p194
    %s197 = sadd.s32 %s196, 1
    %p200 = scmp.eq.s32.totalorder %s26, 1
    %p201 = scmp.ne.s32.totalorder %s196, %s198
    %p202 = scmp.eq.s32.totalorder %s26, 0
    %p203 = por %p201, %p202
    %p204 = scmp.ne.s32.totalorder %s196, %s198
    %p205 = scmp.eq.s32.totalorder %s31, 1
    %p206 = por %p204, %p205
    %p207 = scmp.ne.s32.totalorder %s198, %s199
    %p208 = scmp.eq.s32.totalorder %s31, 0
    %p209 = por %p207, %p208
    %p210 = scmp.ne.s32.totalorder %s198, %s199
    %p211 = scmp.eq.s32.totalorder %s32, 1
    %p212 = por %p210, %p211
    %p214 = scmp.ne.s32.totalorder %s199, %s213
    %p215 = scmp.eq.s32.totalorder %s32, 0
    %p216 = por %p214, %p215
    %s218 = sadd.s32 %s217, 1
    %p221 = scmp.eq.s32.totalorder %s26, 1
    %p222 = scmp.ne.s32.totalorder %s217, %s219
    %p223 = scmp.eq.s32.totalorder %s26, 0
    %p224 = por %p222, %p223
    %p225 = scmp.ne.s32.totalorder %s217, %s219
    %p226 = scmp.eq.s32.totalorder %s31, 1
    %p227 = por %p225, %p226
    %p228 = scmp.ne.s32.totalorder %s219, %s220
    %p229 = scmp.eq.s32.totalorder %s31, 0
    %p230 = por %p228, %p229
    %p231 = scmp.ne.s32.totalorder %s219, %s220
    %p232 = scmp.eq.s32.totalorder %s32, 1
    %p233 = por %p231, %p232
    %p235 = scmp.ne.s32.totalorder %s220, %s234
    %p236 = scmp.eq.s32.totalorder %s32, 0
    %p237 = por %p235, %p236
    %s239 = sadd.s32 %s238, 1
    %p242 = scmp.eq.s32.totalorder %s26, 1
    %p243 = scmp.ne.s32.totalorder %s238, %s240
    %p244 = scmp.eq.s32.totalorder %s26, 0
    %p245 = por %p243, %p244
    %p246 = scmp.ne.s32.totalorder %s238, %s240
    %p247 = scmp.eq.s32.totalorder %s31, 1
    %p248 = por %p246, %p247
    %p249 = scmp.ne.s32.totalorder %s240, %s241
    %p250 = scmp.eq.s32.totalorder %s31, 0
    %p251 = por %p249, %p250
    %p252 = scmp.ne.s32.totalorder %s240, %s241
    %p253 = scmp.eq.s32.totalorder %s32, 1
    %p254 = por %p252, %p253
    %p256 = scmp.ne.s32.totalorder %s241, %s255
    %p257 = scmp.eq.s32.totalorder %s32, 0
    %p258 = por %p256, %p257
    %s260 = sadd.s32 %s259, 1
    %p263 = scmp.eq.s32.totalorder %s26, 1
    %p264 = scmp.ne.s32.totalorder %s259, %s261
    %p265 = scmp.eq.s32.totalorder %s26, 0
    %p266 = por %p264, %p265
    %p267 = scmp.ne.s32.totalorder %s259, %s261
    %p268 = scmp.eq.s32.totalorder %s31, 1
    %p269 = por %p267, %p268
    %p270 = scmp.ne.s32.totalorder %s261, %s262
    %p271 = scmp.eq.s32.totalorder %s31, 0
    %p272 = por %p270, %p271
    %p273 = scmp.ne.s32.totalorder %s261, %s262
    %p274 = scmp.eq.s32.totalorder %s32, 1
    %p275 = por %p273, %p274
    %p277 = scmp.ne.s32.totalorder %s262, %s276
    %p278 = scmp.eq.s32.totalorder %s32, 0
    %p279 = por %p277, %p278
    %s281 = sadd.s32 %s280, 1
    %p284 = scmp.eq.s32.totalorder %s26, 1
    %p285 = scmp.ne.s32.totalorder %s280, %s282
    %p286 = scmp.eq.s32.totalorder %s26, 0
    %p287 = por %p285, %p286
    %p288 = scmp.ne.s32.totalorder %s280, %s282
    %p289 = scmp.eq.s32.totalorder %s31, 1
    %p290 = por %p288, %p289
    %p291 = scmp.ne.s32.totalorder %s282, %s283
    %p292 = scmp.eq.s32.totalorder %s31, 0
    %p293 = por %p291, %p292
    %p294 = scmp.ne.s32.totalorder %s282, %s283
    %p295 = scmp.eq.s32.totalorder %s32, 1
    %p296 = por %p294, %p295
    %p298 = scmp.ne.s32.totalorder %s283, %s297
    %p299 = scmp.eq.s32.totalorder %s32, 0
    %p300 = por %p298, %p299
    %s302 = sadd.s32 %s301, 1
    %p305 = scmp.eq.s32.totalorder %s26, 1
    %p306 = scmp.ne.s32.totalorder %s301, %s303
    %p307 = scmp.eq.s32.totalorder %s26, 0
    %p308 = por %p306, %p307
    %p309 = scmp.ne.s32.totalorder %s301, %s303
    %p310 = scmp.eq.s32.totalorder %s31, 1
    %p311 = por %p309, %p310
    %p312 = scmp.ne.s32.totalorder %s303, %s304
    %p313 = scmp.eq.s32.totalorder %s31, 0
    %p314 = por %p312, %p313
    %p315 = scmp.ne.s32.totalorder %s303, %s304
    %p316 = scmp.eq.s32.totalorder %s32, 1
    %p317 = por %p315, %p316
    %p319 = scmp.ne.s32.totalorder %s304, %s318
    %p320 = scmp.eq.s32.totalorder %s32, 0
    %p321 = por %p319, %p320
    %s323 = sadd.s32 %s322, 1
    %p326 = scmp.eq.s32.totalorder %s26, 1
    %p327 = scmp.ne.s32.totalorder %s322, %s324
    %p328 = scmp.eq.s32.totalorder %s26, 0
    %p329 = por %p327, %p328
    %p330 = scmp.ne.s32.totalorder %s322, %s324
    %p331 = scmp.eq.s32.totalorder %s31, 1
    %p332 = por %p330, %p331
    %p333 = scmp.ne.s32.totalorder %s324, %s325
    %p334 = scmp.eq.s32.totalorder %s31, 0
    %p335 = por %p333, %p334
    %p336 = scmp.ne.s32.totalorder %s324, %s325
    %p337 = scmp.eq.s32.totalorder %s32, 1
    %p338 = por %p336, %p337
    %p340 = scmp.ne.s32.totalorder %s325, %s339
    %p341 = scmp.eq.s32.totalorder %s32, 0
    %p342 = por %p340, %p341
    %s344 = sadd.s32 %s343, 1
    %p347 = scmp.eq.s32.totalorder %s26, 1
    %p348 = scmp.ne.s32.totalorder %s343, %s345
    %p349 = scmp.eq.s32.totalorder %s26, 0
    %p350 = por %p348, %p349
    %p351 = scmp.ne.s32.totalorder %s343, %s345
    %p352 = scmp.eq.s32.totalorder %s31, 1
    %p353 = por %p351, %p352
    %p354 = scmp.ne.s32.totalorder %s345, %s346
    %p355 = scmp.eq.s32.totalorder %s31, 0
    %p356 = por %p354, %p355
    %p357 = scmp.ne.s32.totalorder %s345, %s346
    %p358 = scmp.eq.s32.totalorder %s32, 1
    %p359 = por %p357, %p358
    %p361 = scmp.ne.s32.totalorder %s346, %s360
    %p362 = scmp.eq.s32.totalorder %s32, 0
    %p363 = por %p361, %p362
    %s365 = sadd.s32 %s364, 1
    %p368 = scmp.eq.s32.totalorder %s26, 1
    %p369 = scmp.ne.s32.totalorder %s364, %s366
    %p370 = scmp.eq.s32.totalorder %s26, 0
    %p371 = por %p369, %p370
    %p372 = scmp.ne.s32.totalorder %s364, %s366
    %p373 = scmp.eq.s32.totalorder %s31, 1
    %p374 = por %p372, %p373
    %p375 = scmp.ne.s32.totalorder %s366, %s367
    %p376 = scmp.eq.s32.totalorder %s31, 0
    %p377 = por %p375, %p376
    %p378 = scmp.ne.s32.totalorder %s366, %s367
    %p379 = scmp.eq.s32.totalorder %s32, 1
    %p380 = por %p378, %p379
    %p382 = scmp.ne.s32.totalorder %s367, %s381
    %p383 = scmp.eq.s32.totalorder %s32, 0
    %p384 = por %p382, %p383
    %s386 = sadd.s32 %s385, 1
    %p389 = scmp.eq.s32.totalorder %s26, 1
    %p390 = scmp.ne.s32.totalorder %s385, %s387
    %p391 = scmp.eq.s32.totalorder %s26, 0
    %p392 = por %p390, %p391
    %p393 = scmp.ne.s32.totalorder %s385, %s387
    %p394 = scmp.eq.s32.totalorder %s31, 1
    %p395 = por %p393, %p394
    %p396 = scmp.ne.s32.totalorder %s387, %s388
    %p397 = scmp.eq.s32.totalorder %s31, 0
    %p398 = por %p396, %p397
    %p399 = scmp.ne.s32.totalorder %s387, %s388
    %p400 = scmp.eq.s32.totalorder %s32, 1
    %p401 = por %p399, %p400
    %p403 = scmp.ne.s32.totalorder %s388, %s402
    %p404 = scmp.eq.s32.totalorder %s32, 0
    %p405 = por %p403, %p404
    %s407 = sadd.s32 %s406, 1
    %p410 = scmp.eq.s32.totalorder %s26, 1
    %p411 = scmp.ne.s32.totalorder %s406, %s408
    %p412 = scmp.eq.s32.totalorder %s26, 0
    %p413 = por %p411, %p412
    %p414 = scmp.ne.s32.totalorder %s406, %s408
    %p415 = scmp.eq.s32.totalorder %s31, 1
    %p416 = por %p414, %p415
    %p417 = scmp.ne.s32.totalorder %s408, %s409
    %p418 = scmp.eq.s32.totalorder %s31, 0
    %p419 = por %p417, %p418
    %p420 = scmp.ne.s32.totalorder %s408, %s409
    %p421 = scmp.eq.s32.totalorder %s32, 1
    %p422 = por %p420, %p421
    %p424 = scmp.ne.s32.totalorder %s409, %s423
    %p425 = scmp.eq.s32.totalorder %s32, 0
    %p426 = por %p424, %p425
    %s428 = sadd.s32 %s427, 1
    %p431 = scmp.eq.s32.totalorder %s26, 1
    %p432 = scmp.ne.s32.totalorder %s427, %s429
    %p433 = scmp.eq.s32.totalorder %s26, 0
    %p434 = por %p432, %p433
    %p435 = scmp.ne.s32.totalorder %s427, %s429
    %p436 = scmp.eq.s32.totalorder %s31, 1
    %p437 = por %p435, %p436
    %p438 = scmp.ne.s32.totalorder %s429, %s430
    %p439 = scmp.eq.s32.totalorder %s31, 0
    %p440 = por %p438, %p439
    %p441 = scmp.ne.s32.totalorder %s429, %s430
    %p442 = scmp.eq.s32.totalorder %s32, 1
    %p443 = por %p441, %p442
    %p445 = scmp.ne.s32.totalorder %s430, %s444
    %p446 = scmp.eq.s32.totalorder %s32, 0
    %p447 = por %p445, %p446
    %s449 = sadd.s32 %s448, 1
    %p452 = scmp.eq.s32.totalorder %s26, 1
    %p453 = scmp.ne.s32.totalorder %s448, %s450
    %p454 = scmp.eq.s32.totalorder %s26, 0
    %p455 = por %p453, %p454
    %p456 = scmp.ne.s32.totalorder %s448, %s450
    %p457 = scmp.eq.s32.totalorder %s31, 1
    %p458 = por %p456, %p457
    %p459 = scmp.ne.s32.totalorder %s450, %s451
    %p460 = scmp.eq.s32.totalorder %s31, 0
    %p461 = por %p459, %p460
    %p462 = scmp.ne.s32.totalorder %s450, %s451
    %p463 = scmp.eq.s32.totalorder %s32, 1
    %p464 = por %p462, %p463
    %p466 = scmp.ne.s32.totalorder %s451, %s465
    %p467 = scmp.eq.s32.totalorder %s32, 0
    %p468 = por %p466, %p467
    %s469 = ssub.s32 %s26, %s33
    %p470 = scmp.eq.s32.totalorder %s469, 0
    %s472 = sadd.s32 %s471, 1
    %s473 = scalar_select %p470, %s471, %s472
    %p476 = pneg %p470
    %p477 = scmp.eq.s32.totalorder %s26, 1
    %p478 = por %p476, %p477
    %p479 = scmp.ne.s32.totalorder %s471, %s474
    %p480 = scmp.eq.s32.totalorder %s26, 0
    %p481 = por %p479, %p480
    %p482 = scmp.ne.s32.totalorder %s471, %s474
    %p483 = scmp.eq.s32.totalorder %s31, 1
    %p484 = por %p482, %p483
    %p485 = scmp.ne.s32.totalorder %s474, %s475
    %p486 = scmp.eq.s32.totalorder %s31, 0
    %p487 = por %p485, %p486
    %p488 = scmp.ne.s32.totalorder %s474, %s475
    %p489 = scmp.eq.s32.totalorder %s32, 1
    %p490 = por %p488, %p489
    %p492 = scmp.ne.s32.totalorder %s475, %s491
    %p493 = scmp.eq.s32.totalorder %s32, 0
    %p494 = por %p492, %p493
    %p495 = scmp.le.s32.totalorder 1, %s26
    %p496 = scmp.lt.s32.totalorder %s26, 3
    %p497 = pnand %p495, %p496
    %p498 = pneg %p497
    // Predicated region
    $region9: #{forward.1} parent=5 // pred_check
      _
    $region10: #{forward.1} parent=5 // pred_check_branch
      %500 = sbr.rel (%p497) target = $region12
    $region11: #{forward.1} parent=5 // pred_region
      %s501 = ssub.s32 %s26, 1
      // Predicated region
      $region13: #{forward.1} parent=11 // pred_check
        %p502 = pneg %p125
      $region14: #{forward.1} parent=11 // pred_check_branch
        %504 = sbr.rel (%p502) target = $region16
      $region15: #{forward.1} parent=11 // pred_region
        _
      $region16: #{forward.1} parent=11 // pred_fallthru
        _
      // Predicated region
      $region17: #{forward.1} parent=11 // pred_check
        %p505 = pneg %p146
      $region18: #{forward.1} parent=11 // pred_check_branch
        %507 = sbr.rel (%p505) target = $region20
      $region19: #{forward.1} parent=11 // pred_region
        _
      $region20: #{forward.1} parent=11 // pred_fallthru
        _
      // Predicated region
      $region21: #{forward.1} parent=11 // pred_check
        %p508 = pneg %p167
      $region22: #{forward.1} parent=11 // pred_check_branch
        %510 = sbr.rel (%p508) target = $region24
      $region23: #{forward.1} parent=11 // pred_region
        _
      $region24: #{forward.1} parent=11 // pred_fallthru
        _
      // Predicated region
      $region25: #{forward.1} parent=11 // pred_check
        %p511 = pneg %p188
      $region26: #{forward.1} parent=11 // pred_check_branch
        %513 = sbr.rel (%p511) target = $region28
      $region27: #{forward.1} parent=11 // pred_region
        _
      $region28: #{forward.1} parent=11 // pred_fallthru
        _
      // Predicated region
      $region29: #{forward.1} parent=11 // pred_check
        %p514 = pneg %p209
      $region30: #{forward.1} parent=11 // pred_check_branch
        %516 = sbr.rel (%p514) target = $region32
      $region31: #{forward.1} parent=11 // pred_region
        _
      $region32: #{forward.1} parent=11 // pred_fallthru
        _
      // Predicated region
      $region33: #{forward.1} parent=11 // pred_check
        %p517 = pneg %p230
      $region34: #{forward.1} parent=11 // pred_check_branch
        %519 = sbr.rel (%p517) target = $region36
      $region35: #{forward.1} parent=11 // pred_region
        _
      $region36: #{forward.1} parent=11 // pred_fallthru
        _
      // Predicated region
      $region37: #{forward.1} parent=11 // pred_check
        %p520 = pneg %p251
      $region38: #{forward.1} parent=11 // pred_check_branch
        %522 = sbr.rel (%p520) target = $region40
      $region39: #{forward.1} parent=11 // pred_region
        _
      $region40: #{forward.1} parent=11 // pred_fallthru
        _
      // Predicated region
      $region41: #{forward.1} parent=11 // pred_check
        %p523 = pneg %p272
      $region42: #{forward.1} parent=11 // pred_check_branch
        %525 = sbr.rel (%p523) target = $region44
      $region43: #{forward.1} parent=11 // pred_region
        _
      $region44: #{forward.1} parent=11 // pred_fallthru
        _
      // Predicated region
      $region45: #{forward.1} parent=11 // pred_check
        %p526 = pneg %p293
      $region46: #{forward.1} parent=11 // pred_check_branch
        %528 = sbr.rel (%p526) target = $region48
      $region47: #{forward.1} parent=11 // pred_region
        _
      $region48: #{forward.1} parent=11 // pred_fallthru
        _
      // Predicated region
      $region49: #{forward.1} parent=11 // pred_check
        %p529 = pneg %p314
      $region50: #{forward.1} parent=11 // pred_check_branch
        %531 = sbr.rel (%p529) target = $region52
      $region51: #{forward.1} parent=11 // pred_region
        _
      $region52: #{forward.1} parent=11 // pred_fallthru
        _
      // Predicated region
      $region53: #{forward.1} parent=11 // pred_check
        %p532 = pneg %p335
      $region54: #{forward.1} parent=11 // pred_check_branch
        %534 = sbr.rel (%p532) target = $region56
      $region55: #{forward.1} parent=11 // pred_region
        _
      $region56: #{forward.1} parent=11 // pred_fallthru
        _
      // Predicated region
      $region57: #{forward.1} parent=11 // pred_check
        %p535 = pneg %p356
      $region58: #{forward.1} parent=11 // pred_check_branch
        %537 = sbr.rel (%p535) target = $region60
      $region59: #{forward.1} parent=11 // pred_region
        _
      $region60: #{forward.1} parent=11 // pred_fallthru
        _
      // Predicated region
      $region61: #{forward.1} parent=11 // pred_check
        %p538 = pneg %p377
      $region62: #{forward.1} parent=11 // pred_check_branch
        %540 = sbr.rel (%p538) target = $region64
      $region63: #{forward.1} parent=11 // pred_region
        _
      $region64: #{forward.1} parent=11 // pred_fallthru
        _
      // Predicated region
      $region65: #{forward.1} parent=11 // pred_check
        %p541 = pneg %p398
      $region66: #{forward.1} parent=11 // pred_check_branch
        %543 = sbr.rel (%p541) target = $region68
      $region67: #{forward.1} parent=11 // pred_region
        _
      $region68: #{forward.1} parent=11 // pred_fallthru
        _
      // Predicated region
      $region69: #{forward.1} parent=11 // pred_check
        %p544 = pneg %p419
      $region70: #{forward.1} parent=11 // pred_check_branch
        %546 = sbr.rel (%p544) target = $region72
      $region71: #{forward.1} parent=11 // pred_region
        _
      $region72: #{forward.1} parent=11 // pred_fallthru
        _
      // Predicated region
      $region73: #{forward.1} parent=11 // pred_check
        %p547 = pneg %p440
      $region74: #{forward.1} parent=11 // pred_check_branch
        %549 = sbr.rel (%p547) target = $region76
      $region75: #{forward.1} parent=11 // pred_region
        _
      $region76: #{forward.1} parent=11 // pred_fallthru
        _
      // Predicated region
      $region77: #{forward.1} parent=11 // pred_check
        %p550 = pneg %p461
      $region78: #{forward.1} parent=11 // pred_check_branch
        %552 = sbr.rel (%p550) target = $region80
      $region79: #{forward.1} parent=11 // pred_region
        _
      $region80: #{forward.1} parent=11 // pred_fallthru
        _
    $region12: #{forward.1} parent=5 // pred_fallthru
      _
    %p553 = scmp.lt.s32.totalorder %s26, 2
    // Predicated region
    $region81: #{forward.1} parent=5 // pred_check
      %p554 = pneg %p553
    $region82: #{forward.1} parent=5 // pred_check_branch
      %556 = sbr.rel (%p554) target = $region84
    $region83: #{forward.1} parent=5 // pred_region
      // Predicated region
      $region85: #{forward.1} parent=83 // pred_check
        %p557 = pneg %p46
      $region86: #{forward.1} parent=83 // pred_check_branch
        %559 = sbr.rel (%p557) target = $region88
      $region87: #{forward.1} parent=83 // pred_region
        %p560 = scmp.lt.s32.totalorder %s26, 1
        %s561 = scalar_select %p560, %s26, 1
        %s562 = smul.addr %s561, 8
        %s563 = scalar_lea.vmem %s0, %s562
      $region88: #{forward.1} parent=83 // pred_fallthru
        _
      // Predicated region
      $region89: #{forward.1} parent=83 // pred_check
        %p564 = pneg %p72
      $region90: #{forward.1} parent=83 // pred_check_branch
        %566 = sbr.rel (%p564) target = $region92
      $region91: #{forward.1} parent=83 // pred_region
        %p567 = scmp.lt.s32.totalorder %s26, 1
        %s568 = scalar_select %p567, %s26, 1
        %s569 = scalar_lea.vmem %s1, %s568
      $region92: #{forward.1} parent=83 // pred_fallthru
        _
      // Predicated region
      $region93: #{forward.1} parent=83 // pred_check
        %p570 = pneg %p98
      $region94: #{forward.1} parent=83 // pred_check_branch
        %572 = sbr.rel (%p570) target = $region96
      $region95: #{forward.1} parent=83 // pred_region
        %p573 = scmp.lt.s32.totalorder %s26, 1
        %s574 = scalar_select %p573, %s26, 1
        %s575 = scalar_lea.vmem %s2, %s574
      $region96: #{forward.1} parent=83 // pred_fallthru
        _
    $region84: #{forward.1} parent=5 // pred_fallthru
      _
    %p576 = scmp.le.s32.totalorder 1, %s26
    %p577 = scmp.lt.s32.totalorder %s26, 3
    %p578 = pnand %p576, %p577
    %p579 = pneg %p578
    // Predicated region
    $region97: #{forward.1} parent=5 // pred_check
      _
    $region98: #{forward.1} parent=5 // pred_check_branch
      %581 = sbr.rel (%p578) target = $region100
    $region99: #{forward.1} parent=5 // pred_region
      %s582 = ssub.s32 %s26, 1
      %p583 = scmp.lt.s32.totalorder %s31, 1
      %s584 = scalar_select %p583, %s31, 1
      %s585 = smul.addr %s584, 8
      %s586 = scalar_lea.vmem %s0, %s585
      %p587 = pneg %p52
      %p588 = pneg %p49
      %p589 = scmp.lt.s32.totalorder %s31, 1
      %s590 = scalar_select %p589, %s31, 1
      %s591 = scalar_lea.vmem %s1, %s590
      %p592 = pneg %p78
      %p593 = pneg %p75
      %p594 = scmp.lt.s32.totalorder %s31, 1
      %s595 = scalar_select %p594, %s31, 1
      %s596 = scalar_lea.vmem %s2, %s595
      %p597 = pneg %p104
      %p598 = pneg %p101
      %p599 = pneg %p125
      %p600 = pneg %p122
      %p601 = pneg %p146
      %p602 = pneg %p143
      %p603 = pneg %p167
      %p604 = pneg %p164
      %p605 = pneg %p188
      %p606 = pneg %p185
      %p607 = pneg %p209
      %p608 = pneg %p206
      %p609 = pneg %p230
      %p610 = pneg %p227
      %p611 = pneg %p251
      %p612 = pneg %p248
      %p613 = pneg %p272
      %p614 = pneg %p269
      %p615 = pneg %p293
      %p616 = pneg %p290
      %p617 = pneg %p314
      %p618 = pneg %p311
      %p619 = pneg %p335
      %p620 = pneg %p332
      %p621 = pneg %p356
      %p622 = pneg %p353
      %p623 = pneg %p377
      %p624 = pneg %p374
      %p625 = pneg %p398
      %p626 = pneg %p395
      %p627 = pneg %p419
      %p628 = pneg %p416
      %p629 = pneg %p440
      %p630 = pneg %p437
      %p631 = pneg %p461
      %p632 = pneg %p458
      %p633 = pneg %p487
      %p634 = pneg %p484
      %p635 = scmp.lt.s32.totalorder %s31, 1
      %s636 = scalar_select %p635, %s31, 1
      %s637 = smul.addr %s636, 8
      %s638 = scalar_lea.vmem %s20, %s637
      %p639 = scmp.lt.s32.totalorder %s31, 1
      %s640 = scalar_select %p639, %s31, 1
      %s641 = smul.addr %s640, 8
      %s642 = scalar_lea.vmem %s0, %s641
      %p643 = scmp.lt.s32.totalorder %s31, 1
      %s644 = scalar_select %p643, %s31, 1
      %s645 = scalar_lea.vmem %s1, %s644
      %p646 = scmp.lt.s32.totalorder %s31, 1
      %s647 = scalar_select %p646, %s31, 1
      %s648 = scalar_lea.vmem %s2, %s647
      %p649 = scmp.lt.s32.totalorder %s31, 1
      %s650 = scalar_select %p649, %s31, 1
      %s651 = smul.addr %s650, 8
      %s652 = scalar_lea.vmem %s20, %s651
      %v654 = vld [vmem:[%s3] sm:$0xff]
      %v655 = vld [vmem:[%s4] sm:$0xff]
      %v656 = vld [vmem:[%s5] sm:$0xff]
      %v657 = vld [vmem:[%s5 + $0x8] sm:$0xff]
      %v658 = vld [vmem:[%s5 + $0x10] sm:$0xff]
      %v659 = vld [vmem:[%s5 + $0x18] sm:$0xff]
      %v660 = vld [vmem:[%s5 + $0x20] sm:$0xff]
      %v661 = vld [vmem:[%s5 + $0x28] sm:$0xff]
      %v662 = vld [vmem:[%s5 + $0x30] sm:$0xff]
      %v663 = vld [vmem:[%s5 + $0x38] sm:$0xff]
      %v664 = vld [vmem:[%s6] sm:$0xff]
      %v665 = vld [vmem:[%s6 + $0x8] sm:$0xff]
      %v666 = vld [vmem:[%s6 + $0x10] sm:$0xff]
      %v667 = vld [vmem:[%s6 + $0x18] sm:$0xff]
      %v668 = vld [vmem:[%s6 + $0x20] sm:$0xff]
      %v669 = vld [vmem:[%s6 + $0x28] sm:$0xff]
      %v670 = vld [vmem:[%s6 + $0x30] sm:$0xff]
      %v671 = vld [vmem:[%s6 + $0x38] sm:$0xff]
      %v672 = vld [vmem:[%s7] sm:$0xff]
      %v673 = vld [vmem:[%s7 + $0x8] sm:$0xff]
      %v674 = vld [vmem:[%s7 + $0x10] sm:$0xff]
      %v675 = vld [vmem:[%s7 + $0x18] sm:$0xff]
      %v676 = vld [vmem:[%s8] sm:$0xff]
      %v677 = vld [vmem:[%s8 + $0x8] sm:$0xff]
      %v678 = vld [vmem:[%s8 + $0x10] sm:$0xff]
      %v679 = vld [vmem:[%s8 + $0x18] sm:$0xff]
      %v680 = vld [vmem:[%s645] sm:$0x1]
      %v681 = vlaneseq
      %v682 = vshrl.u32 %v681, 7
      %v683 = vlaneseq
      %v684 = vand.u32 %v683, 127
      %vm685 = vcmp.ge.s32.totalorder %v682, %v684
      %v686 = vsel %vm685, 1, 0
      %v687 = vcvt.s32.f32 %v686
      %v689 = vlaneseq
      %v690 = vshrl.u32 %v689, 7
      %v691 = vsub.s32 0, %v690
      %v692 = vrot.slane %v680, %v691
      %v694 = vmul.f32 %v687, %v692
      %696 = vrot.lane.b32.xlu0 %v694, 8
      %v697 = vpop.permute.xlu0 %696
      %699 = vrot.lane.b32.xlu0 %v694, 16
      %v700 = vpop.permute.xlu0 %699
      %702 = vrot.lane.b32.xlu0 %v694, 24
      %v703 = vpop.permute.xlu0 %702
      %vm705 = vcmask 64512
      %v706 = vsel %vm705, %v694, %v697
      %vm707 = vcmask 130048
      %v708 = vsel %vm707, %v706, %v700
      %vm709 = vcmask 195584
      %v710 = vsel %vm709, %v708, %v703
      %v711 = vld [vmem:[%s642] sm:$0xff]
      %v712 = vld [vmem:[%s9] sm:$0x1]
      %v713 = vmul.f32 %v711, %v711
      %vm714 = vcmask 523264
      %v715 = vsel %vm714, %v713, 0.0
      %716 = vadd.xlane.f32.xlu0 %v715
      %v717 = vpop.xlane.xlu0 %716
      %v718 = vrcp.pop 64.0
      %v719 = vmul.f32 %v717, %v718
      %v720 = vadd.f32 %v719, 1e-06
      %v721 = vrsqrt.pop %v720
      %v722 = vmul.f32 %v711, %v721
      %v724 = vlaneseq
      %v725 = vshrl.u32 %v724, 7
      %v726 = vsub.s32 0, %v725
      %v727 = vrot.slane %v712, %v726
      %v729 = vmul.f32 %v722, %v727
      %v730 = vpack.c.bf16 %v729, %v729
      %v731 = vld [vmem:[%s10] sm:$0xff]
      %v732 = vld [vmem:[%s10 + $0x8] sm:$0xff]
      %v733 = vld [vmem:[%s10 + $0x10] sm:$0xff]
      %v734 = vld [vmem:[%s10 + $0x18] sm:$0xff]
      %v735 = vld [vmem:[%s10 + $0x20] sm:$0xff]
      %v736 = vld [vmem:[%s10 + $0x28] sm:$0xff]
      %v737 = vld [vmem:[%s10 + $0x30] sm:$0xff]
      %v738 = vld [vmem:[%s10 + $0x38] sm:$0xff]
      %v747 = vunpack.c.l.b16 %v731
      %v748 = vunpack.c.h.b16 %v731
      %v749 = vunpack.c.l.b16 %v732
      %v750 = vunpack.c.h.b16 %v732
      %v751 = vunpack.c.l.b16 %v733
      %v752 = vunpack.c.h.b16 %v733
      %v753 = vunpack.c.l.b16 %v734
      %v754 = vunpack.c.h.b16 %v734
      %v755 = vunpack.c.l.b16 %v735
      %v756 = vunpack.c.h.b16 %v735
      %v757 = vunpack.c.l.b16 %v736
      %v758 = vunpack.c.h.b16 %v736
      %v759 = vunpack.c.l.b16 %v737
      %v760 = vunpack.c.h.b16 %v737
      %v761 = vunpack.c.l.b16 %v738
      %v762 = vunpack.c.h.b16 %v738
      %v763 = vpack.c.b16 %v749, %v747
      %v764 = vpack.c.b16 %v750, %v748
      %v765 = vpack.c.b16 %v753, %v751
      %v766 = vpack.c.b16 %v754, %v752
      %v767 = vpack.c.b16 %v757, %v755
      %v768 = vpack.c.b16 %v758, %v756
      %v769 = vpack.c.b16 %v761, %v759
      %v770 = vpack.c.b16 %v762, %v760
      %v780 = vsel %vm714, %v730, 0
      %782 = vmatprep.subr.bf16.mxu0 %v764
      %783 = vmatpush1.bf16.msra.mxu0 %v763
      %784 = vmatprep.subr.bf16.mxu0 %v766
      %785 = vmatpush1.bf16.msra.mxu0 %v765
      %786 = vmatprep.subr.bf16.mxu0 %v768
      %787 = vmatpush1.bf16.msra.mxu0 %v767
      %788 = vmatprep.subr.bf16.mxu0 %v770
      %789 = vmatpush1.bf16.msra.mxu0 %v769
      %790 = vmatprep.subr.bf16.mxu0 0
      %791 = vmatpush1.bf16.msra.mxu0 0
      %792 = vmatprep.subr.bf16.mxu0 0
      %793 = vmatpush1.bf16.msra.mxu0 0
      %794 = vmatprep.subr.bf16.mxu0 0
      %795 = vmatpush1.bf16.msra.mxu0 0
      %796 = vmatprep.subr.bf16.mxu0 0
      %797 = vmatpush1.bf16.msra.mxu0 0
      %798 = vmatprep.subr.bf16.mxu0 0
      %799 = vmatpush1.bf16.msra.mxu0 0
      %800 = vmatprep.subr.bf16.mxu0 0
      %801 = vmatpush1.bf16.msra.mxu0 0
      %802 = vmatprep.subr.bf16.mxu0 0
      %803 = vmatpush1.bf16.msra.mxu0 0
      %804 = vmatprep.subr.bf16.mxu0 0
      %805 = vmatpush1.bf16.msra.mxu0 0
      %806 = vmatprep.subr.bf16.mxu0 0
      %807 = vmatpush1.bf16.msra.mxu0 0
      %808 = vmatprep.subr.bf16.mxu0 0
      %809 = vmatpush1.bf16.msra.mxu0 0
      %810 = vmatprep.subr.bf16.mxu0 0
      %811 = vmatpush1.bf16.msra.mxu0 0
      %812 = vmatprep.subr.bf16.mxu0 0
      %813 = vmatpush1.bf16.msra.mxu0 0
      %814 = vmatprep.mubr.bf16.mxu0 0
      %815 = vmatmul.mubr.bf16.gmra.mrb[0].mxu0 %v780
      %v816 = vpop.f32.mrb[0].mxu0
      %v817 = vadd.f32 0.0, %v816
      %v818 = vpop.f32.mrb[0].mxu0
      %v819 = vadd.f32 0.0, %v818
      %v820 = vpop.f32.mrb[0].mxu0
      %v821 = vpop.f32.mrb[0].mxu0
      %822 = vdwg.mxu0
      %v823 = vmul.f32 %v817, %v817
      %v825 = vsel %vm714, %v823, 0
      %827 = vmatprep.subr.mxu0 0.0
      %828 = vmatpush1.msra.mxu0 %v664
      %829 = vmatprep.subr.mxu0 0.0
      %830 = vmatpush1.msra.mxu0 %v665
      %831 = vmatprep.subr.mxu0 0.0
      %832 = vmatpush1.msra.mxu0 %v666
      %833 = vmatprep.subr.mxu0 0.0
      %834 = vmatpush1.msra.mxu0 %v667
      %835 = vmatprep.subr.mxu0 0.0
      %836 = vmatpush1.msra.mxu0 %v668
      %837 = vmatprep.subr.mxu0 0.0
      %838 = vmatpush1.msra.mxu0 %v669
      %839 = vmatprep.subr.mxu0 0.0
      %840 = vmatpush1.msra.mxu0 %v670
      %841 = vmatprep.subr.mxu0 0.0
      %842 = vmatpush1.msra.mxu0 %v671
      %843 = vmatprep.subr.mxu0 0.0
      %844 = vmatpush1.msra.mxu0 0.0
      %845 = vmatprep.subr.mxu0 0.0
      %846 = vmatpush1.msra.mxu0 0.0
      %847 = vmatprep.subr.mxu0 0.0
      %848 = vmatpush1.msra.mxu0 0.0
      %849 = vmatprep.subr.mxu0 0.0
      %850 = vmatpush1.msra.mxu0 0.0
      %851 = vmatprep.subr.mxu0 0.0
      %852 = vmatpush1.msra.mxu0 0.0
      %853 = vmatprep.subr.mxu0 0.0
      %854 = vmatpush1.msra.mxu0 0.0
      %855 = vmatprep.subr.mxu0 0.0
      %856 = vmatpush1.msra.mxu0 0.0
      %857 = vmatprep.subr.mxu0 0.0
      %858 = vmatpush1.msra.mxu0 0.0
      %859 = vmatprep.subr.mxu0 0.0
      %860 = vmatpush1.msra.mxu0 0.0
      %861 = vmatprep.subr.mxu0 0.0
      %862 = vmatpush1.msra.mxu0 0.0
      %863 = vmatprep.subr.mxu0 0.0
      %864 = vmatpush1.msra.mxu0 0.0
      %865 = vmatprep.subr.mxu0 0.0
      %866 = vmatpush1.msra.mxu0 0.0
      %867 = vmatprep.subr.mxu0 0.0
      %868 = vmatpush1.msra.mxu0 0.0
      %869 = vmatprep.subr.mxu0 0.0
      %870 = vmatpush1.msra.mxu0 0.0
      %871 = vmatprep.subr.mxu0 0.0
      %872 = vmatpush1.msra.mxu0 0.0
      %873 = vmatprep.subr.mxu0 0.0
      %874 = vmatpush1.msra.mxu0 0.0
      %875 = vmatprep.subr.mxu0 0.0
      %876 = vmatpush1.msra.mxu0 0.0
      %877 = vmatprep.subr.mxu0 0.0
      %878 = vmatpush1.msra.mxu0 0.0
      %879 = vmatprep.subr.mxu0 0.0
      %880 = vmatpush1.msra.mxu0 0.0
      %881 = vmatprep.subr.mxu0 0.0
      %882 = vmatpush1.msra.mxu0 0.0
      %883 = vmatprep.subr.mxu0 0.0
      %884 = vmatpush1.msra.mxu0 0.0
      %885 = vmatprep.subr.mxu0 0.0
      %886 = vmatpush1.msra.mxu0 0.0
      %887 = vmatprep.subr.mxu0 0.0
      %888 = vmatpush1.msra.mxu0 0.0
      %889 = vmatprep.subr.mxu0 0.0
      %890 = vmatpush1.msra.mxu0 0.0
      %891 = vmatprep.mubr.f32.mxu0 0.0
      %892 = vmatmul.mubr.f32.gmra.mrb[0].mxu0 %v825
      %v893 = vpop.f32.mrb[0].mxu0
      %v894 = vadd.f32 1e-06, %v893
      %v895 = vpop.f32.mrb[0].mxu0
      %896 = vdwg.mxu0
      %v897 = vrsqrt.pop %v894
      %v898 = vmul.f32 %v817, %v897
      %v899 = vld [vmem:[%s11] sm:$0x1]
      %v901 = vlaneseq
      %v902 = vshrl.u32 %v901, 7
      %v903 = vsub.s32 0, %v902
      %v904 = vrot.slane %v899, %v903
      %v906 = vmul.f32 %v898, %v904
      %907 = vrot.lane.b32.xlu0 %v823, 64
      %v908 = vpop.permute.xlu0 %907
      %v909 = vsel %vm714, %v908, 0
      %911 = vmatprep.subr.mxu0 0.0
      %912 = vmatpush1.msra.mxu0 %v664
      %913 = vmatprep.subr.mxu0 0.0
      %914 = vmatpush1.msra.mxu0 %v665
      %915 = vmatprep.subr.mxu0 0.0
      %916 = vmatpush1.msra.mxu0 %v666
      %917 = vmatprep.subr.mxu0 0.0
      %918 = vmatpush1.msra.mxu0 %v667
      %919 = vmatprep.subr.mxu0 0.0
      %920 = vmatpush1.msra.mxu0 %v668
      %921 = vmatprep.subr.mxu0 0.0
      %922 = vmatpush1.msra.mxu0 %v669
      %923 = vmatprep.subr.mxu0 0.0
      %924 = vmatpush1.msra.mxu0 %v670
      %925 = vmatprep.subr.mxu0 0.0
      %926 = vmatpush1.msra.mxu0 %v671
      %927 = vmatprep.subr.mxu0 0.0
      %928 = vmatpush1.msra.mxu0 0.0
      %929 = vmatprep.subr.mxu0 0.0
      %930 = vmatpush1.msra.mxu0 0.0
      %931 = vmatprep.subr.mxu0 0.0
      %932 = vmatpush1.msra.mxu0 0.0
      %933 = vmatprep.subr.mxu0 0.0
      %934 = vmatpush1.msra.mxu0 0.0
      %935 = vmatprep.subr.mxu0 0.0
      %936 = vmatpush1.msra.mxu0 0.0
      %937 = vmatprep.subr.mxu0 0.0
      %938 = vmatpush1.msra.mxu0 0.0
      %939 = vmatprep.subr.mxu0 0.0
      %940 = vmatpush1.msra.mxu0 0.0
      %941 = vmatprep.subr.mxu0 0.0
      %942 = vmatpush1.msra.mxu0 0.0
      %943 = vmatprep.subr.mxu0 0.0
      %944 = vmatpush1.msra.mxu0 0.0
      %945 = vmatprep.subr.mxu0 0.0
      %946 = vmatpush1.msra.mxu0 0.0
      %947 = vmatprep.subr.mxu0 0.0
      %948 = vmatpush1.msra.mxu0 0.0
      %949 = vmatprep.subr.mxu0 0.0
      %950 = vmatpush1.msra.mxu0 0.0
      %951 = vmatprep.subr.mxu0 0.0
      %952 = vmatpush1.msra.mxu0 0.0
      %953 = vmatprep.subr.mxu0 0.0
      %954 = vmatpush1.msra.mxu0 0.0
      %955 = vmatprep.subr.mxu0 0.0
      %956 = vmatpush1.msra.mxu0 0.0
      %957 = vmatprep.subr.mxu0 0.0
      %958 = vmatpush1.msra.mxu0 0.0
      %959 = vmatprep.subr.mxu0 0.0
      %960 = vmatpush1.msra.mxu0 0.0
      %961 = vmatprep.subr.mxu0 0.0
      %962 = vmatpush1.msra.mxu0 0.0
      %963 = vmatprep.subr.mxu0 0.0
      %964 = vmatpush1.msra.mxu0 0.0
      %965 = vmatprep.subr.mxu0 0.0
      %966 = vmatpush1.msra.mxu0 0.0
      %967 = vmatprep.subr.mxu0 0.0
      %968 = vmatpush1.msra.mxu0 0.0
      %969 = vmatprep.subr.mxu0 0.0
      %970 = vmatpush1.msra.mxu0 0.0
      %971 = vmatprep.subr.mxu0 0.0
      %972 = vmatpush1.msra.mxu0 0.0
      %973 = vmatprep.subr.mxu0 0.0
      %974 = vmatpush1.msra.mxu0 0.0
      %975 = vmatprep.mubr.f32.mxu0 0.0
      %976 = vmatmul.mubr.f32.gmra.mrb[0].mxu0 %v909
      %v977 = vpop.f32.mrb[0].mxu0
      %v978 = vadd.f32 1e-06, %v977
      %v979 = vpop.f32.mrb[0].mxu0
      %980 = vdwg.mxu0
      %v981 = vrsqrt.pop %v978
      %983 = vrot.lane.b32.xlu0 %v981, 64
      %v984 = vpop.permute.xlu0 %983
      %v986 = vmul.f32 %v817, %v984
      %v987 = vld [vmem:[%s12] sm:$0x1]
      %v989 = vlaneseq
      %v990 = vshrl.u32 %v989, 7
      %v991 = vsub.s32 0, %v990
      %v992 = vrot.slane %v987, %v991
      %993 = vrot.lane.b32.xlu0 %v992, 64
      %v994 = vpop.permute.xlu0 %993
      %v996 = vmul.f32 %v986, %v994
      %v997 = vmul.f32 %v906, %v654
      %v999 = vsel %vm714, %v906, 0
      %1001 = vmatprep.subr.mxu0 0.0
      %1002 = vmatpush1.msra.mxu0 %v656
      %1003 = vmatprep.subr.mxu0 0.0
      %1004 = vmatpush1.msra.mxu0 %v657
      %1005 = vmatprep.subr.mxu0 0.0
      %1006 = vmatpush1.msra.mxu0 %v658
      %1007 = vmatprep.subr.mxu0 0.0
      %1008 = vmatpush1.msra.mxu0 %v659
      %1009 = vmatprep.subr.mxu0 0.0
      %1010 = vmatpush1.msra.mxu0 %v660
      %1011 = vmatprep.subr.mxu0 0.0
      %1012 = vmatpush1.msra.mxu0 %v661
      %1013 = vmatprep.subr.mxu0 0.0
      %1014 = vmatpush1.msra.mxu0 %v662
      %1015 = vmatprep.subr.mxu0 0.0
      %1016 = vmatpush1.msra.mxu0 %v663
      %1017 = vmatprep.subr.mxu0 0.0
      %1018 = vmatpush1.msra.mxu0 0.0
      %1019 = vmatprep.subr.mxu0 0.0
      %1020 = vmatpush1.msra.mxu0 0.0
      %1021 = vmatprep.subr.mxu0 0.0
      %1022 = vmatpush1.msra.mxu0 0.0
      %1023 = vmatprep.subr.mxu0 0.0
      %1024 = vmatpush1.msra.mxu0 0.0
      %1025 = vmatprep.subr.mxu0 0.0
      %1026 = vmatpush1.msra.mxu0 0.0
      %1027 = vmatprep.subr.mxu0 0.0
      %1028 = vmatpush1.msra.mxu0 0.0
      %1029 = vmatprep.subr.mxu0 0.0
      %1030 = vmatpush1.msra.mxu0 0.0
      %1031 = vmatprep.subr.mxu0 0.0
      %1032 = vmatpush1.msra.mxu0 0.0
      %1033 = vmatprep.subr.mxu0 0.0
      %1034 = vmatpush1.msra.mxu0 0.0
      %1035 = vmatprep.subr.mxu0 0.0
      %1036 = vmatpush1.msra.mxu0 0.0
      %1037 = vmatprep.subr.mxu0 0.0
      %1038 = vmatpush1.msra.mxu0 0.0
      %1039 = vmatprep.subr.mxu0 0.0
      %1040 = vmatpush1.msra.mxu0 0.0
      %1041 = vmatprep.subr.mxu0 0.0
      %1042 = vmatpush1.msra.mxu0 0.0
      %1043 = vmatprep.subr.mxu0 0.0
      %1044 = vmatpush1.msra.mxu0 0.0
      %1045 = vmatprep.subr.mxu0 0.0
      %1046 = vmatpush1.msra.mxu0 0.0
      %1047 = vmatprep.subr.mxu0 0.0
      %1048 = vmatpush1.msra.mxu0 0.0
      %1049 = vmatprep.subr.mxu0 0.0
      %1050 = vmatpush1.msra.mxu0 0.0
      %1051 = vmatprep.subr.mxu0 0.0
      %1052 = vmatpush1.msra.mxu0 0.0
      %1053 = vmatprep.subr.mxu0 0.0
      %1054 = vmatpush1.msra.mxu0 0.0
      %1055 = vmatprep.subr.mxu0 0.0
      %1056 = vmatpush1.msra.mxu0 0.0
      %1057 = vmatprep.subr.mxu0 0.0
      %1058 = vmatpush1.msra.mxu0 0.0
      %1059 = vmatprep.subr.mxu0 0.0
      %1060 = vmatpush1.msra.mxu0 0.0
      %1061 = vmatprep.subr.mxu0 0.0
      %1062 = vmatpush1.msra.mxu0 0.0
      %1063 = vmatprep.subr.mxu0 0.0
      %1064 = vmatpush1.msra.mxu0 0.0
      %1065 = vmatprep.mubr.f32.mxu0 0.0
      %1066 = vmatmul.mubr.f32.gmra.mrb[0].mxu0 %v999
      %v1067 = vpop.f32.mrb[0].mxu0
      %v1068 = vadd.f32 0.0, %v1067
      %v1069 = vpop.f32.mrb[0].mxu0
      %1070 = vdwg.mxu0
      %v1071 = vmul.f32 %v1068, %v655
      %v1072 = vadd.f32 %v997, %v1071
      %1074 = vrot.lane.b32.xlu0 %v654, 64
      %v1075 = vpop.permute.xlu0 %1074
      %v1077 = vmul.f32 %v996, %v1075
      %1079 = vrot.lane.b32.xlu0 %v996, 64
      %v1080 = vpop.permute.xlu0 %1079
      %v1081 = vsel %vm714, %v1080, 0
      %1083 = vmatprep.subr.mxu0 0.0
      %1084 = vmatpush1.msra.mxu0 %v656
      %1085 = vmatprep.subr.mxu0 0.0
      %1086 = vmatpush1.msra.mxu0 %v657
      %1087 = vmatprep.subr.mxu0 0.0
      %1088 = vmatpush1.msra.mxu0 %v658
      %1089 = vmatprep.subr.mxu0 0.0
      %1090 = vmatpush1.msra.mxu0 %v659
      %1091 = vmatprep.subr.mxu0 0.0
      %1092 = vmatpush1.msra.mxu0 %v660
      %1093 = vmatprep.subr.mxu0 0.0
      %1094 = vmatpush1.msra.mxu0 %v661
      %1095 = vmatprep.subr.mxu0 0.0
      %1096 = vmatpush1.msra.mxu0 %v662
      %1097 = vmatprep.subr.mxu0 0.0
      %1098 = vmatpush1.msra.mxu0 %v663
      %1099 = vmatprep.subr.mxu0 0.0
      %1100 = vmatpush1.msra.mxu0 0.0
      %1101 = vmatprep.subr.mxu0 0.0
      %1102 = vmatpush1.msra.mxu0 0.0
      %1103 = vmatprep.subr.mxu0 0.0
      %1104 = vmatpush1.msra.mxu0 0.0
      %1105 = vmatprep.subr.mxu0 0.0
      %1106 = vmatpush1.msra.mxu0 0.0
      %1107 = vmatprep.subr.mxu0 0.0
      %1108 = vmatpush1.msra.mxu0 0.0
      %1109 = vmatprep.subr.mxu0 0.0
      %1110 = vmatpush1.msra.mxu0 0.0
      %1111 = vmatprep.subr.mxu0 0.0
      %1112 = vmatpush1.msra.mxu0 0.0
      %1113 = vmatprep.subr.mxu0 0.0
      %1114 = vmatpush1.msra.mxu0 0.0
      %1115 = vmatprep.subr.mxu0 0.0
      %1116 = vmatpush1.msra.mxu0 0.0
      %1117 = vmatprep.subr.mxu0 0.0
      %1118 = vmatpush1.msra.mxu0 0.0
      %1119 = vmatprep.subr.mxu0 0.0
      %1120 = vmatpush1.msra.mxu0 0.0
      %1121 = vmatprep.subr.mxu0 0.0
      %1122 = vmatpush1.msra.mxu0 0.0
      %1123 = vmatprep.subr.mxu0 0.0
      %1124 = vmatpush1.msra.mxu0 0.0
      %1125 = vmatprep.subr.mxu0 0.0
      %1126 = vmatpush1.msra.mxu0 0.0
      %1127 = vmatprep.subr.mxu0 0.0
      %1128 = vmatpush1.msra.mxu0 0.0
      %1129 = vmatprep.subr.mxu0 0.0
      %1130 = vmatpush1.msra.mxu0 0.0
      %1131 = vmatprep.subr.mxu0 0.0
      %1132 = vmatpush1.msra.mxu0 0.0
      %1133 = vmatprep.subr.mxu0 0.0
      %1134 = vmatpush1.msra.mxu0 0.0
      %1135 = vmatprep.subr.mxu0 0.0
      %1136 = vmatpush1.msra.mxu0 0.0
      %1137 = vmatprep.subr.mxu0 0.0
      %1138 = vmatpush1.msra.mxu0 0.0
      %1139 = vmatprep.subr.mxu0 0.0
      %1140 = vmatpush1.msra.mxu0 0.0
      %1141 = vmatprep.subr.mxu0 0.0
      %1142 = vmatpush1.msra.mxu0 0.0
      %1143 = vmatprep.subr.mxu0 0.0
      %1144 = vmatpush1.msra.mxu0 0.0
      %1145 = vmatprep.subr.mxu0 0.0
      %1146 = vmatpush1.msra.mxu0 0.0
      %1147 = vmatprep.mubr.f32.mxu0 0.0
      %1148 = vmatmul.mubr.f32.gmra.mrb[0].mxu0 %v1081
      %v1149 = vpop.f32.mrb[0].mxu0
      %v1150 = vadd.f32 0.0, %v1149
      %v1151 = vpop.f32.mrb[0].mxu0
      %1152 = vdwg.mxu0
      %v1153 = vmul.f32 %v1150, %v655
      %1155 = vrot.lane.b32.xlu0 %v1153, 64
      %v1156 = vpop.permute.xlu0 %1155
      %v1158 = vadd.f32 %v1077, %v1156
      %1163 = vrot.lane.b32.xlu0 %v672, 64
      %v1164 = vpop.permute.xlu0 %1163
      %1165 = vrot.lane.b32.xlu0 %v673, 64
      %v1166 = vpop.permute.xlu0 %1165
      %1167 = vrot.lane.b32.xlu0 %v674, 64
      %v1168 = vpop.permute.xlu0 %1167
      %1169 = vrot.lane.b32.xlu0 %v675, 64
      %v1170 = vpop.permute.xlu0 %1169
      %v1175 = vmul.f32 %v1158, %v1164
      %v1176 = vmul.f32 %v1158, %v1166
      %v1177 = vmul.f32 %v1158, %v1168
      %v1178 = vmul.f32 %v1158, %v1170
      %v1179 = vmul.f32 %v819, %v672
      %v1180 = vmul.f32 %v819, %v673
      %v1181 = vmul.f32 %v819, %v674
      %v1182 = vmul.f32 %v819, %v675
      %1187 = vrot.lane.b32.xlu0 %v1175, 64
      %v1188 = vpop.permute.xlu0 %1187
      %1189 = vrot.lane.b32.xlu0 %v1176, 64
      %v1190 = vpop.permute.xlu0 %1189
      %1191 = vrot.lane.b32.xlu0 %v1177, 64
      %v1192 = vpop.permute.xlu0 %1191
      %1193 = vrot.lane.b32.xlu0 %v1178, 64
      %v1194 = vpop.permute.xlu0 %1193
      %v1196 = vsel %vm714, %v1072, 0
      %v1198 = vsel %vm714, %v1188, 0
      %v1200 = vsel %vm714, %v1190, 0
      %v1202 = vsel %vm714, %v1192, 0
      %v1204 = vsel %vm714, %v1194, 0
      %1206 = vmatprep.subr.mxu0 0.0
      %1207 = vmatpush1.xpose.msra.mxu0 %v1198
      %1208 = vmatprep.subr.mxu0 0.0
      %1209 = vmatpush1.xpose.msra.mxu0 %v1200
      %1210 = vmatprep.subr.mxu0 0.0
      %1211 = vmatpush1.xpose.msra.mxu0 %v1202
      %1212 = vmatprep.subr.mxu0 0.0
      %1213 = vmatpush1.xpose.msra.mxu0 %v1204
      %1214 = vmatprep.subr.mxu0 0.0
      %1215 = vmatpush1.xpose.msra.mxu0 0.0
      %1216 = vmatprep.subr.mxu0 0.0
      %1217 = vmatpush1.xpose.msra.mxu0 0.0
      %1218 = vmatprep.subr.mxu0 0.0
      %1219 = vmatpush1.xpose.msra.mxu0 0.0
      %1220 = vmatprep.subr.mxu0 0.0
      %1221 = vmatpush1.xpose.msra.mxu0 0.0
      %1222 = vmatprep.subr.mxu0 0.0
      %1223 = vmatpush1.xpose.msra.mxu0 0.0
      %1224 = vmatprep.subr.mxu0 0.0
      %1225 = vmatpush1.xpose.msra.mxu0 0.0
      %1226 = vmatprep.subr.mxu0 0.0
      %1227 = vmatpush1.xpose.msra.mxu0 0.0
      %1228 = vmatprep.subr.mxu0 0.0
      %1229 = vmatpush1.xpose.msra.mxu0 0.0
      %1230 = vmatprep.subr.mxu0 0.0
      %1231 = vmatpush1.xpose.msra.mxu0 0.0
      %1232 = vmatprep.subr.mxu0 0.0
      %1233 = vmatpush1.xpose.msra.mxu0 0.0
      %1234 = vmatprep.subr.mxu0 0.0
      %1235 = vmatpush1.xpose.msra.mxu0 0.0
      %1236 = vmatprep.subr.mxu0 0.0
      %1237 = vmatpush1.xpose.msra.mxu0 0.0
      %1238 = vmatprep.subr.mxu0 0.0
      %1239 = vmatpush1.xpose.msra.mxu0 0.0
      %1240 = vmatprep.subr.mxu0 0.0
      %1241 = vmatpush1.xpose.msra.mxu0 0.0
      %1242 = vmatprep.subr.mxu0 0.0
      %1243 = vmatpush1.xpose.msra.mxu0 0.0
      %1244 = vmatprep.subr.mxu0 0.0
      %1245 = vmatpush1.xpose.msra.mxu0 0.0
      %1246 = vmatprep.subr.mxu0 0.0
      %1247 = vmatpush1.xpose.msra.mxu0 0.0
      %1248 = vmatprep.subr.mxu0 0.0
      %1249 = vmatpush1.xpose.msra.mxu0 0.0
      %1250 = vmatprep.subr.mxu0 0.0
      %1251 = vmatpush1.xpose.msra.mxu0 0.0
      %1252 = vmatprep.subr.mxu0 0.0
      %1253 = vmatpush1.xpose.msra.mxu0 0.0
      %1254 = vmatprep.subr.mxu0 0.0
      %1255 = vmatpush1.xpose.msra.mxu0 0.0
      %1256 = vmatprep.subr.mxu0 0.0
      %1257 = vmatpush1.xpose.msra.mxu0 0.0
      %1258 = vmatprep.subr.mxu0 0.0
      %1259 = vmatpush1.xpose.msra.mxu0 0.0
      %1260 = vmatprep.subr.mxu0 0.0
      %1261 = vmatpush1.xpose.msra.mxu0 0.0
      %1262 = vmatprep.subr.mxu0 0.0
      %1263 = vmatpush1.xpose.msra.mxu0 0.0
      %1264 = vmatprep.subr.mxu0 0.0
      %1265 = vmatpush1.xpose.msra.mxu0 0.0
      %1266 = vmatprep.subr.mxu0 0.0
      %1267 = vmatpush1.xpose.msra.mxu0 0.0
      %1268 = vmatprep.subr.mxu0 0.0
      %1269 = vmatpush1.xpose.msra.mxu0 0.0
      %1270 = vmatprep.mubr.f32.mxu0 0.0
      %1271 = vmatmul.mubr.f32.gmra.mrb[0].mxu0 %v1196
      %v1272 = vpop.f32.mrb[0].mxu0
      %v1273 = vadd.f32 0.0, %v1272
      %v1274 = vpop.f32.mrb[0].mxu0
      %1275 = vdwg.mxu0
      %vm1276 = vcmp.gt.f32.partialorder %v710, 0.0
      %v1277 = vsel %vm1276, %v1273, -1e+09
      %vm1278 = vcmask 261120
      %v1279 = vsel %vm1278, %v1277, -inf
      %1280 = vmax.xlane.f32.xlu0 %v1279
      %v1281 = vpop.xlane.xlu0 %1280
      %v1282 = vsub.f32 %v1277, %v1281
      %v1283 = vmul.f32 %v1282, 1.442695
      %v1284 = vpow.pop %v1283
      %v1286 = vsel %vm1278, %v1284, 0
      %1288 = vmatprep.subr.mxu0 0.0
      %1289 = vmatpush1.msra.mxu0 %v676
      %1290 = vmatprep.subr.mxu0 0.0
      %1291 = vmatpush1.msra.mxu0 %v677
      %1292 = vmatprep.subr.mxu0 0.0
      %1293 = vmatpush1.msra.mxu0 %v678
      %1294 = vmatprep.subr.mxu0 0.0
      %1295 = vmatpush1.msra.mxu0 %v679
      %1296 = vmatprep.subr.mxu0 0.0
      %1297 = vmatpush1.msra.mxu0 0.0
      %1298 = vmatprep.subr.mxu0 0.0
      %1299 = vmatpush1.msra.mxu0 0.0
      %1300 = vmatprep.subr.mxu0 0.0
      %1301 = vmatpush1.msra.mxu0 0.0
      %1302 = vmatprep.subr.mxu0 0.0
      %1303 = vmatpush1.msra.mxu0 0.0
      %1304 = vmatprep.subr.mxu0 0.0
      %1305 = vmatpush1.msra.mxu0 0.0
      %1306 = vmatprep.subr.mxu0 0.0
      %1307 = vmatpush1.msra.mxu0 0.0
      %1308 = vmatprep.subr.mxu0 0.0
      %1309 = vmatpush1.msra.mxu0 0.0
      %1310 = vmatprep.subr.mxu0 0.0
      %1311 = vmatpush1.msra.mxu0 0.0
      %1312 = vmatprep.subr.mxu0 0.0
      %1313 = vmatpush1.msra.mxu0 0.0
      %1314 = vmatprep.subr.mxu0 0.0
      %1315 = vmatpush1.msra.mxu0 0.0
      %1316 = vmatprep.subr.mxu0 0.0
      %1317 = vmatpush1.msra.mxu0 0.0
      %1318 = vmatprep.subr.mxu0 0.0
      %1319 = vmatpush1.msra.mxu0 0.0
      %1320 = vmatprep.subr.mxu0 0.0
      %1321 = vmatpush1.msra.mxu0 0.0
      %1322 = vmatprep.subr.mxu0 0.0
      %1323 = vmatpush1.msra.mxu0 0.0
      %1324 = vmatprep.subr.mxu0 0.0
      %1325 = vmatpush1.msra.mxu0 0.0
      %1326 = vmatprep.subr.mxu0 0.0
      %1327 = vmatpush1.msra.mxu0 0.0
      %1328 = vmatprep.subr.mxu0 0.0
      %1329 = vmatpush1.msra.mxu0 0.0
      %1330 = vmatprep.subr.mxu0 0.0
      %1331 = vmatpush1.msra.mxu0 0.0
      %1332 = vmatprep.subr.mxu0 0.0
      %1333 = vmatpush1.msra.mxu0 0.0
      %1334 = vmatprep.subr.mxu0 0.0
      %1335 = vmatpush1.msra.mxu0 0.0
      %1336 = vmatprep.subr.mxu0 0.0
      %1337 = vmatpush1.msra.mxu0 0.0
      %1338 = vmatprep.subr.mxu0 0.0
      %1339 = vmatpush1.msra.mxu0 0.0
      %1340 = vmatprep.subr.mxu0 0.0
      %1341 = vmatpush1.msra.mxu0 0.0
      %1342 = vmatprep.subr.mxu0 0.0
      %1343 = vmatpush1.msra.mxu0 0.0
      %1344 = vmatprep.subr.mxu0 0.0
      %1345 = vmatpush1.msra.mxu0 0.0
      %1346 = vmatprep.subr.mxu0 0.0
      %1347 = vmatpush1.msra.mxu0 0.0
      %1348 = vmatprep.subr.mxu0 0.0
      %1349 = vmatpush1.msra.mxu0 0.0
      %1350 = vmatprep.subr.mxu0 0.0
      %1351 = vmatpush1.msra.mxu0 0.0
      %1352 = vmatprep.mubr.f32.mxu0 0.0
      %1353 = vmatmul.mubr.f32.gmra.mrb[0].mxu0 %v1286
      %v1354 = vpop.f32.mrb[0].mxu0
      %v1355 = vadd.f32 0.0, %v1354
      %v1356 = vpop.f32.mrb[0].mxu0
      %1357 = vdwg.mxu0
      %v1358 = vrcp.pop %v1355
      %v1359 = vmul.f32 %v1284, %v1358
      %v1361 = vsel %vm1278, %v1359, 0
      %1363 = vmatprep.subr.mxu0 0.0
      %1364 = vmatpush1.msra.mxu0 %v1179
      %1365 = vmatprep.subr.mxu0 0.0
      %1366 = vmatpush1.msra.mxu0 %v1180
      %1367 = vmatprep.subr.mxu0 0.0
      %1368 = vmatpush1.msra.mxu0 %v1181
      %1369 = vmatprep.subr.mxu0 0.0
      %1370 = vmatpush1.msra.mxu0 %v1182
      %1371 = vmatprep.subr.mxu0 0.0
      %1372 = vmatpush1.msra.mxu0 0.0
      %1373 = vmatprep.subr.mxu0 0.0
      %1374 = vmatpush1.msra.mxu0 0.0
      %1375 = vmatprep.subr.mxu0 0.0
      %1376 = vmatpush1.msra.mxu0 0.0
      %1377 = vmatprep.subr.mxu0 0.0
      %1378 = vmatpush1.msra.mxu0 0.0
      %1379 = vmatprep.subr.mxu0 0.0
      %1380 = vmatpush1.msra.mxu0 0.0
      %1381 = vmatprep.subr.mxu0 0.0
      %1382 = vmatpush1.msra.mxu0 0.0
      %1383 = vmatprep.subr.mxu0 0.0
      %1384 = vmatpush1.msra.mxu0 0.0
      %1385 = vmatprep.subr.mxu0 0.0
      %1386 = vmatpush1.msra.mxu0 0.0
      %1387 = vmatprep.subr.mxu0 0.0
      %1388 = vmatpush1.msra.mxu0 0.0
      %1389 = vmatprep.subr.mxu0 0.0
      %1390 = vmatpush1.msra.mxu0 0.0
      %1391 = vmatprep.subr.mxu0 0.0
      %1392 = vmatpush1.msra.mxu0 0.0
      %1393 = vmatprep.subr.mxu0 0.0
      %1394 = vmatpush1.msra.mxu0 0.0
      %1395 = vmatprep.subr.mxu0 0.0
      %1396 = vmatpush1.msra.mxu0 0.0
      %1397 = vmatprep.subr.mxu0 0.0
      %1398 = vmatpush1.msra.mxu0 0.0
      %1399 = vmatprep.subr.mxu0 0.0
      %1400 = vmatpush1.msra.mxu0 0.0
      %1401 = vmatprep.subr.mxu0 0.0
      %1402 = vmatpush1.msra.mxu0 0.0
      %1403 = vmatprep.subr.mxu0 0.0
      %1404 = vmatpush1.msra.mxu0 0.0
      %1405 = vmatprep.subr.mxu0 0.0
      %1406 = vmatpush1.msra.mxu0 0.0
      %1407 = vmatprep.subr.mxu0 0.0
      %1408 = vmatpush1.msra.mxu0 0.0
      %1409 = vmatprep.subr.mxu0 0.0
      %1410 = vmatpush1.msra.mxu0 0.0
      %1411 = vmatprep.subr.mxu0 0.0
      %1412 = vmatpush1.msra.mxu0 0.0
      %1413 = vmatprep.subr.mxu0 0.0
      %1414 = vmatpush1.msra.mxu0 0.0
      %1415 = vmatprep.subr.mxu0 0.0
      %1416 = vmatpush1.msra.mxu0 0.0
      %1417 = vmatprep.subr.mxu0 0.0
      %1418 = vmatpush1.msra.mxu0 0.0
      %1419 = vmatprep.subr.mxu0 0.0
      %1420 = vmatpush1.msra.mxu0 0.0
      %1421 = vmatprep.subr.mxu0 0.0
      %1422 = vmatpush1.msra.mxu0 0.0
      %1423 = vmatprep.subr.mxu0 0.0
      %1424 = vmatpush1.msra.mxu0 0.0
      %1425 = vmatprep.subr.mxu0 0.0
      %1426 = vmatpush1.msra.mxu0 0.0
      %1427 = vmatprep.mubr.f32.mxu0 0.0
      %1428 = vmatmul.mubr.f32.gmra.mrb[0].mxu0 %v1361
      %v1429 = vpop.f32.mrb[0].mxu0
      %v1430 = vadd.f32 0.0, %v1429
      %v1431 = vpop.f32.mrb[0].mxu0
      %1432 = vdwg.mxu0
      %v1433 = vpack.c.bf16 %v1430, %v1430
      %v1434 = vld [vmem:[%s13] sm:$0xf]
      %v1435 = vld [vmem:[%s13 + $0x4] sm:$0xf]
      %v1436 = vld [vmem:[%s13 + $0x8] sm:$0xf]
      %v1437 = vld [vmem:[%s13 + $0xc] sm:$0xf]
      %v1438 = vld [vmem:[%s13 + $0x10] sm:$0xf]
      %v1439 = vld [vmem:[%s13 + $0x14] sm:$0xf]
      %v1440 = vld [vmem:[%s13 + $0x18] sm:$0xf]
      %v1441 = vld [vmem:[%s13 + $0x1c] sm:$0xf]
      %v1450 = vunpack.c.l.b16 %v1434
      %v1451 = vunpack.c.l.b16 %v1435
      %v1452 = vunpack.c.l.b16 %v1436
      %v1453 = vunpack.c.l.b16 %v1437
      %v1454 = vunpack.c.l.b16 %v1438
      %v1455 = vunpack.c.l.b16 %v1439
      %v1456 = vunpack.c.l.b16 %v1440
      %v1457 = vunpack.c.l.b16 %v1441
      %v1458 = vpack.c.b16 %v1451, %v1450
      %v1459 = vpack.c.b16 %v1453, %v1452
      %v1460 = vpack.c.b16 %v1455, %v1454
      %v1461 = vpack.c.b16 %v1457, %v1456
      %v1467 = vsel %vm714, %v1433, 0
      %1469 = vmatprep.subr.bf16.mxu0 0
      %1470 = vmatpush1.bf16.msra.mxu0 %v1458
      %1471 = vmatprep.subr.bf16.mxu0 0
      %1472 = vmatpush1.bf16.msra.mxu0 %v1459
      %1473 = vmatprep.subr.bf16.mxu0 0
      %1474 = vmatpush1.bf16.msra.mxu0 %v1460
      %1475 = vmatprep.subr.bf16.mxu0 0
      %1476 = vmatpush1.bf16.msra.mxu0 %v1461
      %1477 = vmatprep.subr.bf16.mxu0 0
      %1478 = vmatpush1.bf16.msra.mxu0 0
      %1479 = vmatprep.subr.bf16.mxu0 0
      %1480 = vmatpush1.bf16.msra.mxu0 0
      %1481 = vmatprep.subr.bf16.mxu0 0
      %1482 = vmatpush1.bf16.msra.mxu0 0
      %1483 = vmatprep.subr.bf16.mxu0 0
      %1484 = vmatpush1.bf16.msra.mxu0 0
      %1485 = vmatprep.subr.bf16.mxu0 0
      %1486 = vmatpush1.bf16.msra.mxu0 0
      %1487 = vmatprep.subr.bf16.mxu0 0
      %1488 = vmatpush1.bf16.msra.mxu0 0
      %1489 = vmatprep.subr.bf16.mxu0 0
      %1490 = vmatpush1.bf16.msra.mxu0 0
      %1491 = vmatprep.subr.bf16.mxu0 0
      %1492 = vmatpush1.bf16.msra.mxu0 0
      %1493 = vmatprep.subr.bf16.mxu0 0
      %1494 = vmatpush1.bf16.msra.mxu0 0
      %1495 = vmatprep.subr.bf16.mxu0 0
      %1496 = vmatpush1.bf16.msra.mxu0 0
      %1497 = vmatprep.subr.bf16.mxu0 0
      %1498 = vmatpush1.bf16.msra.mxu0 0
      %1499 = vmatprep.subr.bf16.mxu0 0
      %1500 = vmatpush1.bf16.msra.mxu0 0
      %1501 = vmatprep.mubr.bf16.mxu0 0
      %1502 = vmatmul.mubr.bf16.gmra.mrb[0].mxu0 %v1467
      %v1503 = vpop.f32.mrb[0].mxu0
      %v1504 = vadd.f32 0.0, %v1503
      %v1505 = vpop.f32.mrb[0].mxu0
      %v1506 = vpop.f32.mrb[0].mxu0
      %v1507 = vpop.f32.mrb[0].mxu0
      %1508 = vdwg.mxu0
      %v1509 = vadd.f32 %v711, %v1504
      %v1510 = vld [vmem:[%s14] sm:$0x1]
      %v1511 = vmul.f32 %v1509, %v1509
      %v1512 = vsel %vm714, %v1511, 0.0
      %1513 = vadd.xlane.f32.xlu0 %v1512
      %v1514 = vpop.xlane.xlu0 %1513
      %v1515 = vmul.f32 %v1514, %v718
      %v1516 = vadd.f32 %v1515, 1e-06
      %v1517 = vrsqrt.pop %v1516
      %v1518 = vmul.f32 %v1509, %v1517
      %v1520 = vlaneseq
      %v1521 = vshrl.u32 %v1520, 7
      %v1522 = vsub.s32 0, %v1521
      %v1523 = vrot.slane %v1510, %v1522
      %v1525 = vmul.f32 %v1518, %v1523
      %v1526 = vpack.c.bf16 %v1525, %v1525
      %v1527 = vld [vmem:[%s15] sm:$0xff]
      %v1528 = vld [vmem:[%s15 + $0x8] sm:$0xff]
      %v1529 = vld [vmem:[%s15 + $0x10] sm:$0xff]
      %v1530 = vld [vmem:[%s15 + $0x18] sm:$0xff]
      %v1531 = vld [vmem:[%s15 + $0x20] sm:$0xff]
      %v1532 = vld [vmem:[%s15 + $0x28] sm:$0xff]
      %v1533 = vld [vmem:[%s15 + $0x30] sm:$0xff]
      %v1534 = vld [vmem:[%s15 + $0x38] sm:$0xff]
      %v1543 = vunpack.c.l.b16 %v1527
      %v1544 = vunpack.c.h.b16 %v1527
      %v1545 = vunpack.c.l.b16 %v1528
      %v1546 = vunpack.c.h.b16 %v1528
      %v1547 = vunpack.c.l.b16 %v1529
      %v1548 = vunpack.c.h.b16 %v1529
      %v1549 = vunpack.c.l.b16 %v1530
      %v1550 = vunpack.c.h.b16 %v1530
      %v1551 = vunpack.c.l.b16 %v1531
      %v1552 = vunpack.c.h.b16 %v1531
      %v1553 = vunpack.c.l.b16 %v1532
      %v1554 = vunpack.c.h.b16 %v1532
      %v1555 = vunpack.c.l.b16 %v1533
      %v1556 = vunpack.c.h.b16 %v1533
      %v1557 = vunpack.c.l.b16 %v1534
      %v1558 = vunpack.c.h.b16 %v1534
      %v1559 = vpack.c.b16 %v1545, %v1543
      %v1560 = vpack.c.b16 %v1546, %v1544
      %v1561 = vpack.c.b16 %v1549, %v1547
      %v1562 = vpack.c.b16 %v1550, %v1548
      %v1563 = vpack.c.b16 %v1553, %v1551
      %v1564 = vpack.c.b16 %v1554, %v1552
      %v1565 = vpack.c.b16 %v1557, %v1555
      %v1566 = vpack.c.b16 %v1558, %v1556
      %v1576 = vsel %vm714, %v1526, 0
      %1578 = vmatprep.subr.bf16.mxu0 %v1560
      %1579 = vmatpush1.bf16.msra.mxu0 %v1559
      %1580 = vmatprep.subr.bf16.mxu0 %v1562
      %1581 = vmatpush1.bf16.msra.mxu0 %v1561
      %1582 = vmatprep.subr.bf16.mxu0 %v1564
      %1583 = vmatpush1.bf16.msra.mxu0 %v1563
      %1584 = vmatprep.subr.bf16.mxu0 %v1566
      %1585 = vmatpush1.bf16.msra.mxu0 %v1565
      %1586 = vmatprep.subr.bf16.mxu0 0
      %1587 = vmatpush1.bf16.msra.mxu0 0
      %1588 = vmatprep.subr.bf16.mxu0 0
      %1589 = vmatpush1.bf16.msra.mxu0 0
      %1590 = vmatprep.subr.bf16.mxu0 0
      %1591 = vmatpush1.bf16.msra.mxu0 0
      %1592 = vmatprep.subr.bf16.mxu0 0
      %1593 = vmatpush1.bf16.msra.mxu0 0
      %1594 = vmatprep.subr.bf16.mxu0 0
      %1595 = vmatpush1.bf16.msra.mxu0 0
      %1596 = vmatprep.subr.bf16.mxu0 0
      %1597 = vmatpush1.bf16.msra.mxu0 0
      %1598 = vmatprep.subr.bf16.mxu0 0
      %1599 = vmatpush1.bf16.msra.mxu0 0
      %1600 = vmatprep.subr.bf16.mxu0 0
      %1601 = vmatpush1.bf16.msra.mxu0 0
      %1602 = vmatprep.subr.bf16.mxu0 0
      %1603 = vmatpush1.bf16.msra.mxu0 0
      %1604 = vmatprep.subr.bf16.mxu0 0
      %1605 = vmatpush1.bf16.msra.mxu0 0
      %1606 = vmatprep.subr.bf16.mxu0 0
      %1607 = vmatpush1.bf16.msra.mxu0 0
      %1608 = vmatprep.subr.bf16.mxu0 0
      %1609 = vmatpush1.bf16.msra.mxu0 0
      %1610 = vmatprep.mubr.bf16.mxu0 0
      %1611 = vmatmul.mubr.bf16.gmra.mrb[0].mxu0 %v1576
      %v1612 = vpop.f32.mrb[0].mxu0
      %v1613 = vadd.f32 0.0, %v1612
      %v1614 = vpop.f32.mrb[0].mxu0
      %v1615 = vadd.f32 0.0, %v1614
      %v1616 = vpop.f32.mrb[0].mxu0
      %v1617 = vpop.f32.mrb[0].mxu0
      %1618 = vdwg.mxu0
      %v1619 = vsub.f32 0.0, %v1613
      %v1620 = vmul.f32 %v1619, 1.442695
      %v1621 = vpow.pop %v1620
      %v1622 = vadd.f32 %v1621, 1.0
      %v1623 = vrcp.pop %v1622
      %v1624 = vmul.f32 %v1613, %v1623
      %v1625 = vmul.f32 %v1624, %v1615
      %v1626 = vpack.c.bf16 %v1625, %v1625
      %v1627 = vld [vmem:[%s16] sm:$0xf]
      %v1628 = vld [vmem:[%s16 + $0x4] sm:$0xf]
      %v1629 = vld [vmem:[%s16 + $0x8] sm:$0xf]
      %v1630 = vld [vmem:[%s16 + $0xc] sm:$0xf]
      %v1631 = vld [vmem:[%s16 + $0x10] sm:$0xf]
      %v1632 = vld [vmem:[%s16 + $0x14] sm:$0xf]
      %v1633 = vld [vmem:[%s16 + $0x18] sm:$0xf]
      %v1634 = vld [vmem:[%s16 + $0x1c] sm:$0xf]
      %v1635 = vld [vmem:[%s16 + $0x20] sm:$0xf]
      %v1636 = vld [vmem:[%s16 + $0x24] sm:$0xf]
      %v1637 = vld [vmem:[%s16 + $0x28] sm:$0xf]
      %v1638 = vld [vmem:[%s16 + $0x2c] sm:$0xf]
      %v1639 = vld [vmem:[%s16 + $0x30] sm:$0xf]
      %v1640 = vld [vmem:[%s16 + $0x34] sm:$0xf]
      %v1641 = vld [vmem:[%s16 + $0x38] sm:$0xf]
      %v1642 = vld [vmem:[%s16 + $0x3c] sm:$0xf]
      %v1659 = vunpack.c.l.b16 %v1627
      %v1660 = vunpack.c.l.b16 %v1628
      %v1661 = vunpack.c.l.b16 %v1629
      %v1662 = vunpack.c.l.b16 %v1630
      %v1663 = vunpack.c.l.b16 %v1631
      %v1664 = vunpack.c.l.b16 %v1632
      %v1665 = vunpack.c.l.b16 %v1633
      %v1666 = vunpack.c.l.b16 %v1634
      %v1667 = vunpack.c.l.b16 %v1635
      %v1668 = vunpack.c.l.b16 %v1636
      %v1669 = vunpack.c.l.b16 %v1637
      %v1670 = vunpack.c.l.b16 %v1638
      %v1671 = vunpack.c.l.b16 %v1639
      %v1672 = vunpack.c.l.b16 %v1640
      %v1673 = vunpack.c.l.b16 %v1641
      %v1674 = vunpack.c.l.b16 %v1642
      %v1675 = vpack.c.b16 %v1660, %v1659
      %v1676 = vpack.c.b16 %v1662, %v1661
      %v1677 = vpack.c.b16 %v1664, %v1663
      %v1678 = vpack.c.b16 %v1666, %v1665
      %v1679 = vpack.c.b16 %v1668, %v1667
      %v1680 = vpack.c.b16 %v1670, %v1669
      %v1681 = vpack.c.b16 %v1672, %v1671
      %v1682 = vpack.c.b16 %v1674, %v1673
      %1691 = vmatprep.subr.bf16.mxu0 0
      %1692 = vmatpush1.bf16.msra.mxu0 %v1675
      %1693 = vmatprep.subr.bf16.mxu0 0
      %1694 = vmatpush1.bf16.msra.mxu0 %v1676
      %1695 = vmatprep.subr.bf16.mxu0 0
      %1696 = vmatpush1.bf16.msra.mxu0 %v1677
      %1697 = vmatprep.subr.bf16.mxu0 0
      %1698 = vmatpush1.bf16.msra.mxu0 %v1678
      %1699 = vmatprep.subr.bf16.mxu0 0
      %1700 = vmatpush1.bf16.msra.mxu0 %v1679
      %1701 = vmatprep.subr.bf16.mxu0 0
      %1702 = vmatpush1.bf16.msra.mxu0 %v1680
      %1703 = vmatprep.subr.bf16.mxu0 0
      %1704 = vmatpush1.bf16.msra.mxu0 %v1681
      %1705 = vmatprep.subr.bf16.mxu0 0
      %1706 = vmatpush1.bf16.msra.mxu0 %v1682
      %1707 = vmatprep.subr.bf16.mxu0 0
      %1708 = vmatpush1.bf16.msra.mxu0 0
      %1709 = vmatprep.subr.bf16.mxu0 0
      %1710 = vmatpush1.bf16.msra.mxu0 0
      %1711 = vmatprep.subr.bf16.mxu0 0
      %1712 = vmatpush1.bf16.msra.mxu0 0
      %1713 = vmatprep.subr.bf16.mxu0 0
      %1714 = vmatpush1.bf16.msra.mxu0 0
      %1715 = vmatprep.subr.bf16.mxu0 0
      %1716 = vmatpush1.bf16.msra.mxu0 0
      %1717 = vmatprep.subr.bf16.mxu0 0
      %1718 = vmatpush1.bf16.msra.mxu0 0
      %1719 = vmatprep.subr.bf16.mxu0 0
      %1720 = vmatpush1.bf16.msra.mxu0 0
      %1721 = vmatprep.subr.bf16.mxu0 0
      %1722 = vmatpush1.bf16.msra.mxu0 0
      %1723 = vmatprep.mubr.bf16.mxu0 0
      %1724 = vmatmul.mubr.bf16.gmra.mrb[0].mxu0 %v1626
      %v1725 = vpop.f32.mrb[0].mxu0
      %v1726 = vadd.f32 0.0, %v1725
      %v1727 = vpop.f32.mrb[0].mxu0
      %v1728 = vpop.f32.mrb[0].mxu0
      %v1729 = vpop.f32.mrb[0].mxu0
      %1730 = vdwg.mxu0
      %v1731 = vadd.f32 %v1509, %v1726
      %s1732 = scalar_lea.vmem %s9, 1
      %v1733 = vld [vmem:[%s1732] sm:$0x1]
      %v1734 = vmul.f32 %v1731, %v1731
      %v1735 = vsel %vm714, %v1734, 0.0
      %1736 = vadd.xlane.f32.xlu0 %v1735
      %v1737 = vpop.xlane.xlu0 %1736
      %v1738 = vmul.f32 %v1737, %v718
      %v1739 = vadd.f32 %v1738, 1e-06
      %v1740 = vrsqrt.pop %v1739
      %v1741 = vmul.f32 %v1731, %v1740
      %v1743 = vlaneseq
      %v1744 = vshrl.u32 %v1743, 7
      %v1745 = vsub.s32 0, %v1744
      %v1746 = vrot.slane %v1733, %v1745
      %v1748 = vmul.f32 %v1741, %v1746
      %v1749 = vpack.c.bf16 %v1748, %v1748
      %s1750 = scalar_lea.vmem %s10, 64
      %v1751 = vld [vmem:[%s1750] sm:$0xff]
      %v1752 = vld [vmem:[%s1750 + $0x8] sm:$0xff]
      %v1753 = vld [vmem:[%s1750 + $0x10] sm:$0xff]
      %v1754 = vld [vmem:[%s1750 + $0x18] sm:$0xff]
      %v1755 = vld [vmem:[%s1750 + $0x20] sm:$0xff]
      %v1756 = vld [vmem:[%s1750 + $0x28] sm:$0xff]
      %v1757 = vld [vmem:[%s1750 + $0x30] sm:$0xff]
      %v1758 = vld [vmem:[%s1750 + $0x38] sm:$0xff]
      %v1767 = vunpack.c.l.b16 %v1751
      %v1768 = vunpack.c.h.b16 %v1751
      %v1769 = vunpack.c.l.b16 %v1752
      %v1770 = vunpack.c.h.b16 %v1752
      %v1771 = vunpack.c.l.b16 %v1753
      %v1772 = vunpack.c.h.b16 %v1753
      %v1773 = vunpack.c.l.b16 %v1754
      %v1774 = vunpack.c.h.b16 %v1754
      %v1775 = vunpack.c.l.b16 %v1755
      %v1776 = vunpack.c.h.b16 %v1755
      %v1777 = vunpack.c.l.b16 %v1756
      %v1778 = vunpack.c.h.b16 %v1756
      %v1779 = vunpack.c.l.b16 %v1757
      %v1780 = vunpack.c.h.b16 %v1757
      %v1781 = vunpack.c.l.b16 %v1758
      %v1782 = vunpack.c.h.b16 %v1758
      %v1783 = vpack.c.b16 %v1769, %v1767
      %v1784 = vpack.c.b16 %v1770, %v1768
      %v1785 = vpack.c.b16 %v1773, %v1771
      %v1786 = vpack.c.b16 %v1774, %v1772
      %v1787 = vpack.c.b16 %v1777, %v1775
      %v1788 = vpack.c.b16 %v1778, %v1776
      %v1789 = vpack.c.b16 %v1781, %v1779
      %v1790 = vpack.c.b16 %v1782, %v1780
      %v1800 = vsel %vm714, %v1749, 0
      %1802 = vmatprep.subr.bf16.mxu0 %v1784
      %1803 = vmatpush1.bf16.msra.mxu0 %v1783
      %1804 = vmatprep.subr.bf16.mxu0 %v1786
      %1805 = vmatpush1.bf16.msra.mxu0 %v1785
      %1806 = vmatprep.subr.bf16.mxu0 %v1788
      %1807 = vmatpush1.bf16.msra.mxu0 %v1787
      %1808 = vmatprep.subr.bf16.mxu0 %v1790
      %1809 = vmatpush1.bf16.msra.mxu0 %v1789
      %1810 = vmatprep.subr.bf16.mxu0 0
      %1811 = vmatpush1.bf16.msra.mxu0 0
      %1812 = vmatprep.subr.bf16.mxu0 0
      %1813 = vmatpush1.bf16.msra.mxu0 0
      %1814 = vmatprep.subr.bf16.mxu0 0
      %1815 = vmatpush1.bf16.msra.mxu0 0
      %1816 = vmatprep.subr.bf16.mxu0 0
      %1817 = vmatpush1.bf16.msra.mxu0 0
      %1818 = vmatprep.subr.bf16.mxu0 0
      %1819 = vmatpush1.bf16.msra.mxu0 0
      %1820 = vmatprep.subr.bf16.mxu0 0
      %1821 = vmatpush1.bf16.msra.mxu0 0
      %1822 = vmatprep.subr.bf16.mxu0 0
      %1823 = vmatpush1.bf16.msra.mxu0 0
      %1824 = vmatprep.subr.bf16.mxu0 0
      %1825 = vmatpush1.bf16.msra.mxu0 0
      %1826 = vmatprep.subr.bf16.mxu0 0
      %1827 = vmatpush1.bf16.msra.mxu0 0
      %1828 = vmatprep.subr.bf16.mxu0 0
      %1829 = vmatpush1.bf16.msra.mxu0 0
      %1830 = vmatprep.subr.bf16.mxu0 0
      %1831 = vmatpush1.bf16.msra.mxu0 0
      %1832 = vmatprep.subr.bf16.mxu0 0
      %1833 = vmatpush1.bf16.msra.mxu0 0
      %1834 = vmatprep.mubr.bf16.mxu0 0
      %1835 = vmatmul.mubr.bf16.gmra.mrb[0].mxu0 %v1800
      %v1836 = vpop.f32.mrb[0].mxu0
      %v1837 = vadd.f32 0.0, %v1836
      %v1838 = vpop.f32.mrb[0].mxu0
      %v1839 = vadd.f32 0.0, %v1838
      %v1840 = vpop.f32.mrb[0].mxu0
      %v1841 = vpop.f32.mrb[0].mxu0
      %1842 = vdwg.mxu0
      %v1843 = vmul.f32 %v1837, %v1837
      %v1845 = vsel %vm714, %v1843, 0
      %1847 = vmatprep.subr.mxu0 0.0
      %1848 = vmatpush1.msra.mxu0 %v664
      %1849 = vmatprep.subr.mxu0 0.0
      %1850 = vmatpush1.msra.mxu0 %v665
      %1851 = vmatprep.subr.mxu0 0.0
      %1852 = vmatpush1.msra.mxu0 %v666
      %1853 = vmatprep.subr.mxu0 0.0
      %1854 = vmatpush1.msra.mxu0 %v667
      %1855 = vmatprep.subr.mxu0 0.0
      %1856 = vmatpush1.msra.mxu0 %v668
      %1857 = vmatprep.subr.mxu0 0.0
      %1858 = vmatpush1.msra.mxu0 %v669
      %1859 = vmatprep.subr.mxu0 0.0
      %1860 = vmatpush1.msra.mxu0 %v670
      %1861 = vmatprep.subr.mxu0 0.0
      %1862 = vmatpush1.msra.mxu0 %v671
      %1863 = vmatprep.subr.mxu0 0.0
      %1864 = vmatpush1.msra.mxu0 0.0
      %1865 = vmatprep.subr.mxu0 0.0
      %1866 = vmatpush1.msra.mxu0 0.0
      %1867 = vmatprep.subr.mxu0 0.0
      %1868 = vmatpush1.msra.mxu0 0.0
      %1869 = vmatprep.subr.mxu0 0.0
      %1870 = vmatpush1.msra.mxu0 0.0
      %1871 = vmatprep.subr.mxu0 0.0
      %1872 = vmatpush1.msra.mxu0 0.0
      %1873 = vmatprep.subr.mxu0 0.0
      %1874 = vmatpush1.msra.mxu0 0.0
      %1875 = vmatprep.subr.mxu0 0.0
      %1876 = vmatpush1.msra.mxu0 0.0
      %1877 = vmatprep.subr.mxu0 0.0
      %1878 = vmatpush1.msra.mxu0 0.0
      %1879 = vmatprep.subr.mxu0 0.0
      %1880 = vmatpush1.msra.mxu0 0.0
      %1881 = vmatprep.subr.mxu0 0.0
      %1882 = vmatpush1.msra.mxu0 0.0
      %1883 = vmatprep.subr.mxu0 0.0
      %1884 = vmatpush1.msra.mxu0 0.0
      %1885 = vmatprep.subr.mxu0 0.0
      %1886 = vmatpush1.msra.mxu0 0.0
      %1887 = vmatprep.subr.mxu0 0.0
      %1888 = vmatpush1.msra.mxu0 0.0
      %1889 = vmatprep.subr.mxu0 0.0
      %1890 = vmatpush1.msra.mxu0 0.0
      %1891 = vmatprep.subr.mxu0 0.0
      %1892 = vmatpush1.msra.mxu0 0.0
      %1893 = vmatprep.subr.mxu0 0.0
      %1894 = vmatpush1.msra.mxu0 0.0
      %1895 = vmatprep.subr.mxu0 0.0
      %1896 = vmatpush1.msra.mxu0 0.0
      %1897 = vmatprep.subr.mxu0 0.0
      %1898 = vmatpush1.msra.mxu0 0.0
      %1899 = vmatprep.subr.mxu0 0.0
      %1900 = vmatpush1.msra.mxu0 0.0
      %1901 = vmatprep.subr.mxu0 0.0
      %1902 = vmatpush1.msra.mxu0 0.0
      %1903 = vmatprep.subr.mxu0 0.0
      %1904 = vmatpush1.msra.mxu0 0.0
      %1905 = vmatprep.subr.mxu0 0.0
      %1906 = vmatpush1.msra.mxu0 0.0
      %1907 = vmatprep.subr.mxu0 0.0
      %1908 = vmatpush1.msra.mxu0 0.0
      %1909 = vmatprep.subr.mxu0 0.0
      %1910 = vmatpush1.msra.mxu0 0.0
      %1911 = vmatprep.mubr.f32.mxu0 0.0
      %1912 = vmatmul.mubr.f32.gmra.mrb[0].mxu0 %v1845
      %v1913 = vpop.f32.mrb[0].mxu0
      %v1914 = vadd.f32 1e-06, %v1913
      %v1915 = vpop.f32.mrb[0].mxu0
      %1916 = vdwg.mxu0
      %v1917 = vrsqrt.pop %v1914
      %v1918 = vmul.f32 %v1837, %v1917
      %s1919 = scalar_lea.vmem %s11, 1
      %v1920 = vld [vmem:[%s1919] sm:$0x1]
      %v1922 = vlaneseq
      %v1923 = vshrl.u32 %v1922, 7
      %v1924 = vsub.s32 0, %v1923
      %v1925 = vrot.slane %v1920, %v1924
      %v1927 = vmul.f32 %v1918, %v1925
      %1928 = vrot.lane.b32.xlu0 %v1843, 64
      %v1929 = vpop.permute.xlu0 %1928
      %v1930 = vsel %vm714, %v1929, 0
      %1932 = vmatprep.subr.mxu0 0.0
      %1933 = vmatpush1.msra.mxu0 %v664
      %1934 = vmatprep.subr.mxu0 0.0
      %1935 = vmatpush1.msra.mxu0 %v665
      %1936 = vmatprep.subr.mxu0 0.0
      %1937 = vmatpush1.msra.mxu0 %v666
      %1938 = vmatprep.subr.mxu0 0.0
      %1939 = vmatpush1.msra.mxu0 %v667
      %1940 = vmatprep.subr.mxu0 0.0
      %1941 = vmatpush1.msra.mxu0 %v668
      %1942 = vmatprep.subr.mxu0 0.0
      %1943 = vmatpush1.msra.mxu0 %v669
      %1944 = vmatprep.subr.mxu0 0.0
      %1945 = vmatpush1.msra.mxu0 %v670
      %1946 = vmatprep.subr.mxu0 0.0
      %1947 = vmatpush1.msra.mxu0 %v671
      %1948 = vmatprep.subr.mxu0 0.0
      %1949 = vmatpush1.msra.mxu0 0.0
      %1950 = vmatprep.subr.mxu0 0.0
      %1951 = vmatpush1.msra.mxu0 0.0
      %1952 = vmatprep.subr.mxu0 0.0
      %1953 = vmatpush1.msra.mxu0 0.0
      %1954 = vmatprep.subr.mxu0 0.0
      %1955 = vmatpush1.msra.mxu0 0.0
      %1956 = vmatprep.subr.mxu0 0.0
      %1957 = vmatpush1.msra.mxu0 0.0
      %1958 = vmatprep.subr.mxu0 0.0
      %1959 = vmatpush1.msra.mxu0 0.0
      %1960 = vmatprep.subr.mxu0 0.0
      %1961 = vmatpush1.msra.mxu0 0.0
      %1962 = vmatprep.subr.mxu0 0.0
      %1963 = vmatpush1.msra.mxu0 0.0
      %1964 = vmatprep.subr.mxu0 0.0
      %1965 = vmatpush1.msra.mxu0 0.0
      %1966 = vmatprep.subr.mxu0 0.0
      %1967 = vmatpush1.msra.mxu0 0.0
      %1968 = vmatprep.subr.mxu0 0.0
      %1969 = vmatpush1.msra.mxu0 0.0
      %1970 = vmatprep.subr.mxu0 0.0
      %1971 = vmatpush1.msra.mxu0 0.0
      %1972 = vmatprep.subr.mxu0 0.0
      %1973 = vmatpush1.msra.mxu0 0.0
      %1974 = vmatprep.subr.mxu0 0.0
      %1975 = vmatpush1.msra.mxu0 0.0
      %1976 = vmatprep.subr.mxu0 0.0
      %1977 = vmatpush1.msra.mxu0 0.0
      %1978 = vmatprep.subr.mxu0 0.0
      %1979 = vmatpush1.msra.mxu0 0.0
      %1980 = vmatprep.subr.mxu0 0.0
      %1981 = vmatpush1.msra.mxu0 0.0
      %1982 = vmatprep.subr.mxu0 0.0
      %1983 = vmatpush1.msra.mxu0 0.0
      %1984 = vmatprep.subr.mxu0 0.0
      %1985 = vmatpush1.msra.mxu0 0.0
      %1986 = vmatprep.subr.mxu0 0.0
      %1987 = vmatpush1.msra.mxu0 0.0
      %1988 = vmatprep.subr.mxu0 0.0
      %1989 = vmatpush1.msra.mxu0 0.0
      %1990 = vmatprep.subr.mxu0 0.0
      %1991 = vmatpush1.msra.mxu0 0.0
      %1992 = vmatprep.subr.mxu0 0.0
      %1993 = vmatpush1.msra.mxu0 0.0
      %1994 = vmatprep.subr.mxu0 0.0
      %1995 = vmatpush1.msra.mxu0 0.0
      %1996 = vmatprep.mubr.f32.mxu0 0.0
      %1997 = vmatmul.mubr.f32.gmra.mrb[0].mxu0 %v1930
      %v1998 = vpop.f32.mrb[0].mxu0
      %v1999 = vadd.f32 1e-06, %v1998
      %v2000 = vpop.f32.mrb[0].mxu0
      %2001 = vdwg.mxu0
      %v2002 = vrsqrt.pop %v1999
      %2004 = vrot.lane.b32.xlu0 %v2002, 64
      %v2005 = vpop.permute.xlu0 %2004
      %v2007 = vmul.f32 %v1837, %v2005
      %s2008 = scalar_lea.vmem %s12, 1
      %v2009 = vld [vmem:[%s2008] sm:$0x1]
      %v2011 = vlaneseq
      %v2012 = vshrl.u32 %v2011, 7
      %v2013 = vsub.s32 0, %v2012
      %v2014 = vrot.slane %v2009, %v2013
      %2015 = vrot.lane.b32.xlu0 %v2014, 64
      %v2016 = vpop.permute.xlu0 %2015
      %v2018 = vmul.f32 %v2007, %v2016
      %v2019 = vmul.f32 %v1927, %v654
      %v2021 = vsel %vm714, %v1927, 0
      %2023 = vmatprep.subr.mxu0 0.0
      %2024 = vmatpush1.msra.mxu0 %v656
      %2025 = vmatprep.subr.mxu0 0.0
      %2026 = vmatpush1.msra.mxu0 %v657
      %2027 = vmatprep.subr.mxu0 0.0
      %2028 = vmatpush1.msra.mxu0 %v658
      %2029 = vmatprep.subr.mxu0 0.0
      %2030 = vmatpush1.msra.mxu0 %v659
      %2031 = vmatprep.subr.mxu0 0.0
      %2032 = vmatpush1.msra.mxu0 %v660
      %2033 = vmatprep.subr.mxu0 0.0
      %2034 = vmatpush1.msra.mxu0 %v661
      %2035 = vmatprep.subr.mxu0 0.0
      %2036 = vmatpush1.msra.mxu0 %v662
      %2037 = vmatprep.subr.mxu0 0.0
      %2038 = vmatpush1.msra.mxu0 %v663
      %2039 = vmatprep.subr.mxu0 0.0
      %2040 = vmatpush1.msra.mxu0 0.0
      %2041 = vmatprep.subr.mxu0 0.0
      %2042 = vmatpush1.msra.mxu0 0.0
      %2043 = vmatprep.subr.mxu0 0.0
      %2044 = vmatpush1.msra.mxu0 0.0
      %2045 = vmatprep.subr.mxu0 0.0
      %2046 = vmatpush1.msra.mxu0 0.0
      %2047 = vmatprep.subr.mxu0 0.0
      %2048 = vmatpush1.msra.mxu0 0.0
      %2049 = vmatprep.subr.mxu0 0.0
      %2050 = vmatpush1.msra.mxu0 0.0
      %2051 = vmatprep.subr.mxu0 0.0
      %2052 = vmatpush1.msra.mxu0 0.0
      %2053 = vmatprep.subr.mxu0 0.0
      %2054 = vmatpush1.msra.mxu0 0.0
      %2055 = vmatprep.subr.mxu0 0.0
      %2056 = vmatpush1.msra.mxu0 0.0
      %2057 = vmatprep.subr.mxu0 0.0
      %2058 = vmatpush1.msra.mxu0 0.0
      %2059 = vmatprep.subr.mxu0 0.0
      %2060 = vmatpush1.msra.mxu0 0.0
      %2061 = vmatprep.subr.mxu0 0.0
      %2062 = vmatpush1.msra.mxu0 0.0
      %2063 = vmatprep.subr.mxu0 0.0
      %2064 = vmatpush1.msra.mxu0 0.0
      %2065 = vmatprep.subr.mxu0 0.0
      %2066 = vmatpush1.msra.mxu0 0.0
      %2067 = vmatprep.subr.mxu0 0.0
      %2068 = vmatpush1.msra.mxu0 0.0
      %2069 = vmatprep.subr.mxu0 0.0
      %2070 = vmatpush1.msra.mxu0 0.0
      %2071 = vmatprep.subr.mxu0 0.0
      %2072 = vmatpush1.msra.mxu0 0.0
      %2073 = vmatprep.subr.mxu0 0.0
      %2074 = vmatpush1.msra.mxu0 0.0
      %2075 = vmatprep.subr.mxu0 0.0
      %2076 = vmatpush1.msra.mxu0 0.0
      %2077 = vmatprep.subr.mxu0 0.0
      %2078 = vmatpush1.msra.mxu0 0.0
      %2079 = vmatprep.subr.mxu0 0.0
      %2080 = vmatpush1.msra.mxu0 0.0
      %2081 = vmatprep.subr.mxu0 0.0
      %2082 = vmatpush1.msra.mxu0 0.0
      %2083 = vmatprep.subr.mxu0 0.0
      %2084 = vmatpush1.msra.mxu0 0.0
      %2085 = vmatprep.subr.mxu0 0.0
      %2086 = vmatpush1.msra.mxu0 0.0
      %2087 = vmatprep.mubr.f32.mxu0 0.0
      %2088 = vmatmul.mubr.f32.gmra.mrb[0].mxu0 %v2021
      %v2089 = vpop.f32.mrb[0].mxu0
      %v2090 = vadd.f32 0.0, %v2089
      %v2091 = vpop.f32.mrb[0].mxu0
      %2092 = vdwg.mxu0
      %v2093 = vmul.f32 %v2090, %v655
      %v2094 = vadd.f32 %v2019, %v2093
      %v2095 = vmul.f32 %v2018, %v1075
      %2097 = vrot.lane.b32.xlu0 %v2018, 64
      %v2098 = vpop.permute.xlu0 %2097
      %v2099 = vsel %vm714, %v2098, 0
      %2101 = vmatprep.subr.mxu0 0.0
      %2102 = vmatpush1.msra.mxu0 %v656
      %2103 = vmatprep.subr.mxu0 0.0
      %2104 = vmatpush1.msra.mxu0 %v657
      %2105 = vmatprep.subr.mxu0 0.0
      %2106 = vmatpush1.msra.mxu0 %v658
      %2107 = vmatprep.subr.mxu0 0.0
      %2108 = vmatpush1.msra.mxu0 %v659
      %2109 = vmatprep.subr.mxu0 0.0
      %2110 = vmatpush1.msra.mxu0 %v660
      %2111 = vmatprep.subr.mxu0 0.0
      %2112 = vmatpush1.msra.mxu0 %v661
      %2113 = vmatprep.subr.mxu0 0.0
      %2114 = vmatpush1.msra.mxu0 %v662
      %2115 = vmatprep.subr.mxu0 0.0
      %2116 = vmatpush1.msra.mxu0 %v663
      %2117 = vmatprep.subr.mxu0 0.0
      %2118 = vmatpush1.msra.mxu0 0.0
      %2119 = vmatprep.subr.mxu0 0.0
      %2120 = vmatpush1.msra.mxu0 0.0
      %2121 = vmatprep.subr.mxu0 0.0
      %2122 = vmatpush1.msra.mxu0 0.0
      %2123 = vmatprep.subr.mxu0 0.0
      %2124 = vmatpush1.msra.mxu0 0.0
      %2125 = vmatprep.subr.mxu0 0.0
      %2126 = vmatpush1.msra.mxu0 0.0
      %2127 = vmatprep.subr.mxu0 0.0
      %2128 = vmatpush1.msra.mxu0 0.0
      %2129 = vmatprep.subr.mxu0 0.0
      %2130 = vmatpush1.msra.mxu0 0.0
      %2131 = vmatprep.subr.mxu0 0.0
      %2132 = vmatpush1.msra.mxu0 0.0
      %2133 = vmatprep.subr.mxu0 0.0
      %2134 = vmatpush1.msra.mxu0 0.0
      %2135 = vmatprep.subr.mxu0 0.0
      %2136 = vmatpush1.msra.mxu0 0.0
      %2137 = vmatprep.subr.mxu0 0.0
      %2138 = vmatpush1.msra.mxu0 0.0
      %2139 = vmatprep.subr.mxu0 0.0
      %2140 = vmatpush1.msra.mxu0 0.0
      %2141 = vmatprep.subr.mxu0 0.0
      %2142 = vmatpush1.msra.mxu0 0.0
      %2143 = vmatprep.subr.mxu0 0.0
      %2144 = vmatpush1.msra.mxu0 0.0
      %2145 = vmatprep.subr.mxu0 0.0
      %2146 = vmatpush1.msra.mxu0 0.0
      %2147 = vmatprep.subr.mxu0 0.0
      %2148 = vmatpush1.msra.mxu0 0.0
      %2149 = vmatprep.subr.mxu0 0.0
      %2150 = vmatpush1.msra.mxu0 0.0
      %2151 = vmatprep.subr.mxu0 0.0
      %2152 = vmatpush1.msra.mxu0 0.0
      %2153 = vmatprep.subr.mxu0 0.0
      %2154 = vmatpush1.msra.mxu0 0.0
      %2155 = vmatprep.subr.mxu0 0.0
      %2156 = vmatpush1.msra.mxu0 0.0
      %2157 = vmatprep.subr.mxu0 0.0
      %2158 = vmatpush1.msra.mxu0 0.0
      %2159 = vmatprep.subr.mxu0 0.0
      %2160 = vmatpush1.msra.mxu0 0.0
      %2161 = vmatprep.subr.mxu0 0.0
      %2162 = vmatpush1.msra.mxu0 0.0
      %2163 = vmatprep.subr.mxu0 0.0
      %2164 = vmatpush1.msra.mxu0 0.0
      %2165 = vmatprep.mubr.f32.mxu0 0.0
      %2166 = vmatmul.mubr.f32.gmra.mrb[0].mxu0 %v2099
      %v2167 = vpop.f32.mrb[0].mxu0
      %v2168 = vadd.f32 0.0, %v2167
      %v2169 = vpop.f32.mrb[0].mxu0
      %2170 = vdwg.mxu0
      %v2171 = vmul.f32 %v2168, %v655
      %2173 = vrot.lane.b32.xlu0 %v2171, 64
      %v2174 = vpop.permute.xlu0 %2173
      %v2176 = vadd.f32 %v2095, %v2174
      %v2177 = vmul.f32 %v2176, %v1164
      %v2178 = vmul.f32 %v2176, %v1166
      %v2179 = vmul.f32 %v2176, %v1168
      %v2180 = vmul.f32 %v2176, %v1170
      %v2181 = vmul.f32 %v1839, %v672
      %v2182 = vmul.f32 %v1839, %v673
      %v2183 = vmul.f32 %v1839, %v674
      %v2184 = vmul.f32 %v1839, %v675
      %2189 = vrot.lane.b32.xlu0 %v2177, 64
      %v2190 = vpop.permute.xlu0 %2189
      %2191 = vrot.lane.b32.xlu0 %v2178, 64
      %v2192 = vpop.permute.xlu0 %2191
      %2193 = vrot.lane.b32.xlu0 %v2179, 64
      %v2194 = vpop.permute.xlu0 %2193
      %2195 = vrot.lane.b32.xlu0 %v2180, 64
      %v2196 = vpop.permute.xlu0 %2195
      %v2198 = vsel %vm714, %v2094, 0
      %v2200 = vsel %vm714, %v2190, 0
      %v2202 = vsel %vm714, %v2192, 0
      %v2204 = vsel %vm714, %v2194, 0
      %v2206 = vsel %vm714, %v2196, 0
      %2208 = vmatprep.subr.mxu0 0.0
      %2209 = vmatpush1.xpose.msra.mxu0 %v2200
      %2210 = vmatprep.subr.mxu0 0.0
      %2211 = vmatpush1.xpose.msra.mxu0 %v2202
      %2212 = vmatprep.subr.mxu0 0.0
      %2213 = vmatpush1.xpose.msra.mxu0 %v2204
      %2214 = vmatprep.subr.mxu0 0.0
      %2215 = vmatpush1.xpose.msra.mxu0 %v2206
      %2216 = vmatprep.subr.mxu0 0.0
      %2217 = vmatpush1.xpose.msra.mxu0 0.0
      %2218 = vmatprep.subr.mxu0 0.0
      %2219 = vmatpush1.xpose.msra.mxu0 0.0
      %2220 = vmatprep.subr.mxu0 0.0
      %2221 = vmatpush1.xpose.msra.mxu0 0.0
      %2222 = vmatprep.subr.mxu0 0.0
      %2223 = vmatpush1.xpose.msra.mxu0 0.0
      %2224 = vmatprep.subr.mxu0 0.0
      %2225 = vmatpush1.xpose.msra.mxu0 0.0
      %2226 = vmatprep.subr.mxu0 0.0
      %2227 = vmatpush1.xpose.msra.mxu0 0.0
      %2228 = vmatprep.subr.mxu0 0.0
      %2229 = vmatpush1.xpose.msra.mxu0 0.0
      %2230 = vmatprep.subr.mxu0 0.0
      %2231 = vmatpush1.xpose.msra.mxu0 0.0
      %2232 = vmatprep.subr.mxu0 0.0
      %2233 = vmatpush1.xpose.msra.mxu0 0.0
      %2234 = vmatprep.subr.mxu0 0.0
      %2235 = vmatpush1.xpose.msra.mxu0 0.0
      %2236 = vmatprep.subr.mxu0 0.0
      %2237 = vmatpush1.xpose.msra.mxu0 0.0
      %2238 = vmatprep.subr.mxu0 0.0
      %2239 = vmatpush1.xpose.msra.mxu0 0.0
      %2240 = vmatprep.subr.mxu0 0.0
      %2241 = vmatpush1.xpose.msra.mxu0 0.0
      %2242 = vmatprep.subr.mxu0 0.0
      %2243 = vmatpush1.xpose.msra.mxu0 0.0
      %2244 = vmatprep.subr.mxu0 0.0
      %2245 = vmatpush1.xpose.msra.mxu0 0.0
      %2246 = vmatprep.subr.mxu0 0.0
      %2247 = vmatpush1.xpose.msra.mxu0 0.0
      %2248 = vmatprep.subr.mxu0 0.0
      %2249 = vmatpush1.xpose.msra.mxu0 0.0
      %2250 = vmatprep.subr.mxu0 0.0
      %2251 = vmatpush1.xpose.msra.mxu0 0.0
      %2252 = vmatprep.subr.mxu0 0.0
      %2253 = vmatpush1.xpose.msra.mxu0 0.0
      %2254 = vmatprep.subr.mxu0 0.0
      %2255 = vmatpush1.xpose.msra.mxu0 0.0
      %2256 = vmatprep.subr.mxu0 0.0
      %2257 = vmatpush1.xpose.msra.mxu0 0.0
      %2258 = vmatprep.subr.mxu0 0.0
      %2259 = vmatpush1.xpose.msra.mxu0 0.0
      %2260 = vmatprep.subr.mxu0 0.0
      %2261 = vmatpush1.xpose.msra.mxu0 0.0
      %2262 = vmatprep.subr.mxu0 0.0
      %2263 = vmatpush1.xpose.msra.mxu0 0.0
      %2264 = vmatprep.subr.mxu0 0.0
      %2265 = vmatpush1.xpose.msra.mxu0 0.0
      %2266 = vmatprep.subr.mxu0 0.0
      %2267 = vmatpush1.xpose.msra.mxu0 0.0
      %2268 = vmatprep.subr.mxu0 0.0
      %2269 = vmatpush1.xpose.msra.mxu0 0.0
      %2270 = vmatprep.subr.mxu0 0.0
      %2271 = vmatpush1.xpose.msra.mxu0 0.0
      %2272 = vmatprep.mubr.f32.mxu0 0.0
      %2273 = vmatmul.mubr.f32.gmra.mrb[0].mxu0 %v2198
      %v2274 = vpop.f32.mrb[0].mxu0
      %v2275 = vadd.f32 0.0, %v2274
      %v2276 = vpop.f32.mrb[0].mxu0
      %2277 = vdwg.mxu0
      %v2278 = vsel %vm1276, %v2275, -1e+09
      %v2279 = vsel %vm1278, %v2278, -inf
      %2280 = vmax.xlane.f32.xlu0 %v2279
      %v2281 = vpop.xlane.xlu0 %2280
      %v2282 = vsub.f32 %v2278, %v2281
      %v2283 = vmul.f32 %v2282, 1.442695
      %v2284 = vpow.pop %v2283
      %v2286 = vsel %vm1278, %v2284, 0
      %2288 = vmatprep.subr.mxu0 0.0
      %2289 = vmatpush1.msra.mxu0 %v676
      %2290 = vmatprep.subr.mxu0 0.0
      %2291 = vmatpush1.msra.mxu0 %v677
      %2292 = vmatprep.subr.mxu0 0.0
      %2293 = vmatpush1.msra.mxu0 %v678
      %2294 = vmatprep.subr.mxu0 0.0
      %2295 = vmatpush1.msra.mxu0 %v679
      %2296 = vmatprep.subr.mxu0 0.0
      %2297 = vmatpush1.msra.mxu0 0.0
      %2298 = vmatprep.subr.mxu0 0.0
      %2299 = vmatpush1.msra.mxu0 0.0
      %2300 = vmatprep.subr.mxu0 0.0
      %2301 = vmatpush1.msra.mxu0 0.0
      %2302 = vmatprep.subr.mxu0 0.0
      %2303 = vmatpush1.msra.mxu0 0.0
      %2304 = vmatprep.subr.mxu0 0.0
      %2305 = vmatpush1.msra.mxu0 0.0
      %2306 = vmatprep.subr.mxu0 0.0
      %2307 = vmatpush1.msra.mxu0 0.0
      %2308 = vmatprep.subr.mxu0 0.0
      %2309 = vmatpush1.msra.mxu0 0.0
      %2310 = vmatprep.subr.mxu0 0.0
      %2311 = vmatpush1.msra.mxu0 0.0
      %2312 = vmatprep.subr.mxu0 0.0
      %2313 = vmatpush1.msra.mxu0 0.0
      %2314 = vmatprep.subr.mxu0 0.0
      %2315 = vmatpush1.msra.mxu0 0.0
      %2316 = vmatprep.subr.mxu0 0.0
      %2317 = vmatpush1.msra.mxu0 0.0
      %2318 = vmatprep.subr.mxu0 0.0
      %2319 = vmatpush1.msra.mxu0 0.0
      %2320 = vmatprep.subr.mxu0 0.0
      %2321 = vmatpush1.msra.mxu0 0.0
      %2322 = vmatprep.subr.mxu0 0.0
      %2323 = vmatpush1.msra.mxu0 0.0
      %2324 = vmatprep.subr.mxu0 0.0
      %2325 = vmatpush1.msra.mxu0 0.0
      %2326 = vmatprep.subr.mxu0 0.0
      %2327 = vmatpush1.msra.mxu0 0.0
      %2328 = vmatprep.subr.mxu0 0.0
      %2329 = vmatpush1.msra.mxu0 0.0
      %2330 = vmatprep.subr.mxu0 0.0
      %2331 = vmatpush1.msra.mxu0 0.0
      %2332 = vmatprep.subr.mxu0 0.0
      %2333 = vmatpush1.msra.mxu0 0.0
      %2334 = vmatprep.subr.mxu0 0.0
      %2335 = vmatpush1.msra.mxu0 0.0
      %2336 = vmatprep.subr.mxu0 0.0
      %2337 = vmatpush1.msra.mxu0 0.0
      %2338 = vmatprep.subr.mxu0 0.0
      %2339 = vmatpush1.msra.mxu0 0.0
      %2340 = vmatprep.subr.mxu0 0.0
      %2341 = vmatpush1.msra.mxu0 0.0
      %2342 = vmatprep.subr.mxu0 0.0
      %2343 = vmatpush1.msra.mxu0 0.0
      %2344 = vmatprep.subr.mxu0 0.0
      %2345 = vmatpush1.msra.mxu0 0.0
      %2346 = vmatprep.subr.mxu0 0.0
      %2347 = vmatpush1.msra.mxu0 0.0
      %2348 = vmatprep.subr.mxu0 0.0
      %2349 = vmatpush1.msra.mxu0 0.0
      %2350 = vmatprep.subr.mxu0 0.0
      %2351 = vmatpush1.msra.mxu0 0.0
      %2352 = vmatprep.mubr.f32.mxu0 0.0
      %2353 = vmatmul.mubr.f32.gmra.mrb[0].mxu0 %v2286
      %v2354 = vpop.f32.mrb[0].mxu0
      %v2355 = vadd.f32 0.0, %v2354
      %v2356 = vpop.f32.mrb[0].mxu0
      %2357 = vdwg.mxu0
      %v2358 = vrcp.pop %v2355
      %v2359 = vmul.f32 %v2284, %v2358
      %v2361 = vsel %vm1278, %v2359, 0
      %2363 = vmatprep.subr.mxu0 0.0
      %2364 = vmatpush1.msra.mxu0 %v2181
      %2365 = vmatprep.subr.mxu0 0.0
      %2366 = vmatpush1.msra.mxu0 %v2182
      %2367 = vmatprep.subr.mxu0 0.0
      %2368 = vmatpush1.msra.mxu0 %v2183
      %2369 = vmatprep.subr.mxu0 0.0
      %2370 = vmatpush1.msra.mxu0 %v2184
      %2371 = vmatprep.subr.mxu0 0.0
      %2372 = vmatpush1.msra.mxu0 0.0
      %2373 = vmatprep.subr.mxu0 0.0
      %2374 = vmatpush1.msra.mxu0 0.0
      %2375 = vmatprep.subr.mxu0 0.0
      %2376 = vmatpush1.msra.mxu0 0.0
      %2377 = vmatprep.subr.mxu0 0.0
      %2378 = vmatpush1.msra.mxu0 0.0
      %2379 = vmatprep.subr.mxu0 0.0
      %2380 = vmatpush1.msra.mxu0 0.0
      %2381 = vmatprep.subr.mxu0 0.0
      %2382 = vmatpush1.msra.mxu0 0.0
      %2383 = vmatprep.subr.mxu0 0.0
      %2384 = vmatpush1.msra.mxu0 0.0
      %2385 = vmatprep.subr.mxu0 0.0
      %2386 = vmatpush1.msra.mxu0 0.0
      %2387 = vmatprep.subr.mxu0 0.0
      %2388 = vmatpush1.msra.mxu0 0.0
      %2389 = vmatprep.subr.mxu0 0.0
      %2390 = vmatpush1.msra.mxu0 0.0
      %2391 = vmatprep.subr.mxu0 0.0
      %2392 = vmatpush1.msra.mxu0 0.0
      %2393 = vmatprep.subr.mxu0 0.0
      %2394 = vmatpush1.msra.mxu0 0.0
      %2395 = vmatprep.subr.mxu0 0.0
      %2396 = vmatpush1.msra.mxu0 0.0
      %2397 = vmatprep.subr.mxu0 0.0
      %2398 = vmatpush1.msra.mxu0 0.0
      %2399 = vmatprep.subr.mxu0 0.0
      %2400 = vmatpush1.msra.mxu0 0.0
      %2401 = vmatprep.subr.mxu0 0.0
      %2402 = vmatpush1.msra.mxu0 0.0
      %2403 = vmatprep.subr.mxu0 0.0
      %2404 = vmatpush1.msra.mxu0 0.0
      %2405 = vmatprep.subr.mxu0 0.0
      %2406 = vmatpush1.msra.mxu0 0.0
      %2407 = vmatprep.subr.mxu0 0.0
      %2408 = vmatpush1.msra.mxu0 0.0
      %2409 = vmatprep.subr.mxu0 0.0
      %2410 = vmatpush1.msra.mxu0 0.0
      %2411 = vmatprep.subr.mxu0 0.0
      %2412 = vmatpush1.msra.mxu0 0.0
      %2413 = vmatprep.subr.mxu0 0.0
      %2414 = vmatpush1.msra.mxu0 0.0
      %2415 = vmatprep.subr.mxu0 0.0
      %2416 = vmatpush1.msra.mxu0 0.0
      %2417 = vmatprep.subr.mxu0 0.0
      %2418 = vmatpush1.msra.mxu0 0.0
      %2419 = vmatprep.subr.mxu0 0.0
      %2420 = vmatpush1.msra.mxu0 0.0
      %2421 = vmatprep.subr.mxu0 0.0
      %2422 = vmatpush1.msra.mxu0 0.0
      %2423 = vmatprep.subr.mxu0 0.0
      %2424 = vmatpush1.msra.mxu0 0.0
      %2425 = vmatprep.subr.mxu0 0.0
      %2426 = vmatpush1.msra.mxu0 0.0
      %2427 = vmatprep.mubr.f32.mxu0 0.0
      %2428 = vmatmul.mubr.f32.gmra.mrb[0].mxu0 %v2361
      %v2429 = vpop.f32.mrb[0].mxu0
      %v2430 = vadd.f32 0.0, %v2429
      %v2431 = vpop.f32.mrb[0].mxu0
      %2432 = vdwg.mxu0
      %v2433 = vpack.c.bf16 %v2430, %v2430
      %s2434 = scalar_lea.vmem %s13, 32
      %v2435 = vld [vmem:[%s2434] sm:$0xf]
      %v2436 = vld [vmem:[%s2434 + $0x4] sm:$0xf]
      %v2437 = vld [vmem:[%s2434 + $0x8] sm:$0xf]
      %v2438 = vld [vmem:[%s2434 + $0xc] sm:$0xf]
      %v2439 = vld [vmem:[%s2434 + $0x10] sm:$0xf]
      %v2440 = vld [vmem:[%s2434 + $0x14] sm:$0xf]
      %v2441 = vld [vmem:[%s2434 + $0x18] sm:$0xf]
      %v2442 = vld [vmem:[%s2434 + $0x1c] sm:$0xf]
      %v2451 = vunpack.c.l.b16 %v2435
      %v2452 = vunpack.c.l.b16 %v2436
      %v2453 = vunpack.c.l.b16 %v2437
      %v2454 = vunpack.c.l.b16 %v2438
      %v2455 = vunpack.c.l.b16 %v2439
      %v2456 = vunpack.c.l.b16 %v2440
      %v2457 = vunpack.c.l.b16 %v2441
      %v2458 = vunpack.c.l.b16 %v2442
      %v2459 = vpack.c.b16 %v2452, %v2451
      %v2460 = vpack.c.b16 %v2454, %v2453
      %v2461 = vpack.c.b16 %v2456, %v2455
      %v2462 = vpack.c.b16 %v2458, %v2457
      %v2468 = vsel %vm714, %v2433, 0
      %2470 = vmatprep.subr.bf16.mxu0 0
      %2471 = vmatpush1.bf16.msra.mxu0 %v2459
      %2472 = vmatprep.subr.bf16.mxu0 0
      %2473 = vmatpush1.bf16.msra.mxu0 %v2460
      %2474 = vmatprep.subr.bf16.mxu0 0
      %2475 = vmatpush1.bf16.msra.mxu0 %v2461
      %2476 = vmatprep.subr.bf16.mxu0 0
      %2477 = vmatpush1.bf16.msra.mxu0 %v2462
      %2478 = vmatprep.subr.bf16.mxu0 0
      %2479 = vmatpush1.bf16.msra.mxu0 0
      %2480 = vmatprep.subr.bf16.mxu0 0
      %2481 = vmatpush1.bf16.msra.mxu0 0
      %2482 = vmatprep.subr.bf16.mxu0 0
      %2483 = vmatpush1.bf16.msra.mxu0 0
      %2484 = vmatprep.subr.bf16.mxu0 0
      %2485 = vmatpush1.bf16.msra.mxu0 0
      %2486 = vmatprep.subr.bf16.mxu0 0
      %2487 = vmatpush1.bf16.msra.mxu0 0
      %2488 = vmatprep.subr.bf16.mxu0 0
      %2489 = vmatpush1.bf16.msra.mxu0 0
      %2490 = vmatprep.subr.bf16.mxu0 0
      %2491 = vmatpush1.bf16.msra.mxu0 0
      %2492 = vmatprep.subr.bf16.mxu0 0
      %2493 = vmatpush1.bf16.msra.mxu0 0
      %2494 = vmatprep.subr.bf16.mxu0 0
      %2495 = vmatpush1.bf16.msra.mxu0 0
      %2496 = vmatprep.subr.bf16.mxu0 0
      %2497 = vmatpush1.bf16.msra.mxu0 0
      %2498 = vmatprep.subr.bf16.mxu0 0
      %2499 = vmatpush1.bf16.msra.mxu0 0
      %2500 = vmatprep.subr.bf16.mxu0 0
      %2501 = vmatpush1.bf16.msra.mxu0 0
      %2502 = vmatprep.mubr.bf16.mxu0 0
      %2503 = vmatmul.mubr.bf16.gmra.mrb[0].mxu0 %v2468
      %v2504 = vpop.f32.mrb[0].mxu0
      %v2505 = vadd.f32 0.0, %v2504
      %v2506 = vpop.f32.mrb[0].mxu0
      %v2507 = vpop.f32.mrb[0].mxu0
      %v2508 = vpop.f32.mrb[0].mxu0
      %2509 = vdwg.mxu0
      %v2510 = vadd.f32 %v1731, %v2505
      %s2511 = scalar_lea.vmem %s14, 1
      %v2512 = vld [vmem:[%s2511] sm:$0x1]
      %v2513 = vmul.f32 %v2510, %v2510
      %v2514 = vsel %vm714, %v2513, 0.0
      %2515 = vadd.xlane.f32.xlu0 %v2514
      %v2516 = vpop.xlane.xlu0 %2515
      %v2517 = vmul.f32 %v2516, %v718
      %v2518 = vadd.f32 %v2517, 1e-06
      %v2519 = vrsqrt.pop %v2518
      %v2520 = vmul.f32 %v2510, %v2519
      %v2522 = vlaneseq
      %v2523 = vshrl.u32 %v2522, 7
      %v2524 = vsub.s32 0, %v2523
      %v2525 = vrot.slane %v2512, %v2524
      %v2527 = vmul.f32 %v2520, %v2525
      %v2528 = vpack.c.bf16 %v2527, %v2527
      %s2529 = scalar_lea.vmem %s15, 64
      %v2530 = vld [vmem:[%s2529] sm:$0xff]
      %v2531 = vld [vmem:[%s2529 + $0x8] sm:$0xff]
      %v2532 = vld [vmem:[%s2529 + $0x10] sm:$0xff]
      %v2533 = vld [vmem:[%s2529 + $0x18] sm:$0xff]
      %v2534 = vld [vmem:[%s2529 + $0x20] sm:$0xff]
      %v2535 = vld [vmem:[%s2529 + $0x28] sm:$0xff]
      %v2536 = vld [vmem:[%s2529 + $0x30] sm:$0xff]
      %v2537 = vld [vmem:[%s2529 + $0x38] sm:$0xff]
      %v2546 = vunpack.c.l.b16 %v2530
      %v2547 = vunpack.c.h.b16 %v2530
      %v2548 = vunpack.c.l.b16 %v2531
      %v2549 = vunpack.c.h.b16 %v2531
      %v2550 = vunpack.c.l.b16 %v2532
      %v2551 = vunpack.c.h.b16 %v2532
      %v2552 = vunpack.c.l.b16 %v2533
      %v2553 = vunpack.c.h.b16 %v2533
      %v2554 = vunpack.c.l.b16 %v2534
      %v2555 = vunpack.c.h.b16 %v2534
      %v2556 = vunpack.c.l.b16 %v2535
      %v2557 = vunpack.c.h.b16 %v2535
      %v2558 = vunpack.c.l.b16 %v2536
      %v2559 = vunpack.c.h.b16 %v2536
      %v2560 = vunpack.c.l.b16 %v2537
      %v2561 = vunpack.c.h.b16 %v2537
      %v2562 = vpack.c.b16 %v2548, %v2546
      %v2563 = vpack.c.b16 %v2549, %v2547
      %v2564 = vpack.c.b16 %v2552, %v2550
      %v2565 = vpack.c.b16 %v2553, %v2551
      %v2566 = vpack.c.b16 %v2556, %v2554
      %v2567 = vpack.c.b16 %v2557, %v2555
      %v2568 = vpack.c.b16 %v2560, %v2558
      %v2569 = vpack.c.b16 %v2561, %v2559
      %v2579 = vsel %vm714, %v2528, 0
      %2581 = vmatprep.subr.bf16.mxu0 %v2563
      %2582 = vmatpush1.bf16.msra.mxu0 %v2562
      %2583 = vmatprep.subr.bf16.mxu0 %v2565
      %2584 = vmatpush1.bf16.msra.mxu0 %v2564
      %2585 = vmatprep.subr.bf16.mxu0 %v2567
      %2586 = vmatpush1.bf16.msra.mxu0 %v2566
      %2587 = vmatprep.subr.bf16.mxu0 %v2569
      %2588 = vmatpush1.bf16.msra.mxu0 %v2568
      %2589 = vmatprep.subr.bf16.mxu0 0
      %2590 = vmatpush1.bf16.msra.mxu0 0
      %2591 = vmatprep.subr.bf16.mxu0 0
      %2592 = vmatpush1.bf16.msra.mxu0 0
      %2593 = vmatprep.subr.bf16.mxu0 0
      %2594 = vmatpush1.bf16.msra.mxu0 0
      %2595 = vmatprep.subr.bf16.mxu0 0
      %2596 = vmatpush1.bf16.msra.mxu0 0
      %2597 = vmatprep.subr.bf16.mxu0 0
      %2598 = vmatpush1.bf16.msra.mxu0 0
      %2599 = vmatprep.subr.bf16.mxu0 0
      %2600 = vmatpush1.bf16.msra.mxu0 0
      %2601 = vmatprep.subr.bf16.mxu0 0
      %2602 = vmatpush1.bf16.msra.mxu0 0
      %2603 = vmatprep.subr.bf16.mxu0 0
      %2604 = vmatpush1.bf16.msra.mxu0 0
      %2605 = vmatprep.subr.bf16.mxu0 0
      %2606 = vmatpush1.bf16.msra.mxu0 0
      %2607 = vmatprep.subr.bf16.mxu0 0
      %2608 = vmatpush1.bf16.msra.mxu0 0
      %2609 = vmatprep.subr.bf16.mxu0 0
      %2610 = vmatpush1.bf16.msra.mxu0 0
      %2611 = vmatprep.subr.bf16.mxu0 0
      %2612 = vmatpush1.bf16.msra.mxu0 0
      %2613 = vmatprep.mubr.bf16.mxu0 0
      %2614 = vmatmul.mubr.bf16.gmra.mrb[0].mxu0 %v2579
      %v2615 = vpop.f32.mrb[0].mxu0
      %v2616 = vadd.f32 0.0, %v2615
      %v2617 = vpop.f32.mrb[0].mxu0
      %v2618 = vadd.f32 0.0, %v2617
      %v2619 = vpop.f32.mrb[0].mxu0
      %v2620 = vpop.f32.mrb[0].mxu0
      %2621 = vdwg.mxu0
      %v2622 = vsub.f32 0.0, %v2616
      %v2623 = vmul.f32 %v2622, 1.442695
      %v2624 = vpow.pop %v2623
      %v2625 = vadd.f32 %v2624, 1.0
      %v2626 = vrcp.pop %v2625
      %v2627 = vmul.f32 %v2616, %v2626
      %v2628 = vmul.f32 %v2627, %v2618
      %v2629 = vpack.c.bf16 %v2628, %v2628
      %s2630 = scalar_lea.vmem %s16, 64
      %v2631 = vld [vmem:[%s2630] sm:$0xf]
      %v2632 = vld [vmem:[%s2630 + $0x4] sm:$0xf]
      %v2633 = vld [vmem:[%s2630 + $0x8] sm:$0xf]
      %v2634 = vld [vmem:[%s2630 + $0xc] sm:$0xf]
      %v2635 = vld [vmem:[%s2630 + $0x10] sm:$0xf]
      %v2636 = vld [vmem:[%s2630 + $0x14] sm:$0xf]
      %v2637 = vld [vmem:[%s2630 + $0x18] sm:$0xf]
      %v2638 = vld [vmem:[%s2630 + $0x1c] sm:$0xf]
      %v2639 = vld [vmem:[%s2630 + $0x20] sm:$0xf]
      %v2640 = vld [vmem:[%s2630 + $0x24] sm:$0xf]
      %v2641 = vld [vmem:[%s2630 + $0x28] sm:$0xf]
      %v2642 = vld [vmem:[%s2630 + $0x2c] sm:$0xf]
      %v2643 = vld [vmem:[%s2630 + $0x30] sm:$0xf]
      %v2644 = vld [vmem:[%s2630 + $0x34] sm:$0xf]
      %v2645 = vld [vmem:[%s2630 + $0x38] sm:$0xf]
      %v2646 = vld [vmem:[%s2630 + $0x3c] sm:$0xf]
      %v2663 = vunpack.c.l.b16 %v2631
      %v2664 = vunpack.c.l.b16 %v2632
      %v2665 = vunpack.c.l.b16 %v2633
      %v2666 = vunpack.c.l.b16 %v2634
      %v2667 = vunpack.c.l.b16 %v2635
      %v2668 = vunpack.c.l.b16 %v2636
      %v2669 = vunpack.c.l.b16 %v2637
      %v2670 = vunpack.c.l.b16 %v2638
      %v2671 = vunpack.c.l.b16 %v2639
      %v2672 = vunpack.c.l.b16 %v2640
      %v2673 = vunpack.c.l.b16 %v2641
      %v2674 = vunpack.c.l.b16 %v2642
      %v2675 = vunpack.c.l.b16 %v2643
      %v2676 = vunpack.c.l.b16 %v2644
      %v2677 = vunpack.c.l.b16 %v2645
      %v2678 = vunpack.c.l.b16 %v2646
      %v2679 = vpack.c.b16 %v2664, %v2663
      %v2680 = vpack.c.b16 %v2666, %v2665
      %v2681 = vpack.c.b16 %v2668, %v2667
      %v2682 = vpack.c.b16 %v2670, %v2669
      %v2683 = vpack.c.b16 %v2672, %v2671
      %v2684 = vpack.c.b16 %v2674, %v2673
      %v2685 = vpack.c.b16 %v2676, %v2675
      %v2686 = vpack.c.b16 %v2678, %v2677
      %2695 = vmatprep.subr.bf16.mxu0 0
      %2696 = vmatpush1.bf16.msra.mxu0 %v2679
      %2697 = vmatprep.subr.bf16.mxu0 0
      %2698 = vmatpush1.bf16.msra.mxu0 %v2680
      %2699 = vmatprep.subr.bf16.mxu0 0
      %2700 = vmatpush1.bf16.msra.mxu0 %v2681
      %2701 = vmatprep.subr.bf16.mxu0 0
      %2702 = vmatpush1.bf16.msra.mxu0 %v2682
      %2703 = vmatprep.subr.bf16.mxu0 0
      %2704 = vmatpush1.bf16.msra.mxu0 %v2683
      %2705 = vmatprep.subr.bf16.mxu0 0
      %2706 = vmatpush1.bf16.msra.mxu0 %v2684
      %2707 = vmatprep.subr.bf16.mxu0 0
      %2708 = vmatpush1.bf16.msra.mxu0 %v2685
      %2709 = vmatprep.subr.bf16.mxu0 0
      %2710 = vmatpush1.bf16.msra.mxu0 %v2686
      %2711 = vmatprep.subr.bf16.mxu0 0
      %2712 = vmatpush1.bf16.msra.mxu0 0
      %2713 = vmatprep.subr.bf16.mxu0 0
      %2714 = vmatpush1.bf16.msra.mxu0 0
      %2715 = vmatprep.subr.bf16.mxu0 0
      %2716 = vmatpush1.bf16.msra.mxu0 0
      %2717 = vmatprep.subr.bf16.mxu0 0
      %2718 = vmatpush1.bf16.msra.mxu0 0
      %2719 = vmatprep.subr.bf16.mxu0 0
      %2720 = vmatpush1.bf16.msra.mxu0 0
      %2721 = vmatprep.subr.bf16.mxu0 0
      %2722 = vmatpush1.bf16.msra.mxu0 0
      %2723 = vmatprep.subr.bf16.mxu0 0
      %2724 = vmatpush1.bf16.msra.mxu0 0
      %2725 = vmatprep.subr.bf16.mxu0 0
      %2726 = vmatpush1.bf16.msra.mxu0 0
      %2727 = vmatprep.mubr.bf16.mxu0 0
      %2728 = vmatmul.mubr.bf16.gmra.mrb[0].mxu0 %v2629
      %v2729 = vpop.f32.mrb[0].mxu0
      %v2730 = vadd.f32 0.0, %v2729
      %v2731 = vpop.f32.mrb[0].mxu0
      %v2732 = vpop.f32.mrb[0].mxu0
      %v2733 = vpop.f32.mrb[0].mxu0
      %2734 = vdwg.mxu0
      %v2735 = vadd.f32 %v2510, %v2730
      %v2736 = vld [vmem:[%s17] sm:$0x1]
      %v2737 = vmul.f32 %v2735, %v2735
      %v2738 = vsel %vm714, %v2737, 0.0
      %2739 = vadd.xlane.f32.xlu0 %v2738
      %v2740 = vpop.xlane.xlu0 %2739
      %v2741 = vmul.f32 %v2740, %v718
      %v2742 = vadd.f32 %v2741, 1e-06
      %v2743 = vrsqrt.pop %v2742
      %v2744 = vmul.f32 %v2735, %v2743
      %v2746 = vlaneseq
      %v2747 = vshrl.u32 %v2746, 7
      %v2748 = vsub.s32 0, %v2747
      %v2749 = vrot.slane %v2736, %v2748
      %v2751 = vmul.f32 %v2744, %v2749
      %vm2752 = vcmask 57344
      %v2753 = vsel %vm2752, %v680, 0.0
      %2754 = vadd.xlane.f32.xlu0 %v2753
      %v2755 = vpop.xlane.xlu0 %2754
      %v2756 = vsub.f32 %v2755, 1.0
      %v2757 = vcvt.s32.f32 %v684
      %vm2758 = vcmp.eq.f32.partialorder %v2757, %v2756
      %v2759 = vsel %vm2758, 1, 0
      %v2760 = vcvt.s32.f32 %v2759
      %v2762 = vsel %vm705, %v2760, 0
      %2764 = vmatprep.subr.mxu0 0.0
      %2765 = vmatpush1.msra.mxu0 %v2751
      %2766 = vmatprep.subr.mxu0 0.0
      %2767 = vmatpush1.msra.mxu0 0.0
      %2768 = vmatprep.subr.mxu0 0.0
      %2769 = vmatpush1.msra.mxu0 0.0
      %2770 = vmatprep.subr.mxu0 0.0
      %2771 = vmatpush1.msra.mxu0 0.0
      %2772 = vmatprep.subr.mxu0 0.0
      %2773 = vmatpush1.msra.mxu0 0.0
      %2774 = vmatprep.subr.mxu0 0.0
      %2775 = vmatpush1.msra.mxu0 0.0
      %2776 = vmatprep.subr.mxu0 0.0
      %2777 = vmatpush1.msra.mxu0 0.0
      %2778 = vmatprep.subr.mxu0 0.0
      %2779 = vmatpush1.msra.mxu0 0.0
      %2780 = vmatprep.subr.mxu0 0.0
      %2781 = vmatpush1.msra.mxu0 0.0
      %2782 = vmatprep.subr.mxu0 0.0
      %2783 = vmatpush1.msra.mxu0 0.0
      %2784 = vmatprep.subr.mxu0 0.0
      %2785 = vmatpush1.msra.mxu0 0.0
      %2786 = vmatprep.subr.mxu0 0.0
      %2787 = vmatpush1.msra.mxu0 0.0
      %2788 = vmatprep.subr.mxu0 0.0
      %2789 = vmatpush1.msra.mxu0 0.0
      %2790 = vmatprep.subr.mxu0 0.0
      %2791 = vmatpush1.msra.mxu0 0.0
      %2792 = vmatprep.subr.mxu0 0.0
      %2793 = vmatpush1.msra.mxu0 0.0
      %2794 = vmatprep.subr.mxu0 0.0
      %2795 = vmatpush1.msra.mxu0 0.0
      %2796 = vmatprep.subr.mxu0 0.0
      %2797 = vmatpush1.msra.mxu0 0.0
      %2798 = vmatprep.subr.mxu0 0.0
      %2799 = vmatpush1.msra.mxu0 0.0
      %2800 = vmatprep.subr.mxu0 0.0
      %2801 = vmatpush1.msra.mxu0 0.0
      %2802 = vmatprep.subr.mxu0 0.0
      %2803 = vmatpush1.msra.mxu0 0.0
      %2804 = vmatprep.subr.mxu0 0.0
      %2805 = vmatpush1.msra.mxu0 0.0
      %2806 = vmatprep.subr.mxu0 0.0
      %2807 = vmatpush1.msra.mxu0 0.0
      %2808 = vmatprep.subr.mxu0 0.0
      %2809 = vmatpush1.msra.mxu0 0.0
      %2810 = vmatprep.subr.mxu0 0.0
      %2811 = vmatpush1.msra.mxu0 0.0
      %2812 = vmatprep.subr.mxu0 0.0
      %2813 = vmatpush1.msra.mxu0 0.0
      %2814 = vmatprep.subr.mxu0 0.0
      %2815 = vmatpush1.msra.mxu0 0.0
      %2816 = vmatprep.subr.mxu0 0.0
      %2817 = vmatpush1.msra.mxu0 0.0
      %2818 = vmatprep.subr.mxu0 0.0
      %2819 = vmatpush1.msra.mxu0 0.0
      %2820 = vmatprep.subr.mxu0 0.0
      %2821 = vmatpush1.msra.mxu0 0.0
      %2822 = vmatprep.subr.mxu0 0.0
      %2823 = vmatpush1.msra.mxu0 0.0
      %2824 = vmatprep.subr.mxu0 0.0
      %2825 = vmatpush1.msra.mxu0 0.0
      %2826 = vmatprep.subr.mxu0 0.0
      %2827 = vmatpush1.msra.mxu0 0.0
      %2828 = vmatprep.mubr.f32.mxu0 0.0
      %2829 = vmatmul.mubr.f32.gmra.mrb[0].mxu0 %v2762
      %v2830 = vpop.f32.mrb[0].mxu0
      %v2831 = vadd.f32 0.0, %v2830
      %v2832 = vpop.f32.mrb[0].mxu0
      %2833 = vdwg.mxu0
      %v2834 = vld [vmem:[%s18] sm:$0xff]
      %v2835 = vld [vmem:[%s18 + $0x8] sm:$0xff]
      %v2836 = vld [vmem:[%s18 + $0x10] sm:$0xff]
      %v2837 = vld [vmem:[%s18 + $0x18] sm:$0xff]
      %v2838 = vld [vmem:[%s18 + $0x20] sm:$0xff]
      %v2839 = vld [vmem:[%s18 + $0x28] sm:$0xff]
      %v2840 = vld [vmem:[%s18 + $0x30] sm:$0xff]
      %v2841 = vld [vmem:[%s18 + $0x38] sm:$0xff]
      %v2842 = vld [vmem:[%s19] sm:$0x1]
      %v2844 = vsel %vm714, %v2831, 0
      %2846 = vmatprep.subr.mxu0 0.0
      %2847 = vmatpush1.msra.mxu0 %v2834
      %2848 = vmatprep.subr.mxu0 0.0
      %2849 = vmatpush1.msra.mxu0 %v2835
      %2850 = vmatprep.subr.mxu0 0.0
      %2851 = vmatpush1.msra.mxu0 %v2836
      %2852 = vmatprep.subr.mxu0 0.0
      %2853 = vmatpush1.msra.mxu0 %v2837
      %2854 = vmatprep.subr.mxu0 0.0
      %2855 = vmatpush1.msra.mxu0 %v2838
      %2856 = vmatprep.subr.mxu0 0.0
      %2857 = vmatpush1.msra.mxu0 %v2839
      %2858 = vmatprep.subr.mxu0 0.0
      %2859 = vmatpush1.msra.mxu0 %v2840
      %2860 = vmatprep.subr.mxu0 0.0
      %2861 = vmatpush1.msra.mxu0 %v2841
      %2862 = vmatprep.subr.mxu0 0.0
      %2863 = vmatpush1.msra.mxu0 0.0
      %2864 = vmatprep.subr.mxu0 0.0
      %2865 = vmatpush1.msra.mxu0 0.0
      %2866 = vmatprep.subr.mxu0 0.0
      %2867 = vmatpush1.msra.mxu0 0.0
      %2868 = vmatprep.subr.mxu0 0.0
      %2869 = vmatpush1.msra.mxu0 0.0
      %2870 = vmatprep.subr.mxu0 0.0
      %2871 = vmatpush1.msra.mxu0 0.0
      %2872 = vmatprep.subr.mxu0 0.0
      %2873 = vmatpush1.msra.mxu0 0.0
      %2874 = vmatprep.subr.mxu0 0.0
      %2875 = vmatpush1.msra.mxu0 0.0
      %2876 = vmatprep.subr.mxu0 0.0
      %2877 = vmatpush1.msra.mxu0 0.0
      %2878 = vmatprep.subr.mxu0 0.0
      %2879 = vmatpush1.msra.mxu0 0.0
      %2880 = vmatprep.subr.mxu0 0.0
      %2881 = vmatpush1.msra.mxu0 0.0
      %2882 = vmatprep.subr.mxu0 0.0
      %2883 = vmatpush1.msra.mxu0 0.0
      %2884 = vmatprep.subr.mxu0 0.0
      %2885 = vmatpush1.msra.mxu0 0.0
      %2886 = vmatprep.subr.mxu0 0.0
      %2887 = vmatpush1.msra.mxu0 0.0
      %2888 = vmatprep.subr.mxu0 0.0
      %2889 = vmatpush1.msra.mxu0 0.0
      %2890 = vmatprep.subr.mxu0 0.0
      %2891 = vmatpush1.msra.mxu0 0.0
      %2892 = vmatprep.subr.mxu0 0.0
      %2893 = vmatpush1.msra.mxu0 0.0
      %2894 = vmatprep.subr.mxu0 0.0
      %2895 = vmatpush1.msra.mxu0 0.0
      %2896 = vmatprep.subr.mxu0 0.0
      %2897 = vmatpush1.msra.mxu0 0.0
      %2898 = vmatprep.subr.mxu0 0.0
      %2899 = vmatpush1.msra.mxu0 0.0
      %2900 = vmatprep.subr.mxu0 0.0
      %2901 = vmatpush1.msra.mxu0 0.0
      %2902 = vmatprep.subr.mxu0 0.0
      %2903 = vmatpush1.msra.mxu0 0.0
      %2904 = vmatprep.subr.mxu0 0.0
      %2905 = vmatpush1.msra.mxu0 0.0
      %2906 = vmatprep.subr.mxu0 0.0
      %2907 = vmatpush1.msra.mxu0 0.0
      %2908 = vmatprep.subr.mxu0 0.0
      %2909 = vmatpush1.msra.mxu0 0.0
      %2910 = vmatprep.mubr.f32.mxu0 0.0
      %2911 = vmatmul.mubr.f32.gmra.mrb[0].mxu0 %v2844
      %v2912 = vpop.f32.mrb[0].mxu0
      %v2913 = vadd.f32 %v2842, %v2912
      %v2914 = vpop.f32.mrb[0].mxu0
      %2915 = vdwg.mxu0
      %v2916 = vld [vmem:[%s648] sm:$0x1]
      %vm2917 = vcmask 1040384
      %v2918 = vsel %vm2917, %v2913, -inf
      %2919 = vmax.xlane.f32.xlu0 %v2918
      %v2920 = vpop.xlane.xlu0 %2919
      %v2921 = vsub.f32 %v2913, %v2920
      %v2922 = vmul.f32 %v2921, 1.442695
      %v2923 = vpow.pop %v2922
      %v2924 = vsel %vm2917, %v2923, 0.0
      %2925 = vadd.xlane.f32.xlu0 %v2924
      %v2926 = vpop.xlane.xlu0 %2925
      %v2927 = vlog2.pop %v2926
      %v2928 = vmul.f32 %v2927, 0.6931472
      %v2929 = vadd.f32 %v2928, %v2920
      %v2930 = vmul.f32 %v2913, %v2916
      %v2931 = vsel %vm2917, %v2930, 0.0
      %2932 = vadd.xlane.f32.xlu0 %v2931
      %v2933 = vpop.xlane.xlu0 %2932
      %v2934 = vsub.f32 %v2929, %v2933
      %v2935 = vsub.f32 0.0, %v2934
      %v2936 = vmul.f32 %v2935, 1.442695
      %v2937 = vpow.pop %v2936
      %v2938 = vsub.f32 1.0, %v2937
      %v2939 = vmax.f32 %v2938, 0.0
      %v2940 = vmul.f32 %v2939, %v2939
      %v2941 = vmul.f32 %v2940, %v2934
      %v2942 = vlaneseq
      %v2943 = vshrl.u32 %v2942, 7
      %v2944 = vsub.s32 0, %v2943
      %v2945 = vrot.slane %v2941, %v2944
      %2946 = vst [vmem:[%s652] sm:$0xff] %v2945
      %2947 = vst [vmem:[%s652] sm:$0x1] %v2913
      %p2948 = scmp.lt.s32.totalorder %s31, 1
      %s2949 = scalar_select %p2948, %s31, 1
      %s2950 = smul.addr %s2949, 8
      %s2951 = scalar_lea.vmem %s20, %s2950
      // Predicated region
      $region101: #{forward.1} parent=99 // pred_check
        %p2952 = pneg %p484
      $region102: #{forward.1} parent=99 // pred_check_branch
        %2954 = sbr.rel (%p2952) target = $region104
      $region103: #{forward.1} parent=99 // pred_region
        _
      $region104: #{forward.1} parent=99 // pred_fallthru
        _
    $region100: #{forward.1} parent=5 // pred_fallthru
      _
    %p2955 = scmp.le.s32.totalorder 2, %s26
    // Predicated region
    $region105: #{forward.1} parent=5 // pred_check
      %p2956 = pneg %p2955
    $region106: #{forward.1} parent=5 // pred_check_branch
      %2958 = sbr.rel (%p2956) target = $region108
    $region107: #{forward.1} parent=5 // pred_region
      %s2959 = ssub.s32 %s26, 2
      // Predicated region
      $region109: #{forward.1} parent=107 // pred_check
        %p2960 = pneg %p490
      $region110: #{forward.1} parent=107 // pred_check_branch
        %2962 = sbr.rel (%p2960) target = $region112
      $region111: #{forward.1} parent=107 // pred_region
        %p2963 = scmp.lt.s32.totalorder %s32, 1
        %s2964 = scalar_select %p2963, %s32, 1
        %s2965 = smul.addr %s2964, 8
        %s2966 = scalar_lea.vmem %s20, %s2965
      $region112: #{forward.1} parent=107 // pred_fallthru
        _
    $region108: #{forward.1} parent=5 // pred_fallthru
      _
  $region6: #{forward.1} parent=0 // loop_footer
    %s30 = sadd.s32 1, %s26
  $region7: #{forward.1} parent=0 // loop_footer_branch
    %25 = sbr.rel target = $region3
  $region8: #{forward.1} parent=0 // loop_exit
    _

</llo_original>
